<compile_context>
chip_gen: v7x
topology: tpu7x:2x2x1
jax: 0.10.0
libtpu: 0.0.40
codegen_flags: <defaults>
</compile_context>

<pallas_src>
import functools
import math

import jax
import jax.numpy as jnp
from jax import lax
from jax.experimental import pallas as pl
from jax.experimental.pallas import tpu as pltpu

MAX_LEN = 2000
FLANKING = 200
LN_EPS = 1e-5
_NEG_BIG = -1e30          # finite masked-score value (avoids -inf - -inf NaN)
_MIN_PALLAS_SEQ = 128     # below this, XLA beats kernel-launch + grid overhead


# ----------------------------- tiling helpers --------------------------------
def _round_up(x, m):
    return ((x + m - 1) // m) * m


def _choose_tiles(s):
    """Return (s_pad, tq, tk): padded seq length and q / kv tile sizes.

    s_pad is a multiple of 128 (small S) or 256 (large S) so the score tile is
    lane-dense; tq, tk always divide s_pad and tk never exceeds 512, so the
    in-kernel exp/score temporaries stay a few MiB regardless of S.
    """
    if s <= 512:
        s_pad = _round_up(s, 128)
        tk = s_pad                                   # single KV block (<=512)
        tq = 256 if s_pad % 256 == 0 else 128
    else:
        s_pad = _round_up(s, 256)
        tq = 256
        tk = 512 if s_pad % 512 == 0 else 256
    return s_pad, tq, tk


def _vmem_limit_bytes():
    """Generation-aware VMEM limit: ~48 MiB on v7x (64 MiB), ~96 MiB on v5e/v6e."""
    cap = None
    try:
        cap = getattr(pltpu.get_tpu_info(), "vmem_capacity_bytes", None)
    except Exception:
        cap = None
    if not cap:
        cap = 64 << 20                               # conservative (v7x-sized)
    return int(min(max(cap * 3 // 4, 32 << 20), 96 << 20))


# ----------------------------- Pallas kernel ---------------------------------
def _make_flash_encoder_kernel(scale, eps, s_real, tq, tk):
    """Flash-style attention + residual + LayerNorm + masked pooled sum."""

    def kernel(xq_ref, xkv_ref, g_ref, b_ref, out_ref,
               qbf_sc, m_sc, l_sc, acc_sc):
        qi = pl.program_id(1)
        ki = pl.program_id(2)

        @pl.when((qi == 0) & (ki == 0))
        def _init_out():
            out_ref[...] = jnp.zeros_like(out_ref)

        @pl.when(ki == 0)
        def _init_block():
            m_sc[...] = jnp.full_like(m_sc, -jnp.inf)
            l_sc[...] = jnp.zeros_like(l_sc)
            acc_sc[...] = jnp.zeros_like(acc_sc)
            # Pre-scaled bf16 copy of the q block, computed once and reused
            # for all nK kv steps (scale folded into q: O(TQ*D), not O(TQ*TK)).
            qbf_sc[...] = (xq_ref[...] * scale).astype(jnp.bfloat16)

        # bf16 MXU operands, f32 accumulation.
        xk_bf = xkv_ref[...].astype(jnp.bfloat16)                 # [1, TK, D]
        s = jnp.einsum("bqd,bkd->bqk", qbf_sc[...], xk_bf,
                       preferred_element_type=jnp.float32)        # [1, TQ, TK]

        # Mask padded key columns with a large finite negative score.
        col = ki * tk + lax.broadcasted_iota(jnp.int32, (1, 1, tk), 2)
        s = jnp.where(col < s_real, s, jnp.float32(_NEG_BIG))

        m_prev = m_sc[...]
        m_new = jnp.maximum(m_prev, jnp.max(s, axis=-1, keepdims=True))
        alpha = jnp.exp(m_prev - m_new)
        p = jnp.exp(s - m_new)                    # masked cols underflow to 0
        l_sc[...] = alpha * l_sc[...] + jnp.sum(p, axis=-1, keepdims=True)
        acc_sc[...] = alpha * acc_sc[...] + jnp.einsum(
            "bqk,bkd->bqd", p.astype(jnp.bfloat16), xk_bf,
            preferred_element_type=jnp.float32)
        m_sc[...] = m_new

        @pl.when(ki == pl.num_programs(2) - 1)
        def _finalize():
            # Deferred softmax normalization (EUP reciprocal) on [1,TQ,D].
            a = acc_sc[...] * pl.reciprocal(l_sc[...], approx=True)
            h = xq_ref[...] + a                   # residual (dropout1 = id)
            # LayerNorm over D (norm1 of the PyTorch encoder layer).
            mu = jnp.mean(h, axis=-1, keepdims=True)
            var = jnp.mean(jnp.square(h - mu), axis=-1, keepdims=True)
            normed = (h - mu) * lax.rsqrt(var + eps)
            enc = normed * g_ref[...][None] + b_ref[...][None]
            # Exclude padded query rows from the pooled (sequence) sum.
            row = qi * tq + lax.broadcasted_iota(jnp.int32, (1, tq, 1), 1)
            enc = jnp.where(row < s_real, enc, 0.0)
            out_ref[...] += jnp.sum(enc, axis=1, keepdims=True)   # [1, 1, D]

    return kernel


def encoder_pooled_pallas(x, ln_gamma, ln_beta, *, heads):
    """x: [B,S,D] f32 -> mean over seq of LayerNorm(x + attn(x)): [B,D]."""
    B, S, D = x.shape
    scale = 1.0 / math.sqrt(D // heads)

    S_pad, TQ, TK = _choose_tiles(S)
    nQ, nK = S_pad // TQ, S_pad // TK

    x = x.astype(jnp.float32)
    x_pad = x if S_pad == S else jnp.pad(x, ((0, 0), (0, S_pad - S), (0, 0)))
    g2 = ln_gamma.reshape(1, D).astype(jnp.float32)
    b2 = ln_beta.reshape(1, D).astype(jnp.float32)

    cost = pl.CostEstimate(
        flops=4 * B * S_pad * S_pad * D,          # q@k^T and p@v
        transcendentals=B * S_pad * S_pad,        # exp
        bytes_accessed=4 * (B * S_pad * D * (1 + nQ) + B * D + 2 * D),
    )

    pooled_sum = pl.pallas_call(
        _make_flash_encoder_kernel(scale, LN_EPS, S, TQ, TK),
        out_shape=jax.ShapeDtypeStruct((B, 1, D), jnp.float32),
        grid_spec=pltpu.PrefetchScalarGridSpec(
            num_scalar_prefetch=0,
            grid=(B, nQ, nK),                     # kv (reduction) axis last
            in_specs=[
                pl.BlockSpec((1, TQ, D), lambda b, qi, ki: (b, qi, 0)),  # q
                pl.BlockSpec((1, TK, D), lambda b, qi, ki: (b, ki, 0)),  # k/v
                pl.BlockSpec((1, D), lambda b, qi, ki: (0, 0)),          # gamma
                pl.BlockSpec((1, D), lambda b, qi, ki: (0, 0)),          # beta
            ],
            out_specs=pl.BlockSpec((1, 1, D), lambda b, qi, ki: (b, 0, 0)),
            scratch_shapes=[
                pltpu.VMEM((1, TQ, D), jnp.bfloat16),  # pre-scaled bf16 q
                pltpu.VMEM((1, TQ, 1), jnp.float32),   # running max m
                pltpu.VMEM((1, TQ, 1), jnp.float32),   # running denom l
                pltpu.VMEM((1, TQ, D), jnp.float32),   # unnormalized acc
            ],
        ),
        compiler_params=pltpu.CompilerParams(
            dimension_semantics=("parallel", "arbitrary", "arbitrary"),
            vmem_limit_bytes=_vmem_limit_bytes(),
        ),
        cost_estimate=cost,
    )(x_pad, x_pad, g2, b2)

    # Divide by the REAL sequence length (padded rows contributed 0 above).
    return pooled_sum[:, 0, :] / jnp.float32(S)


def _encoder_pooled_xla(x, ln_gamma, ln_beta, *, heads):
    """Pure-XLA encoder+pool (reference math; also the tiny-S fallback)."""
    D = x.shape[-1]
    scale = 1.0 / math.sqrt(D // heads)
    w = jnp.einsum("bqd,bkd->bqk", x, x,
                   precision=lax.Precision.HIGHEST) * scale
    p = jax.nn.softmax(w, axis=-1)
    a = jnp.einsum("bqk,bkd->bqd", p, x, precision=lax.Precision.HIGHEST)
    h = x + a
    mu = jnp.mean(h, axis=-1, keepdims=True)
    var = jnp.mean(jnp.square(h - mu), axis=-1, keepdims=True)
    enc = (h - mu) * lax.rsqrt(var + LN_EPS) * ln_gamma + ln_beta
    return enc.mean(axis=1)


# ------------------------------ Parameters ------------------------------------
def init_params(key, d_model):
    D = 2 * d_model
    k_emb, k_wc, k_bc = jax.random.split(key, 3)
    embedding = jax.random.normal(k_emb, (512, d_model), dtype=jnp.float32)

    # classifier: nn.Linear(D, 2) -> weight [2, D], bias [2]
    bound = 1.0 / math.sqrt(D)
    wc = jax.random.uniform(k_wc, (2, D), minval=-bound, maxval=bound,
                            dtype=jnp.float32)
    bc = jax.random.uniform(k_bc, (2,), minval=-bound, maxval=bound,
                            dtype=jnp.float32)

    # norm1 = nn.LayerNorm(D): weight=1, bias=0 at init.
    ln_gamma = jnp.ones((D,), dtype=jnp.float32)
    ln_beta = jnp.zeros((D,), dtype=jnp.float32)

    # Positional encoding, D wide, (max_len + 2*flanking + 100)*2 rows.
    pe_len = (MAX_LEN + 2 * FLANKING + 100) * 2
    pos = jnp.arange(pe_len, dtype=jnp.float32)[:, None]
    div = jnp.exp(jnp.arange(0, D, 2, dtype=jnp.float32)
                  * (-math.log(10000.0) / D))
    pe = jnp.zeros((pe_len, D), dtype=jnp.float32)
    pe = pe.at[:, 0::2].set(jnp.sin(pos * div))
    pe = pe.at[:, 1::2].set(jnp.cos(pos * div))

    # TODO(synk): linear0, the linear1/linear2 + norm2 branch (result discarded
    # in PyTorch) and the dropouts do not affect the eval forward output, so
    # their parameters are intentionally not created.
    return {"embedding": embedding, "wc": wc, "bc": bc,
            "ln_gamma": ln_gamma, "ln_beta": ln_beta, "pe": pe}


# ------------------------------ Model (glue) -----------------------------------
def model_forward(src_idx, params, *, heads):
    """src_idx: int32 [B, S, 2] with values in [0, 512)."""
    B, S, _ = src_idx.shape
    emb = params["embedding"][src_idx]            # [B, S, 2, d_model] (gather)
    x = emb.reshape(B, S, -1)                     # [B, S, D]
    x = x + params["pe"][:S][None, :, :]          # positional encoding
    x = x.astype(jnp.float32)
    if S >= _MIN_PALLAS_SEQ:
        pooled = encoder_pooled_pallas(
            x, params["ln_gamma"], params["ln_beta"], heads=heads)   # [B, D]
    else:
        # Tiny sequences: kernel launch + grid overhead would dominate.
        pooled = _encoder_pooled_xla(
            x, params["ln_gamma"], params["ln_beta"], heads=heads)
    # Lane-narrow (D -> 2) classifier kept in XLA (avoids masked 2-wide stores).
    return pooled @ params["wc"].T + params["bc"]


def model_forward_ref(src_idx, params, *, heads):
    """Pure-JAX f32 reference of the same forward pass (for validation)."""
    B, S, _ = src_idx.shape
    emb = params["embedding"][src_idx]
    x = (emb.reshape(B, S, -1) + params["pe"][:S][None, :, :]).astype(jnp.float32)
    pooled = _encoder_pooled_xla(x, params["ln_gamma"], params["ln_beta"],
                                 heads=heads)
    return pooled @ params["wc"].T + params["bc"]


# --------------------------------- Main -----------------------------------------
if __name__ == "__main__":
    d_model = 16          # -> D = 32
    nhead = 2
    B, S = 2, 200         # S=200 pads to 256: exercises key/row masking

    key = jax.random.PRNGKey(0)
    k_params, k_input = jax.random.split(key)
    params = init_params(k_params, d_model)
    src = jax.random.randint(k_input, (B, S, 2), 0, 512, dtype=jnp.int32)

    fwd = jax.jit(functools.partial(model_forward, heads=nhead))
    out = jax.block_until_ready(fwd(src, params))

    ref = model_forward_ref(src, params, heads=nhead)
    assert out.shape == (B, 2), out.shape
    assert bool(jnp.all(jnp.isfinite(out)))
    # bf16 MXU operands (f32 accumulation) + approx EUP reciprocal vs a pure
    # f32 (HIGHEST-precision) reference: a few-percent tolerance is expected.
    assert jnp.allclose(out, ref, atol=5e-2, rtol=5e-2), (out, ref)

    # Tiny-sequence path (S < 128) goes through the XLA fallback.
    src_small = jax.random.randint(k_input, (B, 8, 2), 0, 512, dtype=jnp.int32)
    out_small = jax.block_until_ready(fwd(src_small, params))
    ref_small = model_forward_ref(src_small, params, heads=nhead)
    assert jnp.allclose(out_small, ref_small, atol=1e-3, rtol=1e-3)

    print("KERNEL_OK")
</pallas_src>

<mosaic_0001>
module attributes {stable_mosaic.version = 11 : i64} {
  func.func @kernel(%arg0: i32, %arg1: i32, %arg2: i32, %arg3: memref<1x256x32xf32, #tpu.memory_space<vmem>>, %arg4: memref<1x256x32xf32, #tpu.memory_space<vmem>>, %arg5: memref<1x32xf32, #tpu.memory_space<vmem>>, %arg6: memref<1x32xf32, #tpu.memory_space<vmem>>, %arg7: memref<1x1x32xf32, #tpu.memory_space<vmem>>, %arg8: memref<1x256x32xbf16, #tpu.memory_space<vmem>>, %arg9: memref<1x256x1xf32, #tpu.memory_space<vmem>>, %arg10: memref<1x256x1xf32, #tpu.memory_space<vmem>>, %arg11: memref<1x256x32xf32, #tpu.memory_space<vmem>>) attributes {dimension_semantics = [#tpu.dimension_semantics<parallel>, #tpu.dimension_semantics<arbitrary>, #tpu.dimension_semantics<arbitrary>], iteration_bounds = array<i64: 2, 1, 1>, scalar_prefetch = 0 : i64, scratch_operands = 4 : i64, tpu.core_type = #tpu.core_type<tc>, window_params = [{transform_indices = @transform_0, window_bounds = array<i64: 1, 256, 32>}, {transform_indices = @transform_1, window_bounds = array<i64: 1, 256, 32>}, {pipeline_mode = #tpu.pipeline_mode<synchronous>, transform_indices = @transform_2, window_bounds = array<i64: 1, 32>}, {pipeline_mode = #tpu.pipeline_mode<synchronous>, transform_indices = @transform_3, window_bounds = array<i64: 1, 32>}, {transform_indices = @transform_4, window_bounds = array<i64: 1, 1, 32>}]} {
    %c0_i32 = arith.constant 0 : i32
    %0 = arith.cmpi eq, %arg1, %c0_i32 : i32
    %c0_i32_0 = arith.constant 0 : i32
    %1 = arith.cmpi eq, %arg2, %c0_i32_0 : i32
    %2 = arith.andi %0, %1 : i1
    %3 = arith.extui %2 : i1 to i32
    %c0_i32_1 = arith.constant 0 : i32
    %4 = arith.cmpi ne, %3, %c0_i32_1 : i32
    scf.if %4 {
      %cst_33 = arith.constant 0.000000e+00 : f32
      %48 = vector.broadcast %cst_33 : f32 to vector<1x1x32xf32>
      %c0_34 = arith.constant 0 : index
      %c0_35 = arith.constant 0 : index
      %c0_36 = arith.constant 0 : index
      %49 = vector.load %arg7[%c0_34, %c0_35, %c0_36] : memref<1x1x32xf32, #tpu.memory_space<vmem>>, vector<1x1x32xf32>
      tpu.vector_store %arg7[%c0_34, %c0_35, %c0_36], %48 {strides = array<i32>} : memref<1x1x32xf32, #tpu.memory_space<vmem>>, vector<1x1x32xf32>,
    } else {
    }
    %c0_i32_2 = arith.constant 0 : i32
    %5 = arith.cmpi eq, %arg2, %c0_i32_2 : i32
    %6 = arith.extui %5 : i1 to i32
    %c0_i32_3 = arith.constant 0 : i32
    %7 = arith.cmpi ne, %6, %c0_i32_3 : i32
    scf.if %7 {
      %cst_33 = arith.constant 0xFF800000 : f32
      %48 = vector.broadcast %cst_33 : f32 to vector<1x256x1xf32>
      %c0_34 = arith.constant 0 : index
      %c0_35 = arith.constant 0 : index
      %c0_36 = arith.constant 0 : index
      %49 = vector.load %arg9[%c0_34, %c0_35, %c0_36] : memref<1x256x1xf32, #tpu.memory_space<vmem>>, vector<1x256x1xf32>
      tpu.vector_store %arg9[%c0_34, %c0_35, %c0_36], %48 {strides = array<i32>} : memref<1x256x1xf32, #tpu.memory_space<vmem>>, vector<1x256x1xf32>,
      %cst_37 = arith.constant 0.000000e+00 : f32
      %50 = vector.broadcast %cst_37 : f32 to vector<1x256x1xf32>
      %c0_38 = arith.constant 0 : index
      %c0_39 = arith.constant 0 : index
      %c0_40 = arith.constant 0 : index
      %51 = vector.load %arg10[%c0_38, %c0_39, %c0_40] : memref<1x256x1xf32, #tpu.memory_space<vmem>>, vector<1x256x1xf32>
      tpu.vector_store %arg10[%c0_38, %c0_39, %c0_40], %50 {strides = array<i32>} : memref<1x256x1xf32, #tpu.memory_space<vmem>>, vector<1x256x1xf32>,
      %cst_41 = arith.constant 0.000000e+00 : f32
      %52 = vector.broadcast %cst_41 : f32 to vector<1x256x32xf32>
      %c0_42 = arith.constant 0 : index
      %c0_43 = arith.constant 0 : index
      %c0_44 = arith.constant 0 : index
      %53 = vector.load %arg11[%c0_42, %c0_43, %c0_44] : memref<1x256x32xf32, #tpu.memory_space<vmem>>, vector<1x256x32xf32>
      tpu.vector_store %arg11[%c0_42, %c0_43, %c0_44], %52 {strides = array<i32>} : memref<1x256x32xf32, #tpu.memory_space<vmem>>, vector<1x256x32xf32>,
      %c0_45 = arith.constant 0 : index
      %c0_46 = arith.constant 0 : index
      %c0_47 = arith.constant 0 : index
      %54 = vector.load %arg3[%c0_45, %c0_46, %c0_47] : memref<1x256x32xf32, #tpu.memory_space<vmem>>, vector<1x256x32xf32>
      %cst_48 = arith.constant 2.500000e-01 : f32
      %55 = vector.broadcast %cst_48 : f32 to vector<1x256x32xf32>
      %56 = arith.mulf %54, %55 : vector<1x256x32xf32>
      %57 = arith.truncf %56 : vector<1x256x32xf32> to vector<1x256x32xbf16>
      %c0_49 = arith.constant 0 : index
      %c0_50 = arith.constant 0 : index
      %c0_51 = arith.constant 0 : index
      %58 = vector.load %arg8[%c0_49, %c0_50, %c0_51] : memref<1x256x32xbf16, #tpu.memory_space<vmem>>, vector<1x256x32xbf16>
      tpu.vector_store %arg8[%c0_49, %c0_50, %c0_51], %57 {strides = array<i32>} : memref<1x256x32xbf16, #tpu.memory_space<vmem>>, vector<1x256x32xbf16>,
    } else {
    }
    %c0 = arith.constant 0 : index
    %c0_4 = arith.constant 0 : index
    %c0_5 = arith.constant 0 : index
    %8 = vector.load %arg4[%c0, %c0_4, %c0_5] : memref<1x256x32xf32, #tpu.memory_space<vmem>>, vector<1x256x32xf32>
    %9 = arith.truncf %8 : vector<1x256x32xf32> to vector<1x256x32xbf16>
    %c0_6 = arith.constant 0 : index
    %c0_7 = arith.constant 0 : index
    %c0_8 = arith.constant 0 : index
    %10 = vector.load %arg8[%c0_6, %c0_7, %c0_8] : memref<1x256x32xbf16, #tpu.memory_space<vmem>>, vector<1x256x32xbf16>
    "tpu.trace_start"() <{level = 10 : i32, message = "bqd,bkd->bqk"}> : () -> ()
    %cst = arith.constant dense<0.000000e+00> : vector<1x256x256xf32>
    %11 = tpu.matmul %10, %9, %cst {dimension_numbers = #tpu.dot_dimension_numbers<[2], [2], [1], [1], [0, 0, 0, 1, 1, 1], [0], [0]>} : vector<1x256x32xbf16>, vector<1x256x32xbf16>, vector<1x256x256xf32> -> vector<1x256x256xf32>
    "tpu.trace_stop"() : () -> ()
    %c256_i32 = arith.constant 256 : i32
    %12 = arith.muli %arg2, %c256_i32 : i32
    %13 = tpu.iota {dimensions = array<i32: 2>} : vector<1x1x256xi32>
    %14 = vector.broadcast %12 : i32 to vector<1x1x256xi32>
    %15 = arith.addi %14, %13 : vector<1x1x256xi32>
    %c200_i32 = arith.constant 200 : i32
    %16 = vector.broadcast %c200_i32 : i32 to vector<1x1x256xi32>
    %17 = arith.cmpi slt, %15, %16 : vector<1x1x256xi32>
    %cst_9 = arith.constant -1.000000e+30 : f32
    %18 = vector.shape_cast %17 : vector<1x1x256xi1> to vector<1x1x256xi1>
    %19 = vector.broadcast %18 : vector<1x1x256xi1> to vector<1x256x256xi1>
    %20 = vector.broadcast %cst_9 : f32 to vector<1x256x256xf32>
    %21 = arith.select %19, %11, %20 : vector<1x256x256xi1>, vector<1x256x256xf32>
    %c0_10 = arith.constant 0 : index
    %c0_11 = arith.constant 0 : index
    %c0_12 = arith.constant 0 : index
    %22 = vector.load %arg9[%c0_10, %c0_11, %c0_12] : memref<1x256x1xf32, #tpu.memory_space<vmem>>, vector<1x256x1xf32>
    %cst_13 = arith.constant dense<0xFF800000> : vector<1x256xf32>
    %23 = vector.multi_reduction <maximumf>, %21, %cst_13 [2] : vector<1x256x256xf32> to vector<1x256xf32>
    %24 = vector.shape_cast %23 : vector<1x256xf32> to vector<1x256x1xf32>
    %25 = arith.maximumf %22, %24 : vector<1x256x1xf32>
    %26 = arith.subf %22, %25 : vector<1x256x1xf32>
    %27 = math.exp %26 : vector<1x256x1xf32>
    %28 = vector.broadcast %25 : vector<1x256x1xf32> to vector<1x256x256xf32>
    %29 = arith.subf %21, %28 : vector<1x256x256xf32>
    %30 = math.exp %29 : vector<1x256x256xf32>
    %c0_14 = arith.constant 0 : index
    %c0_15 = arith.constant 0 : index
    %c0_16 = arith.constant 0 : index
    %31 = vector.load %arg10[%c0_14, %c0_15, %c0_16] : memref<1x256x1xf32, #tpu.memory_space<vmem>>, vector<1x256x1xf32>
    %32 = arith.mulf %27, %31 : vector<1x256x1xf32>
    %cst_17 = arith.constant dense<0.000000e+00> : vector<1x256xf32>
    %33 = vector.multi_reduction <add>, %30, %cst_17 [2] : vector<1x256x256xf32> to vector<1x256xf32>
    %34 = vector.shape_cast %33 : vector<1x256xf32> to vector<1x256x1xf32>
    %35 = arith.addf %32, %34 : vector<1x256x1xf32>
    %c0_18 = arith.constant 0 : index
    %c0_19 = arith.constant 0 : index
    %c0_20 = arith.constant 0 : index
    %36 = vector.load %arg10[%c0_18, %c0_19, %c0_20] : memref<1x256x1xf32, #tpu.memory_space<vmem>>, vector<1x256x1xf32>
    tpu.vector_store %arg10[%c0_18, %c0_19, %c0_20], %35 {strides = array<i32>} : memref<1x256x1xf32, #tpu.memory_space<vmem>>, vector<1x256x1xf32>,
    %c0_21 = arith.constant 0 : index
    %c0_22 = arith.constant 0 : index
    %c0_23 = arith.constant 0 : index
    %37 = vector.load %arg11[%c0_21, %c0_22, %c0_23] : memref<1x256x32xf32, #tpu.memory_space<vmem>>, vector<1x256x32xf32>
    %38 = vector.broadcast %27 : vector<1x256x1xf32> to vector<1x256x32xf32>
    %39 = arith.mulf %38, %37 : vector<1x256x32xf32>
    %40 = arith.truncf %30 : vector<1x256x256xf32> to vector<1x256x256xbf16>
    "tpu.trace_start"() <{level = 10 : i32, message = "bqk,bkd->bqd"}> : () -> ()
    %cst_24 = arith.constant dense<0.000000e+00> : vector<1x256x32xf32>
    %41 = tpu.matmul %40, %9, %cst_24 {dimension_numbers = #tpu.dot_dimension_numbers<[2], [1], [1], [2], [0, 0, 0, 1, 1, 2], [0], [0]>} : vector<1x256x256xbf16>, vector<1x256x32xbf16>, vector<1x256x32xf32> -> vector<1x256x32xf32>
    "tpu.trace_stop"() : () -> ()
    %42 = arith.addf %39, %41 : vector<1x256x32xf32>
    %c0_25 = arith.constant 0 : index
    %c0_26 = arith.constant 0 : index
    %c0_27 = arith.constant 0 : index
    %43 = vector.load %arg11[%c0_25, %c0_26, %c0_27] : memref<1x256x32xf32, #tpu.memory_space<vmem>>, vector<1x256x32xf32>
    tpu.vector_store %arg11[%c0_25, %c0_26, %c0_27], %42 {strides = array<i32>} : memref<1x256x32xf32, #tpu.memory_space<vmem>>, vector<1x256x32xf32>,
    %c0_28 = arith.constant 0 : index
    %c0_29 = arith.constant 0 : index
    %c0_30 = arith.constant 0 : index
    %44 = vector.load %arg9[%c0_28, %c0_29, %c0_30] : memref<1x256x1xf32, #tpu.memory_space<vmem>>, vector<1x256x1xf32>
    tpu.vector_store %arg9[%c0_28, %c0_29, %c0_30], %25 {strides = array<i32>} : memref<1x256x1xf32, #tpu.memory_space<vmem>>, vector<1x256x1xf32>,
    %c0_i32_31 = arith.constant 0 : i32
    %45 = arith.cmpi eq, %arg2, %c0_i32_31 : i32
    %46 = arith.extui %45 : i1 to i32
    %c0_i32_32 = arith.constant 0 : i32
    %47 = arith.cmpi ne, %46, %c0_i32_32 : i32
    scf.if %47 {
      %c0_33 = arith.constant 0 : index
      %c0_34 = arith.constant 0 : index
      %c0_35 = arith.constant 0 : index
      %48 = vector.load %arg11[%c0_33, %c0_34, %c0_35] : memref<1x256x32xf32, #tpu.memory_space<vmem>>, vector<1x256x32xf32>
      %c0_36 = arith.constant 0 : index
      %c0_37 = arith.constant 0 : index
      %c0_38 = arith.constant 0 : index
      %49 = vector.load %arg10[%c0_36, %c0_37, %c0_38] : memref<1x256x1xf32, #tpu.memory_space<vmem>>, vector<1x256x1xf32>
      %50 = tpu.reciprocal %49 {approx = true} : vector<1x256x1xf32> -> vector<1x256x1xf32>
      %51 = vector.broadcast %50 : vector<1x256x1xf32> to vector<1x256x32xf32>
      %52 = arith.mulf %48, %51 : vector<1x256x32xf32>
      %c0_39 = arith.constant 0 : index
      %c0_40 = arith.constant 0 : index
      %c0_41 = arith.constant 0 : index
      %53 = vector.load %arg3[%c0_39, %c0_40, %c0_41] : memref<1x256x32xf32, #tpu.memory_space<vmem>>, vector<1x256x32xf32>
      %54 = arith.addf %53, %52 : vector<1x256x32xf32>
      %cst_42 = arith.constant dense<0.000000e+00> : vector<1x256xf32>
      %55 = vector.multi_reduction <add>, %54, %cst_42 [2] : vector<1x256x32xf32> to vector<1x256xf32>
      %56 = vector.shape_cast %55 : vector<1x256xf32> to vector<1x256x1xf32>
      %cst_43 = arith.constant 3.200000e+01 : f32
      %57 = vector.broadcast %cst_43 : f32 to vector<1x256x1xf32>
      %58 = arith.divf %56, %57 : vector<1x256x1xf32>
      %59 = vector.broadcast %58 : vector<1x256x1xf32> to vector<1x256x32xf32>
      %60 = arith.subf %54, %59 : vector<1x256x32xf32>
      %61 = arith.mulf %60, %60 : vector<1x256x32xf32>
      %cst_44 = arith.constant dense<0.000000e+00> : vector<1x256xf32>
      %62 = vector.multi_reduction <add>, %61, %cst_44 [2] : vector<1x256x32xf32> to vector<1x256xf32>
      %63 = vector.shape_cast %62 : vector<1x256xf32> to vector<1x256x1xf32>
      %cst_45 = arith.constant 3.200000e+01 : f32
      %64 = vector.broadcast %cst_45 : f32 to vector<1x256x1xf32>
      %65 = arith.divf %63, %64 : vector<1x256x1xf32>
      %66 = vector.broadcast %58 : vector<1x256x1xf32> to vector<1x256x32xf32>
      %67 = arith.subf %54, %66 : vector<1x256x32xf32>
      %cst_46 = arith.constant 9.99999974E-6 : f32
      %68 = vector.broadcast %cst_46 : f32 to vector<1x256x1xf32>
      %69 = arith.addf %65, %68 : vector<1x256x1xf32>
      %70 = math.rsqrt %69 : vector<1x256x1xf32>
      %71 = vector.broadcast %70 : vector<1x256x1xf32> to vector<1x256x32xf32>
      %72 = arith.mulf %67, %71 : vector<1x256x32xf32>
      %c0_47 = arith.constant 0 : index
      %c0_48 = arith.constant 0 : index
      %73 = vector.load %arg5[%c0_47, %c0_48] : memref<1x32xf32, #tpu.memory_space<vmem>>, vector<1x32xf32>
      %74 = vector.shape_cast %73 : vector<1x32xf32> to vector<1x1x32xf32>
      %75 = vector.broadcast %74 : vector<1x1x32xf32> to vector<1x256x32xf32>
      %76 = arith.mulf %72, %75 : vector<1x256x32xf32>
      %c0_49 = arith.constant 0 : index
      %c0_50 = arith.constant 0 : index
      %77 = vector.load %arg6[%c0_49, %c0_50] : memref<1x32xf32, #tpu.memory_space<vmem>>, vector<1x32xf32>
      %78 = vector.shape_cast %77 : vector<1x32xf32> to vector<1x1x32xf32>
      %79 = vector.broadcast %78 : vector<1x1x32xf32> to vector<1x256x32xf32>
      %80 = arith.addf %76, %79 : vector<1x256x32xf32>
      %c256_i32_51 = arith.constant 256 : i32
      %81 = arith.muli %arg1, %c256_i32_51 : i32
      %82 = tpu.iota {dimensions = array<i32: 1>} : vector<1x256x1xi32>
      %83 = vector.broadcast %81 : i32 to vector<1x256x1xi32>
      %84 = arith.addi %83, %82 : vector<1x256x1xi32>
      %c200_i32_52 = arith.constant 200 : i32
      %85 = vector.broadcast %c200_i32_52 : i32 to vector<1x256x1xi32>
      %86 = arith.cmpi slt, %84, %85 : vector<1x256x1xi32>
      %cst_53 = arith.constant 0.000000e+00 : f32
      %87 = vector.shape_cast %86 : vector<1x256x1xi1> to vector<1x256x1xi1>
      %88 = vector.broadcast %87 : vector<1x256x1xi1> to vector<1x256x32xi1>
      %89 = vector.broadcast %cst_53 : f32 to vector<1x256x32xf32>
      %90 = arith.select %88, %80, %89 : vector<1x256x32xi1>, vector<1x256x32xf32>
      %c0_54 = arith.constant 0 : index
      %c0_55 = arith.constant 0 : index
      %c0_56 = arith.constant 0 : index
      %91 = vector.load %arg7[%c0_54, %c0_55, %c0_56] : memref<1x1x32xf32, #tpu.memory_space<vmem>>, vector<1x1x32xf32>
      %cst_57 = arith.constant dense<0.000000e+00> : vector<1x32xf32>
      %92 = vector.multi_reduction <add>, %90, %cst_57 [1] : vector<1x256x32xf32> to vector<1x32xf32>
      %93 = vector.shape_cast %92 : vector<1x32xf32> to vector<1x1x32xf32>
      %94 = arith.addf %91, %93 : vector<1x1x32xf32>
      %c0_58 = arith.constant 0 : index
      %c0_59 = arith.constant 0 : index
      %c0_60 = arith.constant 0 : index
      %95 = vector.load %arg7[%c0_58, %c0_59, %c0_60] : memref<1x1x32xf32, #tpu.memory_space<vmem>>, vector<1x1x32xf32>
      tpu.vector_store %arg7[%c0_58, %c0_59, %c0_60], %94 {strides = array<i32>} : memref<1x1x32xf32, #tpu.memory_space<vmem>>, vector<1x1x32xf32>,
    } else {
    }
    return
  }
  func.func @transform_0(%arg0: i32, %arg1: i32, %arg2: i32) -> (i32, i32, i32) {
    %c0_i32 = arith.constant 0 : i32
    %c0_i32_0 = arith.constant 0 : i32
    return %arg0, %arg1, %c0_i32 : i32, i32, i32
  }
  func.func @transform_1(%arg0: i32, %arg1: i32, %arg2: i32) -> (i32, i32, i32) {
    %c0_i32 = arith.constant 0 : i32
    %c0_i32_0 = arith.constant 0 : i32
    return %arg0, %arg2, %c0_i32 : i32, i32, i32
  }
  func.func @transform_2(%arg0: i32, %arg1: i32, %arg2: i32) -> (i32, i32) {
    %c0_i32 = arith.constant 0 : i32
    %c0_i32_0 = arith.constant 0 : i32
    %c0_i32_1 = arith.constant 0 : i32
    return %c0_i32, %c0_i32_0 : i32, i32
  }
  func.func @transform_3(%arg0: i32, %arg1: i32, %arg2: i32) -> (i32, i32) {
    %c0_i32 = arith.constant 0 : i32
    %c0_i32_0 = arith.constant 0 : i32
    %c0_i32_1 = arith.constant 0 : i32
    return %c0_i32, %c0_i32_0 : i32, i32
  }
  func.func @transform_4(%arg0: i32, %arg1: i32, %arg2: i32) -> (i32, i32, i32) {
    %c0_i32 = arith.constant 0 : i32
    %c0_i32_0 = arith.constant 0 : i32
    %c0_i32_1 = arith.constant 0 : i32
    return %arg0, %c0_i32, %c0_i32_0 : i32, i32, i32
  }
}

</mosaic_0001>

<llo_original>
// kernel: model_forward.1
$region0: #{model_forward.1}
  #allocation0 [shape = 'u32[]', space=smem, size = 0x4, offset = 0x4, fixed_abs, tag = 'smem constant byte address 0x4 - core index']
  #allocation1 [shape = 'u32[144,128]{1,0:T(1,128)}', space=vmem, size = 0x12000, scoped, tag = 'internal scratch']
  #allocation2 [shape = 'bf16[1,256,32]{2,1,0:T(16,128)(2,1)}', space=vmem, size = 0x10000, scoped, tag = 'scratch operand']
  #allocation3 [shape = 'f32[1,256,1]{2,1,0:T(8,128)}', space=vmem, size = 0x20000, scoped, tag = 'scratch operand']
  #allocation4 [shape = 'f32[1,256,1]{2,1,0:T(8,128)}', space=vmem, size = 0x20000, scoped, tag = 'scratch operand']
  #allocation5 [shape = 'f32[1,256,32]{2,1,0:T(8,128)}', space=vmem, size = 0x20000, scoped, tag = 'scratch operand']
  %s0 = inlined_call_operand.vmem [shape: f32[2,256,32], index: 0, kind: input, shape index: {}, may-alias: {0,1}]
  %s1 = inlined_call_operand.vmem [shape: f32[2,256,32], index: 1, kind: input, shape index: {}, may-alias: {0,1}]
  %s2 = inlined_call_operand.vmem [shape: f32[1,32], index: 2, kind: input, shape index: {}]
  %s3 = inlined_call_operand.vmem [shape: f32[1,32], index: 3, kind: input, shape index: {}]
  %s4 = inlined_call_operand.vmem [shape: f32[2,1,32], index: 4, kind: output, shape index: {}]
  %s5 = sld [smem:[#allocation0]]
  $region61: #{model_forward.1} parent=0
    _
  %s7 = ssub.s32 1, %s5
  %s8 = scalar_select 0, %s7, %s5
  loop: start=0, step=1, limit=4
  $region2: #{model_forward.1} parent=0 // loop_pre_header
    _
  $region3: #{model_forward.1} parent=0 // loop_header
    %s10 = sphi 0, %s14
    %p11 = scmp.ge.s32.totalorder %s10, 4
    %s17 = sphi 0, %s36
    %s18 = sphi 0, %s32
    %s19 = sphi 0, %s28
    %s20 = sphi 0, %s17
    %s21 = sphi 0, %s18
    %s22 = sphi 0, %s19
    %s23 = sphi 0, %s20
    %s24 = sphi 0, %s21
    %s25 = sphi 0, %s22
    %s41 = sphi 0, %s43
    %s44 = sphi 0, %s41
    %s45 = sphi 0, %s44
    %s61 = sphi 0, %s45
    %s69 = sphi 0, %s71
    %s72 = sphi 0, %s69
    %s73 = sphi 0, %s72
    %s89 = sphi 0, %s73
    %s93 = sphi 0, %s93
    %s95 = sphi 0, %s93
    %s96 = sphi 0, %s95
    %s110 = sphi 0, %s96
    %s114 = sphi 0, %s114
    %s116 = sphi 0, %s114
    %s117 = sphi 0, %s116
    %s131 = sphi 0, %s117
    %s137 = sphi 0, %s139
    %s140 = sphi 0, %s137
    %s141 = sphi 0, %s140
    %s157 = sphi 0, %s141
  $region4: #{model_forward.1} parent=0 // loop_header_branch
    %13 = sbr.rel (%p11) target = $region8
  $region5: #{model_forward.1} parent=0 // loop_body
    %s15 = ssub.s32 %s10, 1
    %s16 = ssub.s32 %s10, 2
    %s26 = sadd.s32 1, %s19
    %p27 = scmp.ge.s32.totalorder %s26, 1
    %s28 = scalar_select %p27, 0, %s26
    %s29 = sadd.s32 1, %s18
    %s30 = scalar_select %p27, %s29, %s18
    %p31 = scmp.ge.s32.totalorder %s30, 1
    %s32 = scalar_select %p31, 0, %s30
    %s33 = sadd.s32 1, %s17
    %s34 = scalar_select %p31, %s33, %s17
    %p35 = scmp.ge.s32.totalorder %s34, 2
    %s36 = scalar_select %p35, 0, %s34
    %s37 = ssub.s32 %s17, %s36
    %s38 = ssub.s32 %s18, %s32
    %s39 = sor.u32 %s37, %s38
    %p40 = scmp.eq.s32.totalorder %s39, 0
    %s42 = sadd.s32 %s41, 1
    %s43 = scalar_select %p40, %s41, %s42
    %p46 = pneg %p40
    %p47 = scmp.eq.s32.totalorder %s10, 1
    %p48 = por %p46, %p47
    %p49 = scmp.ne.s32.totalorder %s41, %s44
    %p50 = scmp.eq.s32.totalorder %s10, 0
    %p51 = por %p49, %p50
    %p52 = scmp.ne.s32.totalorder %s41, %s44
    %p53 = scmp.eq.s32.totalorder %s15, 1
    %p54 = por %p52, %p53
    %p55 = scmp.ne.s32.totalorder %s44, %s45
    %p56 = scmp.eq.s32.totalorder %s15, 0
    %p57 = por %p55, %p56
    %p58 = scmp.ne.s32.totalorder %s44, %s45
    %p59 = scmp.eq.s32.totalorder %s16, 1
    %p60 = por %p58, %p59
    %p62 = scmp.ne.s32.totalorder %s45, %s61
    %p63 = scmp.eq.s32.totalorder %s16, 0
    %p64 = por %p62, %p63
    %s65 = ssub.s32 %s17, %s36
    %s66 = ssub.s32 %s19, %s28
    %s67 = sor.u32 %s65, %s66
    %p68 = scmp.eq.s32.totalorder %s67, 0
    %s70 = sadd.s32 %s69, 1
    %s71 = scalar_select %p68, %s69, %s70
    %p74 = pneg %p68
    %p75 = scmp.eq.s32.totalorder %s10, 1
    %p76 = por %p74, %p75
    %p77 = scmp.ne.s32.totalorder %s69, %s72
    %p78 = scmp.eq.s32.totalorder %s10, 0
    %p79 = por %p77, %p78
    %p80 = scmp.ne.s32.totalorder %s69, %s72
    %p81 = scmp.eq.s32.totalorder %s15, 1
    %p82 = por %p80, %p81
    %p83 = scmp.ne.s32.totalorder %s72, %s73
    %p84 = scmp.eq.s32.totalorder %s15, 0
    %p85 = por %p83, %p84
    %p86 = scmp.ne.s32.totalorder %s72, %s73
    %p87 = scmp.eq.s32.totalorder %s16, 1
    %p88 = por %p86, %p87
    %p90 = scmp.ne.s32.totalorder %s73, %s89
    %p91 = scmp.eq.s32.totalorder %s16, 0
    %p92 = por %p90, %p91
    %s94 = sadd.s32 %s93, 1
    %p97 = scmp.eq.s32.totalorder %s10, 1
    %p98 = scmp.ne.s32.totalorder %s93, %s95
    %p99 = scmp.eq.s32.totalorder %s10, 0
    %p100 = por %p98, %p99
    %p101 = scmp.ne.s32.totalorder %s93, %s95
    %p102 = scmp.eq.s32.totalorder %s15, 1
    %p103 = por %p101, %p102
    %p104 = scmp.ne.s32.totalorder %s95, %s96
    %p105 = scmp.eq.s32.totalorder %s15, 0
    %p106 = por %p104, %p105
    %p107 = scmp.ne.s32.totalorder %s95, %s96
    %p108 = scmp.eq.s32.totalorder %s16, 1
    %p109 = por %p107, %p108
    %p111 = scmp.ne.s32.totalorder %s96, %s110
    %p112 = scmp.eq.s32.totalorder %s16, 0
    %p113 = por %p111, %p112
    %s115 = sadd.s32 %s114, 1
    %p118 = scmp.eq.s32.totalorder %s10, 1
    %p119 = scmp.ne.s32.totalorder %s114, %s116
    %p120 = scmp.eq.s32.totalorder %s10, 0
    %p121 = por %p119, %p120
    %p122 = scmp.ne.s32.totalorder %s114, %s116
    %p123 = scmp.eq.s32.totalorder %s15, 1
    %p124 = por %p122, %p123
    %p125 = scmp.ne.s32.totalorder %s116, %s117
    %p126 = scmp.eq.s32.totalorder %s15, 0
    %p127 = por %p125, %p126
    %p128 = scmp.ne.s32.totalorder %s116, %s117
    %p129 = scmp.eq.s32.totalorder %s16, 1
    %p130 = por %p128, %p129
    %p132 = scmp.ne.s32.totalorder %s117, %s131
    %p133 = scmp.eq.s32.totalorder %s16, 0
    %p134 = por %p132, %p133
    %s135 = ssub.s32 %s17, %s36
    %p136 = scmp.eq.s32.totalorder %s135, 0
    %s138 = sadd.s32 %s137, 1
    %s139 = scalar_select %p136, %s137, %s138
    %p142 = pneg %p136
    %p143 = scmp.eq.s32.totalorder %s10, 1
    %p144 = por %p142, %p143
    %p145 = scmp.ne.s32.totalorder %s137, %s140
    %p146 = scmp.eq.s32.totalorder %s10, 0
    %p147 = por %p145, %p146
    %p148 = scmp.ne.s32.totalorder %s137, %s140
    %p149 = scmp.eq.s32.totalorder %s15, 1
    %p150 = por %p148, %p149
    %p151 = scmp.ne.s32.totalorder %s140, %s141
    %p152 = scmp.eq.s32.totalorder %s15, 0
    %p153 = por %p151, %p152
    %p154 = scmp.ne.s32.totalorder %s140, %s141
    %p155 = scmp.eq.s32.totalorder %s16, 1
    %p156 = por %p154, %p155
    %p158 = scmp.ne.s32.totalorder %s141, %s157
    %p159 = scmp.eq.s32.totalorder %s16, 0
    %p160 = por %p158, %p159
    %p161 = scmp.le.s32.totalorder 1, %s10
    %p162 = scmp.lt.s32.totalorder %s10, 3
    %p163 = pnand %p161, %p162
    %p164 = pneg %p163
    // Predicated region
    $region9: #{model_forward.1} parent=5 // pred_check
      _
    $region10: #{model_forward.1} parent=5 // pred_check_branch
      %166 = sbr.rel (%p163) target = $region12
    $region11: #{model_forward.1} parent=5 // pred_region
      %s167 = ssub.s32 %s10, 1
      // Predicated region
      $region13: #{model_forward.1} parent=11 // pred_check
        %p168 = pneg %p106
      $region14: #{model_forward.1} parent=11 // pred_check_branch
        %170 = sbr.rel (%p168) target = $region16
      $region15: #{model_forward.1} parent=11 // pred_region
        _
      $region16: #{model_forward.1} parent=11 // pred_fallthru
        _
      // Predicated region
      $region17: #{model_forward.1} parent=11 // pred_check
        %p171 = pneg %p127
      $region18: #{model_forward.1} parent=11 // pred_check_branch
        %173 = sbr.rel (%p171) target = $region20
      $region19: #{model_forward.1} parent=11 // pred_region
        _
      $region20: #{model_forward.1} parent=11 // pred_fallthru
        _
    $region12: #{model_forward.1} parent=5 // pred_fallthru
      _
    %p174 = scmp.lt.s32.totalorder %s10, 2
    // Predicated region
    $region21: #{model_forward.1} parent=5 // pred_check
      %p175 = pneg %p174
    $region22: #{model_forward.1} parent=5 // pred_check_branch
      %177 = sbr.rel (%p175) target = $region24
    $region23: #{model_forward.1} parent=5 // pred_region
      // Predicated region
      $region25: #{model_forward.1} parent=23 // pred_check
        %p178 = pneg %p51
      $region26: #{model_forward.1} parent=23 // pred_check_branch
        %180 = sbr.rel (%p178) target = $region28
      $region27: #{model_forward.1} parent=23 // pred_region
        %s181 = smul.u32 32, %s18
        %p182 = scmp.lt.s32.totalorder %s17, 1
        %s183 = scalar_select %p182, %s17, 1
        %p184 = scmp.lt.s32.totalorder %s181, 31
        %s185 = scalar_select %p184, %s181, 31
        %s186 = smul.addr %s183, 32
        %s187 = sadd.s32 %s185, %s186
        %s188 = smul.addr %s187, 8
        %s189 = scalar_lea.vmem %s0, %s188
        %s190 = smul.u32 32, %s18
      $region28: #{model_forward.1} parent=23 // pred_fallthru
        _
      // Predicated region
      $region29: #{model_forward.1} parent=23 // pred_check
        %p191 = pneg %p79
      $region30: #{model_forward.1} parent=23 // pred_check_branch
        %193 = sbr.rel (%p191) target = $region32
      $region31: #{model_forward.1} parent=23 // pred_region
        %s194 = smul.u32 32, %s19
        %p195 = scmp.lt.s32.totalorder %s17, 1
        %s196 = scalar_select %p195, %s17, 1
        %p197 = scmp.lt.s32.totalorder %s194, 31
        %s198 = scalar_select %p197, %s194, 31
        %s199 = smul.addr %s196, 32
        %s200 = sadd.s32 %s198, %s199
        %s201 = smul.addr %s200, 8
        %s202 = scalar_lea.vmem %s1, %s201
        %s203 = smul.u32 32, %s19
      $region32: #{model_forward.1} parent=23 // pred_fallthru
        _
    $region24: #{model_forward.1} parent=5 // pred_fallthru
      _
    %p204 = scmp.le.s32.totalorder 1, %s10
    %p205 = scmp.lt.s32.totalorder %s10, 3
    %p206 = pnand %p204, %p205
    %p207 = pneg %p206
    // Predicated region
    $region33: #{model_forward.1} parent=5 // pred_check
      _
    $region34: #{model_forward.1} parent=5 // pred_check_branch
      %209 = sbr.rel (%p206) target = $region36
    $region35: #{model_forward.1} parent=5 // pred_region
      %s210 = ssub.s32 %s10, 1
      %s211 = smul.u32 32, %s21
      %p212 = scmp.lt.s32.totalorder %s20, 1
      %s213 = scalar_select %p212, %s20, 1
      %p214 = scmp.lt.s32.totalorder %s211, 31
      %s215 = scalar_select %p214, %s211, 31
      %s216 = smul.addr %s213, 32
      %s217 = sadd.s32 %s215, %s216
      %s218 = smul.addr %s217, 8
      %s219 = scalar_lea.vmem %s0, %s218
      %p220 = pneg %p57
      %p221 = pneg %p54
      %s222 = smul.u32 32, %s22
      %p223 = scmp.lt.s32.totalorder %s20, 1
      %s224 = scalar_select %p223, %s20, 1
      %p225 = scmp.lt.s32.totalorder %s222, 31
      %s226 = scalar_select %p225, %s222, 31
      %s227 = smul.addr %s224, 32
      %s228 = sadd.s32 %s226, %s227
      %s229 = smul.addr %s228, 8
      %s230 = scalar_lea.vmem %s1, %s229
      %p231 = pneg %p85
      %p232 = pneg %p82
      %p233 = pneg %p106
      %p234 = pneg %p103
      %p235 = pneg %p127
      %p236 = pneg %p124
      %p237 = pneg %p153
      %p238 = pneg %p150
      %p239 = scmp.lt.s32.totalorder %s20, 1
      %s240 = scalar_select %p239, %s20, 1
      %s241 = scalar_lea.vmem %s4, %s240
      %s242 = smul.u32 32, %s21
      %p243 = scmp.lt.s32.totalorder %s20, 1
      %s244 = scalar_select %p243, %s20, 1
      %p245 = scmp.lt.s32.totalorder %s242, 31
      %s246 = scalar_select %p245, %s242, 31
      %s247 = smul.addr %s244, 32
      %s248 = sadd.s32 %s246, %s247
      %s249 = smul.addr %s248, 8
      %s250 = scalar_lea.vmem %s0, %s249
      %s251 = smul.u32 32, %s21
      %s252 = smul.u32 32, %s22
      %p253 = scmp.lt.s32.totalorder %s20, 1
      %s254 = scalar_select %p253, %s20, 1
      %p255 = scmp.lt.s32.totalorder %s252, 31
      %s256 = scalar_select %p255, %s252, 31
      %s257 = smul.addr %s254, 32
      %s258 = sadd.s32 %s256, %s257
      %s259 = smul.addr %s258, 8
      %s260 = scalar_lea.vmem %s1, %s259
      %s261 = smul.u32 32, %s22
      %p262 = scmp.lt.s32.totalorder %s20, 1
      %s263 = scalar_select %p262, %s20, 1
      %s264 = scalar_lea.vmem %s4, %s263
      %p266 = scmp.eq.s32.totalorder %s21, 0
      %p267 = scmp.eq.s32.totalorder %s22, 0
      %p268 = pnand %p266, %p267
      %p269 = pneg %p268
      // Predicated region
      $region37: #{model_forward.1} parent=35 // pred_check
        _
      $region38: #{model_forward.1} parent=35 // pred_check_branch
        %271 = sbr.rel (%p268) target = $region40
      $region39: #{model_forward.1} parent=35 // pred_region
        %vm272 = vcmask 253952
        %273 = vst.msk [vmem:[%s264] sm:$0x1] %vm272, 0.0
      $region40: #{model_forward.1} parent=35 // pred_fallthru
        _
      // Predicated region
      $region41: #{model_forward.1} parent=35 // pred_check
        %p274 = pneg %p267
      $region42: #{model_forward.1} parent=35 // pred_check_branch
        %276 = sbr.rel (%p274) target = $region44
      $region43: #{model_forward.1} parent=35 // pred_region
        %vm277 = vcmask 7168
        %278 = vst.msk [vmem:[#allocation3] sm:$0xff] %vm277, -inf
        %279 = vst.msk [vmem:[#allocation3 + $0x8] sm:$0xff] %vm277, -inf
        %280 = vst.msk [vmem:[#allocation3 + $0x10] sm:$0xff] %vm277, -inf
        %281 = vst.msk [vmem:[#allocation3 + $0x18] sm:$0xff] %vm277, -inf
        %282 = vst.msk [vmem:[#allocation3 + $0x20] sm:$0xff] %vm277, -inf
        %283 = vst.msk [vmem:[#allocation3 + $0x28] sm:$0xff] %vm277, -inf
        %284 = vst.msk [vmem:[#allocation3 + $0x30] sm:$0xff] %vm277, -inf
        %285 = vst.msk [vmem:[#allocation3 + $0x38] sm:$0xff] %vm277, -inf
        %286 = vst.msk [vmem:[#allocation3 + $0x40] sm:$0xff] %vm277, -inf
        %287 = vst.msk [vmem:[#allocation3 + $0x48] sm:$0xff] %vm277, -inf
        %288 = vst.msk [vmem:[#allocation3 + $0x50] sm:$0xff] %vm277, -inf
        %289 = vst.msk [vmem:[#allocation3 + $0x58] sm:$0xff] %vm277, -inf
        %290 = vst.msk [vmem:[#allocation3 + $0x60] sm:$0xff] %vm277, -inf
        %291 = vst.msk [vmem:[#allocation3 + $0x68] sm:$0xff] %vm277, -inf
        %292 = vst.msk [vmem:[#allocation3 + $0x70] sm:$0xff] %vm277, -inf
        %293 = vst.msk [vmem:[#allocation3 + $0x78] sm:$0xff] %vm277, -inf
        %294 = vst.msk [vmem:[#allocation3 + $0x80] sm:$0xff] %vm277, -inf
        %295 = vst.msk [vmem:[#allocation3 + $0x88] sm:$0xff] %vm277, -inf
        %296 = vst.msk [vmem:[#allocation3 + $0x90] sm:$0xff] %vm277, -inf
        %297 = vst.msk [vmem:[#allocation3 + $0x98] sm:$0xff] %vm277, -inf
        %298 = vst.msk [vmem:[#allocation3 + $0xa0] sm:$0xff] %vm277, -inf
        %299 = vst.msk [vmem:[#allocation3 + $0xa8] sm:$0xff] %vm277, -inf
        %300 = vst.msk [vmem:[#allocation3 + $0xb0] sm:$0xff] %vm277, -inf
        %301 = vst.msk [vmem:[#allocation3 + $0xb8] sm:$0xff] %vm277, -inf
        %302 = vst.msk [vmem:[#allocation3 + $0xc0] sm:$0xff] %vm277, -inf
        %303 = vst.msk [vmem:[#allocation3 + $0xc8] sm:$0xff] %vm277, -inf
        %304 = vst.msk [vmem:[#allocation3 + $0xd0] sm:$0xff] %vm277, -inf
        %305 = vst.msk [vmem:[#allocation3 + $0xd8] sm:$0xff] %vm277, -inf
        %306 = vst.msk [vmem:[#allocation3 + $0xe0] sm:$0xff] %vm277, -inf
        %307 = vst.msk [vmem:[#allocation3 + $0xe8] sm:$0xff] %vm277, -inf
        %308 = vst.msk [vmem:[#allocation3 + $0xf0] sm:$0xff] %vm277, -inf
        %309 = vst.msk [vmem:[#allocation3 + $0xf8] sm:$0xff] %vm277, -inf
        %310 = vst.msk [vmem:[#allocation4] sm:$0xff] %vm277, 0.0
        %311 = vst.msk [vmem:[#allocation4 + $0x8] sm:$0xff] %vm277, 0.0
        %312 = vst.msk [vmem:[#allocation4 + $0x10] sm:$0xff] %vm277, 0.0
        %313 = vst.msk [vmem:[#allocation4 + $0x18] sm:$0xff] %vm277, 0.0
        %314 = vst.msk [vmem:[#allocation4 + $0x20] sm:$0xff] %vm277, 0.0
        %315 = vst.msk [vmem:[#allocation4 + $0x28] sm:$0xff] %vm277, 0.0
        %316 = vst.msk [vmem:[#allocation4 + $0x30] sm:$0xff] %vm277, 0.0
        %317 = vst.msk [vmem:[#allocation4 + $0x38] sm:$0xff] %vm277, 0.0
        %318 = vst.msk [vmem:[#allocation4 + $0x40] sm:$0xff] %vm277, 0.0
        %319 = vst.msk [vmem:[#allocation4 + $0x48] sm:$0xff] %vm277, 0.0
        %320 = vst.msk [vmem:[#allocation4 + $0x50] sm:$0xff] %vm277, 0.0
        %321 = vst.msk [vmem:[#allocation4 + $0x58] sm:$0xff] %vm277, 0.0
        %322 = vst.msk [vmem:[#allocation4 + $0x60] sm:$0xff] %vm277, 0.0
        %323 = vst.msk [vmem:[#allocation4 + $0x68] sm:$0xff] %vm277, 0.0
        %324 = vst.msk [vmem:[#allocation4 + $0x70] sm:$0xff] %vm277, 0.0
        %325 = vst.msk [vmem:[#allocation4 + $0x78] sm:$0xff] %vm277, 0.0
        %326 = vst.msk [vmem:[#allocation4 + $0x80] sm:$0xff] %vm277, 0.0
        %327 = vst.msk [vmem:[#allocation4 + $0x88] sm:$0xff] %vm277, 0.0
        %328 = vst.msk [vmem:[#allocation4 + $0x90] sm:$0xff] %vm277, 0.0
        %329 = vst.msk [vmem:[#allocation4 + $0x98] sm:$0xff] %vm277, 0.0
        %330 = vst.msk [vmem:[#allocation4 + $0xa0] sm:$0xff] %vm277, 0.0
        %331 = vst.msk [vmem:[#allocation4 + $0xa8] sm:$0xff] %vm277, 0.0
        %332 = vst.msk [vmem:[#allocation4 + $0xb0] sm:$0xff] %vm277, 0.0
        %333 = vst.msk [vmem:[#allocation4 + $0xb8] sm:$0xff] %vm277, 0.0
        %334 = vst.msk [vmem:[#allocation4 + $0xc0] sm:$0xff] %vm277, 0.0
        %335 = vst.msk [vmem:[#allocation4 + $0xc8] sm:$0xff] %vm277, 0.0
        %336 = vst.msk [vmem:[#allocation4 + $0xd0] sm:$0xff] %vm277, 0.0
        %337 = vst.msk [vmem:[#allocation4 + $0xd8] sm:$0xff] %vm277, 0.0
        %338 = vst.msk [vmem:[#allocation4 + $0xe0] sm:$0xff] %vm277, 0.0
        %339 = vst.msk [vmem:[#allocation4 + $0xe8] sm:$0xff] %vm277, 0.0
        %340 = vst.msk [vmem:[#allocation4 + $0xf0] sm:$0xff] %vm277, 0.0
        %341 = vst.msk [vmem:[#allocation4 + $0xf8] sm:$0xff] %vm277, 0.0
        %vm342 = vcmask 261120
        %343 = vst.msk [vmem:[#allocation5] sm:$0xff] %vm342, 0.0
        %344 = vst.msk [vmem:[#allocation5 + $0x8] sm:$0xff] %vm342, 0.0
        %345 = vst.msk [vmem:[#allocation5 + $0x10] sm:$0xff] %vm342, 0.0
        %346 = vst.msk [vmem:[#allocation5 + $0x18] sm:$0xff] %vm342, 0.0
        %347 = vst.msk [vmem:[#allocation5 + $0x20] sm:$0xff] %vm342, 0.0
        %348 = vst.msk [vmem:[#allocation5 + $0x28] sm:$0xff] %vm342, 0.0
        %349 = vst.msk [vmem:[#allocation5 + $0x30] sm:$0xff] %vm342, 0.0
        %350 = vst.msk [vmem:[#allocation5 + $0x38] sm:$0xff] %vm342, 0.0
        %351 = vst.msk [vmem:[#allocation5 + $0x40] sm:$0xff] %vm342, 0.0
        %352 = vst.msk [vmem:[#allocation5 + $0x48] sm:$0xff] %vm342, 0.0
        %353 = vst.msk [vmem:[#allocation5 + $0x50] sm:$0xff] %vm342, 0.0
        %354 = vst.msk [vmem:[#allocation5 + $0x58] sm:$0xff] %vm342, 0.0
        %355 = vst.msk [vmem:[#allocation5 + $0x60] sm:$0xff] %vm342, 0.0
        %356 = vst.msk [vmem:[#allocation5 + $0x68] sm:$0xff] %vm342, 0.0
        %357 = vst.msk [vmem:[#allocation5 + $0x70] sm:$0xff] %vm342, 0.0
        %358 = vst.msk [vmem:[#allocation5 + $0x78] sm:$0xff] %vm342, 0.0
        %359 = vst.msk [vmem:[#allocation5 + $0x80] sm:$0xff] %vm342, 0.0
        %360 = vst.msk [vmem:[#allocation5 + $0x88] sm:$0xff] %vm342, 0.0
        %361 = vst.msk [vmem:[#allocation5 + $0x90] sm:$0xff] %vm342, 0.0
        %362 = vst.msk [vmem:[#allocation5 + $0x98] sm:$0xff] %vm342, 0.0
        %363 = vst.msk [vmem:[#allocation5 + $0xa0] sm:$0xff] %vm342, 0.0
        %364 = vst.msk [vmem:[#allocation5 + $0xa8] sm:$0xff] %vm342, 0.0
        %365 = vst.msk [vmem:[#allocation5 + $0xb0] sm:$0xff] %vm342, 0.0
        %366 = vst.msk [vmem:[#allocation5 + $0xb8] sm:$0xff] %vm342, 0.0
        %367 = vst.msk [vmem:[#allocation5 + $0xc0] sm:$0xff] %vm342, 0.0
        %368 = vst.msk [vmem:[#allocation5 + $0xc8] sm:$0xff] %vm342, 0.0
        %369 = vst.msk [vmem:[#allocation5 + $0xd0] sm:$0xff] %vm342, 0.0
        %370 = vst.msk [vmem:[#allocation5 + $0xd8] sm:$0xff] %vm342, 0.0
        %371 = vst.msk [vmem:[#allocation5 + $0xe0] sm:$0xff] %vm342, 0.0
        %372 = vst.msk [vmem:[#allocation5 + $0xe8] sm:$0xff] %vm342, 0.0
        %373 = vst.msk [vmem:[#allocation5 + $0xf0] sm:$0xff] %vm342, 0.0
        %374 = vst.msk [vmem:[#allocation5 + $0xf8] sm:$0xff] %vm342, 0.0
        %v375 = vld [vmem:[%s250] sm:$0xff]
        %v376 = vld [vmem:[%s250 + $0x8] sm:$0xff]
        %v377 = vld [vmem:[%s250 + $0x10] sm:$0xff]
        %v378 = vld [vmem:[%s250 + $0x18] sm:$0xff]
        %v379 = vld [vmem:[%s250 + $0x20] sm:$0xff]
        %v380 = vld [vmem:[%s250 + $0x28] sm:$0xff]
        %v381 = vld [vmem:[%s250 + $0x30] sm:$0xff]
        %v382 = vld [vmem:[%s250 + $0x38] sm:$0xff]
        %v383 = vld [vmem:[%s250 + $0x40] sm:$0xff]
        %v384 = vld [vmem:[%s250 + $0x48] sm:$0xff]
        %v385 = vld [vmem:[%s250 + $0x50] sm:$0xff]
        %v386 = vld [vmem:[%s250 + $0x58] sm:$0xff]
        %v387 = vld [vmem:[%s250 + $0x60] sm:$0xff]
        %v388 = vld [vmem:[%s250 + $0x68] sm:$0xff]
        %v389 = vld [vmem:[%s250 + $0x70] sm:$0xff]
        %v390 = vld [vmem:[%s250 + $0x78] sm:$0xff]
        %v391 = vld [vmem:[%s250 + $0x80] sm:$0xff]
        %v392 = vld [vmem:[%s250 + $0x88] sm:$0xff]
        %v393 = vld [vmem:[%s250 + $0x90] sm:$0xff]
        %v394 = vld [vmem:[%s250 + $0x98] sm:$0xff]
        %v395 = vld [vmem:[%s250 + $0xa0] sm:$0xff]
        %v396 = vld [vmem:[%s250 + $0xa8] sm:$0xff]
        %v397 = vld [vmem:[%s250 + $0xb0] sm:$0xff]
        %v398 = vld [vmem:[%s250 + $0xb8] sm:$0xff]
        %v399 = vld [vmem:[%s250 + $0xc0] sm:$0xff]
        %v400 = vld [vmem:[%s250 + $0xc8] sm:$0xff]
        %v401 = vld [vmem:[%s250 + $0xd0] sm:$0xff]
        %v402 = vld [vmem:[%s250 + $0xd8] sm:$0xff]
        %v403 = vld [vmem:[%s250 + $0xe0] sm:$0xff]
        %v404 = vld [vmem:[%s250 + $0xe8] sm:$0xff]
        %v405 = vld [vmem:[%s250 + $0xf0] sm:$0xff]
        %v406 = vld [vmem:[%s250 + $0xf8] sm:$0xff]
        %v407 = vmul.f32 %v375, 0.25
        %v408 = vmul.f32 %v376, 0.25
        %v409 = vmul.f32 %v377, 0.25
        %v410 = vmul.f32 %v378, 0.25
        %v411 = vmul.f32 %v379, 0.25
        %v412 = vmul.f32 %v380, 0.25
        %v413 = vmul.f32 %v381, 0.25
        %v414 = vmul.f32 %v382, 0.25
        %v415 = vmul.f32 %v383, 0.25
        %v416 = vmul.f32 %v384, 0.25
        %v417 = vmul.f32 %v385, 0.25
        %v418 = vmul.f32 %v386, 0.25
        %v419 = vmul.f32 %v387, 0.25
        %v420 = vmul.f32 %v388, 0.25
        %v421 = vmul.f32 %v389, 0.25
        %v422 = vmul.f32 %v390, 0.25
        %v423 = vmul.f32 %v391, 0.25
        %v424 = vmul.f32 %v392, 0.25
        %v425 = vmul.f32 %v393, 0.25
        %v426 = vmul.f32 %v394, 0.25
        %v427 = vmul.f32 %v395, 0.25
        %v428 = vmul.f32 %v396, 0.25
        %v429 = vmul.f32 %v397, 0.25
        %v430 = vmul.f32 %v398, 0.25
        %v431 = vmul.f32 %v399, 0.25
        %v432 = vmul.f32 %v400, 0.25
        %v433 = vmul.f32 %v401, 0.25
        %v434 = vmul.f32 %v402, 0.25
        %v435 = vmul.f32 %v403, 0.25
        %v436 = vmul.f32 %v404, 0.25
        %v437 = vmul.f32 %v405, 0.25
        %v438 = vmul.f32 %v406, 0.25
        %v439 = vpack.c.bf16 %v408, %v407
        %v440 = vpack.c.bf16 %v410, %v409
        %v441 = vpack.c.bf16 %v412, %v411
        %v442 = vpack.c.bf16 %v414, %v413
        %v443 = vpack.c.bf16 %v416, %v415
        %v444 = vpack.c.bf16 %v418, %v417
        %v445 = vpack.c.bf16 %v420, %v419
        %v446 = vpack.c.bf16 %v422, %v421
        %v447 = vpack.c.bf16 %v424, %v423
        %v448 = vpack.c.bf16 %v426, %v425
        %v449 = vpack.c.bf16 %v428, %v427
        %v450 = vpack.c.bf16 %v430, %v429
        %v451 = vpack.c.bf16 %v432, %v431
        %v452 = vpack.c.bf16 %v434, %v433
        %v453 = vpack.c.bf16 %v436, %v435
        %v454 = vpack.c.bf16 %v438, %v437
        %455 = vst.msk [vmem:[#allocation2] sm:$0xff] %vm342, %v439
        %456 = vst.msk [vmem:[#allocation2 + $0x8] sm:$0xff] %vm342, %v440
        %457 = vst.msk [vmem:[#allocation2 + $0x10] sm:$0xff] %vm342, %v441
        %458 = vst.msk [vmem:[#allocation2 + $0x18] sm:$0xff] %vm342, %v442
        %459 = vst.msk [vmem:[#allocation2 + $0x20] sm:$0xff] %vm342, %v443
        %460 = vst.msk [vmem:[#allocation2 + $0x28] sm:$0xff] %vm342, %v444
        %461 = vst.msk [vmem:[#allocation2 + $0x30] sm:$0xff] %vm342, %v445
        %462 = vst.msk [vmem:[#allocation2 + $0x38] sm:$0xff] %vm342, %v446
        %463 = vst.msk [vmem:[#allocation2 + $0x40] sm:$0xff] %vm342, %v447
        %464 = vst.msk [vmem:[#allocation2 + $0x48] sm:$0xff] %vm342, %v448
        %465 = vst.msk [vmem:[#allocation2 + $0x50] sm:$0xff] %vm342, %v449
        %466 = vst.msk [vmem:[#allocation2 + $0x58] sm:$0xff] %vm342, %v450
        %467 = vst.msk [vmem:[#allocation2 + $0x60] sm:$0xff] %vm342, %v451
        %468 = vst.msk [vmem:[#allocation2 + $0x68] sm:$0xff] %vm342, %v452
        %469 = vst.msk [vmem:[#allocation2 + $0x70] sm:$0xff] %vm342, %v453
        %470 = vst.msk [vmem:[#allocation2 + $0x78] sm:$0xff] %vm342, %v454
      $region44: #{model_forward.1} parent=35 // pred_fallthru
        _
      %v471 = vld [vmem:[%s260] sm:$0xff]
      %v472 = vld [vmem:[%s260 + $0x8] sm:$0xff]
      %v473 = vld [vmem:[%s260 + $0x10] sm:$0xff]
      %v474 = vld [vmem:[%s260 + $0x18] sm:$0xff]
      %v475 = vld [vmem:[%s260 + $0x20] sm:$0xff]
      %v476 = vld [vmem:[%s260 + $0x28] sm:$0xff]
      %v477 = vld [vmem:[%s260 + $0x30] sm:$0xff]
      %v478 = vld [vmem:[%s260 + $0x38] sm:$0xff]
      %v479 = vld [vmem:[%s260 + $0x40] sm:$0xff]
      %v480 = vld [vmem:[%s260 + $0x48] sm:$0xff]
      %v481 = vld [vmem:[%s260 + $0x50] sm:$0xff]
      %v482 = vld [vmem:[%s260 + $0x58] sm:$0xff]
      %v483 = vld [vmem:[%s260 + $0x60] sm:$0xff]
      %v484 = vld [vmem:[%s260 + $0x68] sm:$0xff]
      %v485 = vld [vmem:[%s260 + $0x70] sm:$0xff]
      %v486 = vld [vmem:[%s260 + $0x78] sm:$0xff]
      %v487 = vld [vmem:[%s260 + $0x80] sm:$0xff]
      %v488 = vld [vmem:[%s260 + $0x88] sm:$0xff]
      %v489 = vld [vmem:[%s260 + $0x90] sm:$0xff]
      %v490 = vld [vmem:[%s260 + $0x98] sm:$0xff]
      %v491 = vld [vmem:[%s260 + $0xa0] sm:$0xff]
      %v492 = vld [vmem:[%s260 + $0xa8] sm:$0xff]
      %v493 = vld [vmem:[%s260 + $0xb0] sm:$0xff]
      %v494 = vld [vmem:[%s260 + $0xb8] sm:$0xff]
      %v495 = vld [vmem:[%s260 + $0xc0] sm:$0xff]
      %v496 = vld [vmem:[%s260 + $0xc8] sm:$0xff]
      %v497 = vld [vmem:[%s260 + $0xd0] sm:$0xff]
      %v498 = vld [vmem:[%s260 + $0xd8] sm:$0xff]
      %v499 = vld [vmem:[%s260 + $0xe0] sm:$0xff]
      %v500 = vld [vmem:[%s260 + $0xe8] sm:$0xff]
      %v501 = vld [vmem:[%s260 + $0xf0] sm:$0xff]
      %v502 = vld [vmem:[%s260 + $0xf8] sm:$0xff]
      %v503 = vpack.c.bf16 %v472, %v471
      %v504 = vpack.c.bf16 %v474, %v473
      %v505 = vpack.c.bf16 %v476, %v475
      %v506 = vpack.c.bf16 %v478, %v477
      %v507 = vpack.c.bf16 %v480, %v479
      %v508 = vpack.c.bf16 %v482, %v481
      %v509 = vpack.c.bf16 %v484, %v483
      %v510 = vpack.c.bf16 %v486, %v485
      %v511 = vpack.c.bf16 %v488, %v487
      %v512 = vpack.c.bf16 %v490, %v489
      %v513 = vpack.c.bf16 %v492, %v491
      %v514 = vpack.c.bf16 %v494, %v493
      %v515 = vpack.c.bf16 %v496, %v495
      %v516 = vpack.c.bf16 %v498, %v497
      %v517 = vpack.c.bf16 %v500, %v499
      %v518 = vpack.c.bf16 %v502, %v501
      %v519 = vld [vmem:[#allocation2] sm:$0xff]
      %v520 = vld [vmem:[#allocation2 + $0x8] sm:$0xff]
      %v521 = vld [vmem:[#allocation2 + $0x10] sm:$0xff]
      %v522 = vld [vmem:[#allocation2 + $0x18] sm:$0xff]
      %v523 = vld [vmem:[#allocation2 + $0x20] sm:$0xff]
      %v524 = vld [vmem:[#allocation2 + $0x28] sm:$0xff]
      %v525 = vld [vmem:[#allocation2 + $0x30] sm:$0xff]
      %v526 = vld [vmem:[#allocation2 + $0x38] sm:$0xff]
      %v527 = vld [vmem:[#allocation2 + $0x40] sm:$0xff]
      %v528 = vld [vmem:[#allocation2 + $0x48] sm:$0xff]
      %v529 = vld [vmem:[#allocation2 + $0x50] sm:$0xff]
      %v530 = vld [vmem:[#allocation2 + $0x58] sm:$0xff]
      %v531 = vld [vmem:[#allocation2 + $0x60] sm:$0xff]
      %v532 = vld [vmem:[#allocation2 + $0x68] sm:$0xff]
      %v533 = vld [vmem:[#allocation2 + $0x70] sm:$0xff]
      %v534 = vld [vmem:[#allocation2 + $0x78] sm:$0xff]
      %vm535 = vcmask 261120
      %v537 = vsel %vm535, %v519, 0
      %v540 = vsel %vm535, %v520, 0
      %v543 = vsel %vm535, %v521, 0
      %v546 = vsel %vm535, %v522, 0
      %v549 = vsel %vm535, %v523, 0
      %v552 = vsel %vm535, %v524, 0
      %v555 = vsel %vm535, %v525, 0
      %v558 = vsel %vm535, %v526, 0
      %v561 = vsel %vm535, %v527, 0
      %v564 = vsel %vm535, %v528, 0
      %v567 = vsel %vm535, %v529, 0
      %v570 = vsel %vm535, %v530, 0
      %v573 = vsel %vm535, %v531, 0
      %v576 = vsel %vm535, %v532, 0
      %v579 = vsel %vm535, %v533, 0
      %v582 = vsel %vm535, %v534, 0
      %v585 = vsel %vm535, %v503, 0
      %v588 = vsel %vm535, %v504, 0
      %v591 = vsel %vm535, %v505, 0
      %v594 = vsel %vm535, %v506, 0
      %v597 = vsel %vm535, %v507, 0
      %v600 = vsel %vm535, %v508, 0
      %v603 = vsel %vm535, %v509, 0
      %v606 = vsel %vm535, %v510, 0
      %v609 = vsel %vm535, %v511, 0
      %v612 = vsel %vm535, %v512, 0
      %v615 = vsel %vm535, %v513, 0
      %v618 = vsel %vm535, %v514, 0
      %v621 = vsel %vm535, %v515, 0
      %v624 = vsel %vm535, %v516, 0
      %v627 = vsel %vm535, %v517, 0
      %v630 = vsel %vm535, %v518, 0
      %632 = vmatprep.subr.bf16.mxu0 0
      %633 = vmatpush1.bf16.xpose.msra.mxu0 %v585
      %634 = vmatprep.subr.bf16.mxu0 0
      %635 = vmatpush1.bf16.xpose.msra.mxu0 %v588
      %636 = vmatprep.subr.bf16.mxu0 0
      %637 = vmatpush1.bf16.xpose.msra.mxu0 %v591
      %638 = vmatprep.subr.bf16.mxu0 0
      %639 = vmatpush1.bf16.xpose.msra.mxu0 %v594
      %640 = vmatprep.subr.bf16.mxu0 0
      %641 = vmatpush1.bf16.xpose.msra.mxu0 %v597
      %642 = vmatprep.subr.bf16.mxu0 0
      %643 = vmatpush1.bf16.xpose.msra.mxu0 %v600
      %644 = vmatprep.subr.bf16.mxu0 0
      %645 = vmatpush1.bf16.xpose.msra.mxu0 %v603
      %646 = vmatprep.subr.bf16.mxu0 0
      %647 = vmatpush1.bf16.xpose.msra.mxu0 %v606
      %648 = vmatprep.subr.bf16.mxu0 0
      %649 = vmatpush1.bf16.xpose.msra.mxu0 %v609
      %650 = vmatprep.subr.bf16.mxu0 0
      %651 = vmatpush1.bf16.xpose.msra.mxu0 %v612
      %652 = vmatprep.subr.bf16.mxu0 0
      %653 = vmatpush1.bf16.xpose.msra.mxu0 %v615
      %654 = vmatprep.subr.bf16.mxu0 0
      %655 = vmatpush1.bf16.xpose.msra.mxu0 %v618
      %656 = vmatprep.subr.bf16.mxu0 0
      %657 = vmatpush1.bf16.xpose.msra.mxu0 %v621
      %658 = vmatprep.subr.bf16.mxu0 0
      %659 = vmatpush1.bf16.xpose.msra.mxu0 %v624
      %660 = vmatprep.subr.bf16.mxu0 0
      %661 = vmatpush1.bf16.xpose.msra.mxu0 %v627
      %662 = vmatprep.subr.bf16.mxu0 0
      %663 = vmatpush1.bf16.xpose.msra.mxu0 %v630
      %664 = vmatprep.mubr.bf16.mxu0 0
      %665 = vmatmul.mubr.bf16.gmra.mrb[0].mxu0 %v537
      %v666 = vpop.f32.mrb[0].mxu0
      %v667 = vadd.f32 0.0, %v666
      %v668 = vpop.f32.mrb[0].mxu0
      %v669 = vadd.f32 0.0, %v668
      %v670 = vpop.f32.mrb[0].mxu0
      %v671 = vadd.f32 0.0, %v670
      %v672 = vpop.f32.mrb[0].mxu0
      %v673 = vadd.f32 0.0, %v672
      %674 = vmatprep.mubr.bf16.mxu0 0
      %675 = vmatmul.mubr.bf16.gmra.mrb[0].mxu0 %v540
      %v676 = vpop.f32.mrb[0].mxu0
      %v677 = vadd.f32 0.0, %v676
      %v678 = vpop.f32.mrb[0].mxu0
      %v679 = vadd.f32 0.0, %v678
      %v680 = vpop.f32.mrb[0].mxu0
      %v681 = vadd.f32 0.0, %v680
      %v682 = vpop.f32.mrb[0].mxu0
      %v683 = vadd.f32 0.0, %v682
      %684 = vmatprep.mubr.bf16.mxu0 0
      %685 = vmatmul.mubr.bf16.gmra.mrb[0].mxu0 %v543
      %v686 = vpop.f32.mrb[0].mxu0
      %v687 = vadd.f32 0.0, %v686
      %v688 = vpop.f32.mrb[0].mxu0
      %v689 = vadd.f32 0.0, %v688
      %v690 = vpop.f32.mrb[0].mxu0
      %v691 = vadd.f32 0.0, %v690
      %v692 = vpop.f32.mrb[0].mxu0
      %v693 = vadd.f32 0.0, %v692
      %694 = vmatprep.mubr.bf16.mxu0 0
      %695 = vmatmul.mubr.bf16.gmra.mrb[0].mxu0 %v546
      %v696 = vpop.f32.mrb[0].mxu0
      %v697 = vadd.f32 0.0, %v696
      %v698 = vpop.f32.mrb[0].mxu0
      %v699 = vadd.f32 0.0, %v698
      %v700 = vpop.f32.mrb[0].mxu0
      %v701 = vadd.f32 0.0, %v700
      %v702 = vpop.f32.mrb[0].mxu0
      %v703 = vadd.f32 0.0, %v702
      %704 = vmatprep.mubr.bf16.mxu0 0
      %705 = vmatmul.mubr.bf16.gmra.mrb[0].mxu0 %v549
      %v706 = vpop.f32.mrb[0].mxu0
      %v707 = vadd.f32 0.0, %v706
      %v708 = vpop.f32.mrb[0].mxu0
      %v709 = vadd.f32 0.0, %v708
      %v710 = vpop.f32.mrb[0].mxu0
      %v711 = vadd.f32 0.0, %v710
      %v712 = vpop.f32.mrb[0].mxu0
      %v713 = vadd.f32 0.0, %v712
      %714 = vmatprep.mubr.bf16.mxu0 0
      %715 = vmatmul.mubr.bf16.gmra.mrb[0].mxu0 %v552
      %v716 = vpop.f32.mrb[0].mxu0
      %v717 = vadd.f32 0.0, %v716
      %v718 = vpop.f32.mrb[0].mxu0
      %v719 = vadd.f32 0.0, %v718
      %v720 = vpop.f32.mrb[0].mxu0
      %v721 = vadd.f32 0.0, %v720
      %v722 = vpop.f32.mrb[0].mxu0
      %v723 = vadd.f32 0.0, %v722
      %724 = vmatprep.mubr.bf16.mxu0 0
      %725 = vmatmul.mubr.bf16.gmra.mrb[0].mxu0 %v555
      %v726 = vpop.f32.mrb[0].mxu0
      %v727 = vadd.f32 0.0, %v726
      %v728 = vpop.f32.mrb[0].mxu0
      %v729 = vadd.f32 0.0, %v728
      %v730 = vpop.f32.mrb[0].mxu0
      %v731 = vadd.f32 0.0, %v730
      %v732 = vpop.f32.mrb[0].mxu0
      %v733 = vadd.f32 0.0, %v732
      %734 = vmatprep.mubr.bf16.mxu0 0
      %735 = vmatmul.mubr.bf16.gmra.mrb[0].mxu0 %v558
      %v736 = vpop.f32.mrb[0].mxu0
      %v737 = vadd.f32 0.0, %v736
      %v738 = vpop.f32.mrb[0].mxu0
      %v739 = vadd.f32 0.0, %v738
      %v740 = vpop.f32.mrb[0].mxu0
      %v741 = vadd.f32 0.0, %v740
      %v742 = vpop.f32.mrb[0].mxu0
      %v743 = vadd.f32 0.0, %v742
      %744 = vmatprep.mubr.bf16.mxu0 0
      %745 = vmatmul.mubr.bf16.gmra.mrb[0].mxu0 %v561
      %v746 = vpop.f32.mrb[0].mxu0
      %v747 = vadd.f32 0.0, %v746
      %v748 = vpop.f32.mrb[0].mxu0
      %v749 = vadd.f32 0.0, %v748
      %v750 = vpop.f32.mrb[0].mxu0
      %v751 = vadd.f32 0.0, %v750
      %v752 = vpop.f32.mrb[0].mxu0
      %v753 = vadd.f32 0.0, %v752
      %754 = vmatprep.mubr.bf16.mxu0 0
      %755 = vmatmul.mubr.bf16.gmra.mrb[0].mxu0 %v564
      %v756 = vpop.f32.mrb[0].mxu0
      %v757 = vadd.f32 0.0, %v756
      %v758 = vpop.f32.mrb[0].mxu0
      %v759 = vadd.f32 0.0, %v758
      %v760 = vpop.f32.mrb[0].mxu0
      %v761 = vadd.f32 0.0, %v760
      %v762 = vpop.f32.mrb[0].mxu0
      %v763 = vadd.f32 0.0, %v762
      %764 = vmatprep.mubr.bf16.mxu0 0
      %765 = vmatmul.mubr.bf16.gmra.mrb[0].mxu0 %v567
      %v766 = vpop.f32.mrb[0].mxu0
      %v767 = vadd.f32 0.0, %v766
      %v768 = vpop.f32.mrb[0].mxu0
      %v769 = vadd.f32 0.0, %v768
      %v770 = vpop.f32.mrb[0].mxu0
      %v771 = vadd.f32 0.0, %v770
      %v772 = vpop.f32.mrb[0].mxu0
      %v773 = vadd.f32 0.0, %v772
      %774 = vmatprep.mubr.bf16.mxu0 0
      %775 = vmatmul.mubr.bf16.gmra.mrb[0].mxu0 %v570
      %v776 = vpop.f32.mrb[0].mxu0
      %v777 = vadd.f32 0.0, %v776
      %v778 = vpop.f32.mrb[0].mxu0
      %v779 = vadd.f32 0.0, %v778
      %v780 = vpop.f32.mrb[0].mxu0
      %v781 = vadd.f32 0.0, %v780
      %v782 = vpop.f32.mrb[0].mxu0
      %v783 = vadd.f32 0.0, %v782
      %784 = vmatprep.mubr.bf16.mxu0 0
      %785 = vmatmul.mubr.bf16.gmra.mrb[0].mxu0 %v573
      %v786 = vpop.f32.mrb[0].mxu0
      %v787 = vadd.f32 0.0, %v786
      %v788 = vpop.f32.mrb[0].mxu0
      %v789 = vadd.f32 0.0, %v788
      %v790 = vpop.f32.mrb[0].mxu0
      %v791 = vadd.f32 0.0, %v790
      %v792 = vpop.f32.mrb[0].mxu0
      %v793 = vadd.f32 0.0, %v792
      %794 = vmatprep.mubr.bf16.mxu0 0
      %795 = vmatmul.mubr.bf16.gmra.mrb[0].mxu0 %v576
      %v796 = vpop.f32.mrb[0].mxu0
      %v797 = vadd.f32 0.0, %v796
      %v798 = vpop.f32.mrb[0].mxu0
      %v799 = vadd.f32 0.0, %v798
      %v800 = vpop.f32.mrb[0].mxu0
      %v801 = vadd.f32 0.0, %v800
      %v802 = vpop.f32.mrb[0].mxu0
      %v803 = vadd.f32 0.0, %v802
      %804 = vmatprep.mubr.bf16.mxu0 0
      %805 = vmatmul.mubr.bf16.gmra.mrb[0].mxu0 %v579
      %v806 = vpop.f32.mrb[0].mxu0
      %v807 = vadd.f32 0.0, %v806
      %v808 = vpop.f32.mrb[0].mxu0
      %v809 = vadd.f32 0.0, %v808
      %v810 = vpop.f32.mrb[0].mxu0
      %v811 = vadd.f32 0.0, %v810
      %v812 = vpop.f32.mrb[0].mxu0
      %v813 = vadd.f32 0.0, %v812
      %814 = vmatprep.mubr.bf16.mxu0 0
      %815 = vmatmul.mubr.bf16.gmra.mrb[0].mxu0 %v582
      %v816 = vpop.f32.mrb[0].mxu0
      %v817 = vadd.f32 0.0, %v816
      %v818 = vpop.f32.mrb[0].mxu0
      %v819 = vadd.f32 0.0, %v818
      %v820 = vpop.f32.mrb[0].mxu0
      %v821 = vadd.f32 0.0, %v820
      %v822 = vpop.f32.mrb[0].mxu0
      %v823 = vadd.f32 0.0, %v822
      %824 = vdwg.mxu0
      %s825 = smul.u32 %s22, 256
      %v826 = vlaneseq
      %v827 = vand.u32 %v826, 127
      %v828 = vadd.s32 %v827, 128
      %v829 = vstv %s825
      %v830 = vadd.s32 %v829, %v827
      %v831 = vadd.s32 %v829, %v828
      %vm832 = vcmp.lt.s32.totalorder %v830, 200
      %vm833 = vcmp.lt.s32.totalorder %v831, 200
      %v834 = vsel %vm832, 1, 0
      %v835 = vsel %vm833, 1, 0
      %vm836 = vcmp.eq.s32.totalorder %v834, 1
      %vm837 = vcmp.eq.s32.totalorder %v835, 1
      %v838 = vsel %vm836, %v667, -1e+30
      %v839 = vsel %vm837, %v669, -1e+30
      %v840 = vsel %vm836, %v671, -1e+30
      %v841 = vsel %vm837, %v673, -1e+30
      %v842 = vsel %vm836, %v677, -1e+30
      %v843 = vsel %vm837, %v679, -1e+30
      %v844 = vsel %vm836, %v681, -1e+30
      %v845 = vsel %vm837, %v683, -1e+30
      %v846 = vsel %vm836, %v687, -1e+30
      %v847 = vsel %vm837, %v689, -1e+30
      %v848 = vsel %vm836, %v691, -1e+30
      %v849 = vsel %vm837, %v693, -1e+30
      %v850 = vsel %vm836, %v697, -1e+30
      %v851 = vsel %vm837, %v699, -1e+30
      %v852 = vsel %vm836, %v701, -1e+30
      %v853 = vsel %vm837, %v703, -1e+30
      %v854 = vsel %vm836, %v707, -1e+30
      %v855 = vsel %vm837, %v709, -1e+30
      %v856 = vsel %vm836, %v711, -1e+30
      %v857 = vsel %vm837, %v713, -1e+30
      %v858 = vsel %vm836, %v717, -1e+30
      %v859 = vsel %vm837, %v719, -1e+30
      %v860 = vsel %vm836, %v721, -1e+30
      %v861 = vsel %vm837, %v723, -1e+30
      %v862 = vsel %vm836, %v727, -1e+30
      %v863 = vsel %vm837, %v729, -1e+30
      %v864 = vsel %vm836, %v731, -1e+30
      %v865 = vsel %vm837, %v733, -1e+30
      %v866 = vsel %vm836, %v737, -1e+30
      %v867 = vsel %vm837, %v739, -1e+30
      %v868 = vsel %vm836, %v741, -1e+30
      %v869 = vsel %vm837, %v743, -1e+30
      %v870 = vsel %vm836, %v747, -1e+30
      %v871 = vsel %vm837, %v749, -1e+30
      %v872 = vsel %vm836, %v751, -1e+30
      %v873 = vsel %vm837, %v753, -1e+30
      %v874 = vsel %vm836, %v757, -1e+30
      %v875 = vsel %vm837, %v759, -1e+30
      %v876 = vsel %vm836, %v761, -1e+30
      %v877 = vsel %vm837, %v763, -1e+30
      %v878 = vsel %vm836, %v767, -1e+30
      %v879 = vsel %vm837, %v769, -1e+30
      %v880 = vsel %vm836, %v771, -1e+30
      %v881 = vsel %vm837, %v773, -1e+30
      %v882 = vsel %vm836, %v777, -1e+30
      %v883 = vsel %vm837, %v779, -1e+30
      %v884 = vsel %vm836, %v781, -1e+30
      %v885 = vsel %vm837, %v783, -1e+30
      %v886 = vsel %vm836, %v787, -1e+30
      %v887 = vsel %vm837, %v789, -1e+30
      %v888 = vsel %vm836, %v791, -1e+30
      %v889 = vsel %vm837, %v793, -1e+30
      %v890 = vsel %vm836, %v797, -1e+30
      %v891 = vsel %vm837, %v799, -1e+30
      %v892 = vsel %vm836, %v801, -1e+30
      %v893 = vsel %vm837, %v803, -1e+30
      %v894 = vsel %vm836, %v807, -1e+30
      %v895 = vsel %vm837, %v809, -1e+30
      %v896 = vsel %vm836, %v811, -1e+30
      %v897 = vsel %vm837, %v813, -1e+30
      %v898 = vsel %vm836, %v817, -1e+30
      %v899 = vsel %vm837, %v819, -1e+30
      %v900 = vsel %vm836, %v821, -1e+30
      %v901 = vsel %vm837, %v823, -1e+30
      %v902 = vld [vmem:[#allocation3] sm:$0xff]
      %v903 = vld [vmem:[#allocation3 + $0x8] sm:$0xff]
      %v904 = vld [vmem:[#allocation3 + $0x10] sm:$0xff]
      %v905 = vld [vmem:[#allocation3 + $0x18] sm:$0xff]
      %v906 = vld [vmem:[#allocation3 + $0x20] sm:$0xff]
      %v907 = vld [vmem:[#allocation3 + $0x28] sm:$0xff]
      %v908 = vld [vmem:[#allocation3 + $0x30] sm:$0xff]
      %v909 = vld [vmem:[#allocation3 + $0x38] sm:$0xff]
      %v910 = vld [vmem:[#allocation3 + $0x40] sm:$0xff]
      %v911 = vld [vmem:[#allocation3 + $0x48] sm:$0xff]
      %v912 = vld [vmem:[#allocation3 + $0x50] sm:$0xff]
      %v913 = vld [vmem:[#allocation3 + $0x58] sm:$0xff]
      %v914 = vld [vmem:[#allocation3 + $0x60] sm:$0xff]
      %v915 = vld [vmem:[#allocation3 + $0x68] sm:$0xff]
      %v916 = vld [vmem:[#allocation3 + $0x70] sm:$0xff]
      %v917 = vld [vmem:[#allocation3 + $0x78] sm:$0xff]
      %v918 = vld [vmem:[#allocation3 + $0x80] sm:$0xff]
      %v919 = vld [vmem:[#allocation3 + $0x88] sm:$0xff]
      %v920 = vld [vmem:[#allocation3 + $0x90] sm:$0xff]
      %v921 = vld [vmem:[#allocation3 + $0x98] sm:$0xff]
      %v922 = vld [vmem:[#allocation3 + $0xa0] sm:$0xff]
      %v923 = vld [vmem:[#allocation3 + $0xa8] sm:$0xff]
      %v924 = vld [vmem:[#allocation3 + $0xb0] sm:$0xff]
      %v925 = vld [vmem:[#allocation3 + $0xb8] sm:$0xff]
      %v926 = vld [vmem:[#allocation3 + $0xc0] sm:$0xff]
      %v927 = vld [vmem:[#allocation3 + $0xc8] sm:$0xff]
      %v928 = vld [vmem:[#allocation3 + $0xd0] sm:$0xff]
      %v929 = vld [vmem:[#allocation3 + $0xd8] sm:$0xff]
      %v930 = vld [vmem:[#allocation3 + $0xe0] sm:$0xff]
      %v931 = vld [vmem:[#allocation3 + $0xe8] sm:$0xff]
      %v932 = vld [vmem:[#allocation3 + $0xf0] sm:$0xff]
      %v933 = vld [vmem:[#allocation3 + $0xf8] sm:$0xff]
      %v934 = vmax.f32 %v838, %v839
      %935 = vmax.xlane.f32.xlu0 %v934
      %v936 = vpop.xlane.xlu0 %935
      %v937 = vmax.f32 %v840, %v841
      %938 = vmax.xlane.f32.xlu0 %v937
      %v939 = vpop.xlane.xlu0 %938
      %v940 = vmax.f32 %v842, %v843
      %941 = vmax.xlane.f32.xlu0 %v940
      %v942 = vpop.xlane.xlu0 %941
      %v943 = vmax.f32 %v844, %v845
      %944 = vmax.xlane.f32.xlu0 %v943
      %v945 = vpop.xlane.xlu0 %944
      %v946 = vmax.f32 %v846, %v847
      %947 = vmax.xlane.f32.xlu0 %v946
      %v948 = vpop.xlane.xlu0 %947
      %v949 = vmax.f32 %v848, %v849
      %950 = vmax.xlane.f32.xlu0 %v949
      %v951 = vpop.xlane.xlu0 %950
      %v952 = vmax.f32 %v850, %v851
      %953 = vmax.xlane.f32.xlu0 %v952
      %v954 = vpop.xlane.xlu0 %953
      %v955 = vmax.f32 %v852, %v853
      %956 = vmax.xlane.f32.xlu0 %v955
      %v957 = vpop.xlane.xlu0 %956
      %v958 = vmax.f32 %v854, %v855
      %959 = vmax.xlane.f32.xlu0 %v958
      %v960 = vpop.xlane.xlu0 %959
      %v961 = vmax.f32 %v856, %v857
      %962 = vmax.xlane.f32.xlu0 %v961
      %v963 = vpop.xlane.xlu0 %962
      %v964 = vmax.f32 %v858, %v859
      %965 = vmax.xlane.f32.xlu0 %v964
      %v966 = vpop.xlane.xlu0 %965
      %v967 = vmax.f32 %v860, %v861
      %968 = vmax.xlane.f32.xlu0 %v967
      %v969 = vpop.xlane.xlu0 %968
      %v970 = vmax.f32 %v862, %v863
      %971 = vmax.xlane.f32.xlu0 %v970
      %v972 = vpop.xlane.xlu0 %971
      %v973 = vmax.f32 %v864, %v865
      %974 = vmax.xlane.f32.xlu0 %v973
      %v975 = vpop.xlane.xlu0 %974
      %v976 = vmax.f32 %v866, %v867
      %977 = vmax.xlane.f32.xlu0 %v976
      %v978 = vpop.xlane.xlu0 %977
      %v979 = vmax.f32 %v868, %v869
      %980 = vmax.xlane.f32.xlu0 %v979
      %v981 = vpop.xlane.xlu0 %980
      %v982 = vmax.f32 %v870, %v871
      %983 = vmax.xlane.f32.xlu0 %v982
      %v984 = vpop.xlane.xlu0 %983
      %v985 = vmax.f32 %v872, %v873
      %986 = vmax.xlane.f32.xlu0 %v985
      %v987 = vpop.xlane.xlu0 %986
      %v988 = vmax.f32 %v874, %v875
      %989 = vmax.xlane.f32.xlu0 %v988
      %v990 = vpop.xlane.xlu0 %989
      %v991 = vmax.f32 %v876, %v877
      %992 = vmax.xlane.f32.xlu0 %v991
      %v993 = vpop.xlane.xlu0 %992
      %v994 = vmax.f32 %v878, %v879
      %995 = vmax.xlane.f32.xlu0 %v994
      %v996 = vpop.xlane.xlu0 %995
      %v997 = vmax.f32 %v880, %v881
      %998 = vmax.xlane.f32.xlu0 %v997
      %v999 = vpop.xlane.xlu0 %998
      %v1000 = vmax.f32 %v882, %v883
      %1001 = vmax.xlane.f32.xlu0 %v1000
      %v1002 = vpop.xlane.xlu0 %1001
      %v1003 = vmax.f32 %v884, %v885
      %1004 = vmax.xlane.f32.xlu0 %v1003
      %v1005 = vpop.xlane.xlu0 %1004
      %v1006 = vmax.f32 %v886, %v887
      %1007 = vmax.xlane.f32.xlu0 %v1006
      %v1008 = vpop.xlane.xlu0 %1007
      %v1009 = vmax.f32 %v888, %v889
      %1010 = vmax.xlane.f32.xlu0 %v1009
      %v1011 = vpop.xlane.xlu0 %1010
      %v1012 = vmax.f32 %v890, %v891
      %1013 = vmax.xlane.f32.xlu0 %v1012
      %v1014 = vpop.xlane.xlu0 %1013
      %v1015 = vmax.f32 %v892, %v893
      %1016 = vmax.xlane.f32.xlu0 %v1015
      %v1017 = vpop.xlane.xlu0 %1016
      %v1018 = vmax.f32 %v894, %v895
      %1019 = vmax.xlane.f32.xlu0 %v1018
      %v1020 = vpop.xlane.xlu0 %1019
      %v1021 = vmax.f32 %v896, %v897
      %1022 = vmax.xlane.f32.xlu0 %v1021
      %v1023 = vpop.xlane.xlu0 %1022
      %v1024 = vmax.f32 %v898, %v899
      %1025 = vmax.xlane.f32.xlu0 %v1024
      %v1026 = vpop.xlane.xlu0 %1025
      %v1027 = vmax.f32 %v900, %v901
      %1028 = vmax.xlane.f32.xlu0 %v1027
      %v1029 = vpop.xlane.xlu0 %1028
      %v1030 = vmax.f32 %v902, %v936
      %v1031 = vmax.f32 %v903, %v939
      %v1032 = vmax.f32 %v904, %v942
      %v1033 = vmax.f32 %v905, %v945
      %v1034 = vmax.f32 %v906, %v948
      %v1035 = vmax.f32 %v907, %v951
      %v1036 = vmax.f32 %v908, %v954
      %v1037 = vmax.f32 %v909, %v957
      %v1038 = vmax.f32 %v910, %v960
      %v1039 = vmax.f32 %v911, %v963
      %v1040 = vmax.f32 %v912, %v966
      %v1041 = vmax.f32 %v913, %v969
      %v1042 = vmax.f32 %v914, %v972
      %v1043 = vmax.f32 %v915, %v975
      %v1044 = vmax.f32 %v916, %v978
      %v1045 = vmax.f32 %v917, %v981
      %v1046 = vmax.f32 %v918, %v984
      %v1047 = vmax.f32 %v919, %v987
      %v1048 = vmax.f32 %v920, %v990
      %v1049 = vmax.f32 %v921, %v993
      %v1050 = vmax.f32 %v922, %v996
      %v1051 = vmax.f32 %v923, %v999
      %v1052 = vmax.f32 %v924, %v1002
      %v1053 = vmax.f32 %v925, %v1005
      %v1054 = vmax.f32 %v926, %v1008
      %v1055 = vmax.f32 %v927, %v1011
      %v1056 = vmax.f32 %v928, %v1014
      %v1057 = vmax.f32 %v929, %v1017
      %v1058 = vmax.f32 %v930, %v1020
      %v1059 = vmax.f32 %v931, %v1023
      %v1060 = vmax.f32 %v932, %v1026
      %v1061 = vmax.f32 %v933, %v1029
      %v1062 = vsub.f32 %v902, %v1030
      %v1063 = vsub.f32 %v903, %v1031
      %v1064 = vsub.f32 %v904, %v1032
      %v1065 = vsub.f32 %v905, %v1033
      %v1066 = vsub.f32 %v906, %v1034
      %v1067 = vsub.f32 %v907, %v1035
      %v1068 = vsub.f32 %v908, %v1036
      %v1069 = vsub.f32 %v909, %v1037
      %v1070 = vsub.f32 %v910, %v1038
      %v1071 = vsub.f32 %v911, %v1039
      %v1072 = vsub.f32 %v912, %v1040
      %v1073 = vsub.f32 %v913, %v1041
      %v1074 = vsub.f32 %v914, %v1042
      %v1075 = vsub.f32 %v915, %v1043
      %v1076 = vsub.f32 %v916, %v1044
      %v1077 = vsub.f32 %v917, %v1045
      %v1078 = vsub.f32 %v918, %v1046
      %v1079 = vsub.f32 %v919, %v1047
      %v1080 = vsub.f32 %v920, %v1048
      %v1081 = vsub.f32 %v921, %v1049
      %v1082 = vsub.f32 %v922, %v1050
      %v1083 = vsub.f32 %v923, %v1051
      %v1084 = vsub.f32 %v924, %v1052
      %v1085 = vsub.f32 %v925, %v1053
      %v1086 = vsub.f32 %v926, %v1054
      %v1087 = vsub.f32 %v927, %v1055
      %v1088 = vsub.f32 %v928, %v1056
      %v1089 = vsub.f32 %v929, %v1057
      %v1090 = vsub.f32 %v930, %v1058
      %v1091 = vsub.f32 %v931, %v1059
      %v1092 = vsub.f32 %v932, %v1060
      %v1093 = vsub.f32 %v933, %v1061
      %v1094 = vmul.f32 %v1062, 1.442695
      %v1095 = vpow.pop %v1094
      %v1096 = vmul.f32 %v1063, 1.442695
      %v1097 = vpow.pop %v1096
      %v1098 = vmul.f32 %v1064, 1.442695
      %v1099 = vpow.pop %v1098
      %v1100 = vmul.f32 %v1065, 1.442695
      %v1101 = vpow.pop %v1100
      %v1102 = vmul.f32 %v1066, 1.442695
      %v1103 = vpow.pop %v1102
      %v1104 = vmul.f32 %v1067, 1.442695
      %v1105 = vpow.pop %v1104
      %v1106 = vmul.f32 %v1068, 1.442695
      %v1107 = vpow.pop %v1106
      %v1108 = vmul.f32 %v1069, 1.442695
      %v1109 = vpow.pop %v1108
      %v1110 = vmul.f32 %v1070, 1.442695
      %v1111 = vpow.pop %v1110
      %v1112 = vmul.f32 %v1071, 1.442695
      %v1113 = vpow.pop %v1112
      %v1114 = vmul.f32 %v1072, 1.442695
      %v1115 = vpow.pop %v1114
      %v1116 = vmul.f32 %v1073, 1.442695
      %v1117 = vpow.pop %v1116
      %v1118 = vmul.f32 %v1074, 1.442695
      %v1119 = vpow.pop %v1118
      %v1120 = vmul.f32 %v1075, 1.442695
      %v1121 = vpow.pop %v1120
      %v1122 = vmul.f32 %v1076, 1.442695
      %v1123 = vpow.pop %v1122
      %v1124 = vmul.f32 %v1077, 1.442695
      %v1125 = vpow.pop %v1124
      %v1126 = vmul.f32 %v1078, 1.442695
      %v1127 = vpow.pop %v1126
      %v1128 = vmul.f32 %v1079, 1.442695
      %v1129 = vpow.pop %v1128
      %v1130 = vmul.f32 %v1080, 1.442695
      %v1131 = vpow.pop %v1130
      %v1132 = vmul.f32 %v1081, 1.442695
      %v1133 = vpow.pop %v1132
      %v1134 = vmul.f32 %v1082, 1.442695
      %v1135 = vpow.pop %v1134
      %v1136 = vmul.f32 %v1083, 1.442695
      %v1137 = vpow.pop %v1136
      %v1138 = vmul.f32 %v1084, 1.442695
      %v1139 = vpow.pop %v1138
      %v1140 = vmul.f32 %v1085, 1.442695
      %v1141 = vpow.pop %v1140
      %v1142 = vmul.f32 %v1086, 1.442695
      %v1143 = vpow.pop %v1142
      %v1144 = vmul.f32 %v1087, 1.442695
      %v1145 = vpow.pop %v1144
      %v1146 = vmul.f32 %v1088, 1.442695
      %v1147 = vpow.pop %v1146
      %v1148 = vmul.f32 %v1089, 1.442695
      %v1149 = vpow.pop %v1148
      %v1150 = vmul.f32 %v1090, 1.442695
      %v1151 = vpow.pop %v1150
      %v1152 = vmul.f32 %v1091, 1.442695
      %v1153 = vpow.pop %v1152
      %v1154 = vmul.f32 %v1092, 1.442695
      %v1155 = vpow.pop %v1154
      %v1156 = vmul.f32 %v1093, 1.442695
      %v1157 = vpow.pop %v1156
      %1159 = vset.pattern.permute.xlu0 0
      %1160 = vperm.xlu0 %1159, %v1030
      %v1161 = vpop.permute.xlu0 %1160
      %1164 = vset.pattern.permute.xlu0 0
      %1165 = vperm.xlu0 %1164, %v1031
      %v1166 = vpop.permute.xlu0 %1165
      %1169 = vset.pattern.permute.xlu0 0
      %1170 = vperm.xlu0 %1169, %v1032
      %v1171 = vpop.permute.xlu0 %1170
      %1174 = vset.pattern.permute.xlu0 0
      %1175 = vperm.xlu0 %1174, %v1033
      %v1176 = vpop.permute.xlu0 %1175
      %1179 = vset.pattern.permute.xlu0 0
      %1180 = vperm.xlu0 %1179, %v1034
      %v1181 = vpop.permute.xlu0 %1180
      %1184 = vset.pattern.permute.xlu0 0
      %1185 = vperm.xlu0 %1184, %v1035
      %v1186 = vpop.permute.xlu0 %1185
      %1189 = vset.pattern.permute.xlu0 0
      %1190 = vperm.xlu0 %1189, %v1036
      %v1191 = vpop.permute.xlu0 %1190
      %1194 = vset.pattern.permute.xlu0 0
      %1195 = vperm.xlu0 %1194, %v1037
      %v1196 = vpop.permute.xlu0 %1195
      %1199 = vset.pattern.permute.xlu0 0
      %1200 = vperm.xlu0 %1199, %v1038
      %v1201 = vpop.permute.xlu0 %1200
      %1204 = vset.pattern.permute.xlu0 0
      %1205 = vperm.xlu0 %1204, %v1039
      %v1206 = vpop.permute.xlu0 %1205
      %1209 = vset.pattern.permute.xlu0 0
      %1210 = vperm.xlu0 %1209, %v1040
      %v1211 = vpop.permute.xlu0 %1210
      %1214 = vset.pattern.permute.xlu0 0
      %1215 = vperm.xlu0 %1214, %v1041
      %v1216 = vpop.permute.xlu0 %1215
      %1219 = vset.pattern.permute.xlu0 0
      %1220 = vperm.xlu0 %1219, %v1042
      %v1221 = vpop.permute.xlu0 %1220
      %1224 = vset.pattern.permute.xlu0 0
      %1225 = vperm.xlu0 %1224, %v1043
      %v1226 = vpop.permute.xlu0 %1225
      %1229 = vset.pattern.permute.xlu0 0
      %1230 = vperm.xlu0 %1229, %v1044
      %v1231 = vpop.permute.xlu0 %1230
      %1234 = vset.pattern.permute.xlu0 0
      %1235 = vperm.xlu0 %1234, %v1045
      %v1236 = vpop.permute.xlu0 %1235
      %1239 = vset.pattern.permute.xlu0 0
      %1240 = vperm.xlu0 %1239, %v1046
      %v1241 = vpop.permute.xlu0 %1240
      %1244 = vset.pattern.permute.xlu0 0
      %1245 = vperm.xlu0 %1244, %v1047
      %v1246 = vpop.permute.xlu0 %1245
      %1249 = vset.pattern.permute.xlu0 0
      %1250 = vperm.xlu0 %1249, %v1048
      %v1251 = vpop.permute.xlu0 %1250
      %1254 = vset.pattern.permute.xlu0 0
      %1255 = vperm.xlu0 %1254, %v1049
      %v1256 = vpop.permute.xlu0 %1255
      %1259 = vset.pattern.permute.xlu0 0
      %1260 = vperm.xlu0 %1259, %v1050
      %v1261 = vpop.permute.xlu0 %1260
      %1264 = vset.pattern.permute.xlu0 0
      %1265 = vperm.xlu0 %1264, %v1051
      %v1266 = vpop.permute.xlu0 %1265
      %1269 = vset.pattern.permute.xlu0 0
      %1270 = vperm.xlu0 %1269, %v1052
      %v1271 = vpop.permute.xlu0 %1270
      %1274 = vset.pattern.permute.xlu0 0
      %1275 = vperm.xlu0 %1274, %v1053
      %v1276 = vpop.permute.xlu0 %1275
      %1279 = vset.pattern.permute.xlu0 0
      %1280 = vperm.xlu0 %1279, %v1054
      %v1281 = vpop.permute.xlu0 %1280
      %1284 = vset.pattern.permute.xlu0 0
      %1285 = vperm.xlu0 %1284, %v1055
      %v1286 = vpop.permute.xlu0 %1285
      %1289 = vset.pattern.permute.xlu0 0
      %1290 = vperm.xlu0 %1289, %v1056
      %v1291 = vpop.permute.xlu0 %1290
      %1294 = vset.pattern.permute.xlu0 0
      %1295 = vperm.xlu0 %1294, %v1057
      %v1296 = vpop.permute.xlu0 %1295
      %1299 = vset.pattern.permute.xlu0 0
      %1300 = vperm.xlu0 %1299, %v1058
      %v1301 = vpop.permute.xlu0 %1300
      %1304 = vset.pattern.permute.xlu0 0
      %1305 = vperm.xlu0 %1304, %v1059
      %v1306 = vpop.permute.xlu0 %1305
      %1309 = vset.pattern.permute.xlu0 0
      %1310 = vperm.xlu0 %1309, %v1060
      %v1311 = vpop.permute.xlu0 %1310
      %1314 = vset.pattern.permute.xlu0 0
      %1315 = vperm.xlu0 %1314, %v1061
      %v1316 = vpop.permute.xlu0 %1315
      %v1318 = vsub.f32 %v838, %v1161
      %v1319 = vsub.f32 %v839, %v1161
      %v1320 = vsub.f32 %v840, %v1166
      %v1321 = vsub.f32 %v841, %v1166
      %v1322 = vsub.f32 %v842, %v1171
      %v1323 = vsub.f32 %v843, %v1171
      %v1324 = vsub.f32 %v844, %v1176
      %v1325 = vsub.f32 %v845, %v1176
      %v1326 = vsub.f32 %v846, %v1181
      %v1327 = vsub.f32 %v847, %v1181
      %v1328 = vsub.f32 %v848, %v1186
      %v1329 = vsub.f32 %v849, %v1186
      %v1330 = vsub.f32 %v850, %v1191
      %v1331 = vsub.f32 %v851, %v1191
      %v1332 = vsub.f32 %v852, %v1196
      %v1333 = vsub.f32 %v853, %v1196
      %v1334 = vsub.f32 %v854, %v1201
      %v1335 = vsub.f32 %v855, %v1201
      %v1336 = vsub.f32 %v856, %v1206
      %v1337 = vsub.f32 %v857, %v1206
      %v1338 = vsub.f32 %v858, %v1211
      %v1339 = vsub.f32 %v859, %v1211
      %v1340 = vsub.f32 %v860, %v1216
      %v1341 = vsub.f32 %v861, %v1216
      %v1342 = vsub.f32 %v862, %v1221
      %v1343 = vsub.f32 %v863, %v1221
      %v1344 = vsub.f32 %v864, %v1226
      %v1345 = vsub.f32 %v865, %v1226
      %v1346 = vsub.f32 %v866, %v1231
      %v1347 = vsub.f32 %v867, %v1231
      %v1348 = vsub.f32 %v868, %v1236
      %v1349 = vsub.f32 %v869, %v1236
      %v1350 = vsub.f32 %v870, %v1241
      %v1351 = vsub.f32 %v871, %v1241
      %v1352 = vsub.f32 %v872, %v1246
      %v1353 = vsub.f32 %v873, %v1246
      %v1354 = vsub.f32 %v874, %v1251
      %v1355 = vsub.f32 %v875, %v1251
      %v1356 = vsub.f32 %v876, %v1256
      %v1357 = vsub.f32 %v877, %v1256
      %v1358 = vsub.f32 %v878, %v1261
      %v1359 = vsub.f32 %v879, %v1261
      %v1360 = vsub.f32 %v880, %v1266
      %v1361 = vsub.f32 %v881, %v1266
      %v1362 = vsub.f32 %v882, %v1271
      %v1363 = vsub.f32 %v883, %v1271
      %v1364 = vsub.f32 %v884, %v1276
      %v1365 = vsub.f32 %v885, %v1276
      %v1366 = vsub.f32 %v886, %v1281
      %v1367 = vsub.f32 %v887, %v1281
      %v1368 = vsub.f32 %v888, %v1286
      %v1369 = vsub.f32 %v889, %v1286
      %v1370 = vsub.f32 %v890, %v1291
      %v1371 = vsub.f32 %v891, %v1291
      %v1372 = vsub.f32 %v892, %v1296
      %v1373 = vsub.f32 %v893, %v1296
      %v1374 = vsub.f32 %v894, %v1301
      %v1375 = vsub.f32 %v895, %v1301
      %v1376 = vsub.f32 %v896, %v1306
      %v1377 = vsub.f32 %v897, %v1306
      %v1378 = vsub.f32 %v898, %v1311
      %v1379 = vsub.f32 %v899, %v1311
      %v1380 = vsub.f32 %v900, %v1316
      %v1381 = vsub.f32 %v901, %v1316
      %v1382 = vmul.f32 %v1318, 1.442695
      %v1383 = vpow.pop %v1382
      %v1384 = vmul.f32 %v1319, 1.442695
      %v1385 = vpow.pop %v1384
      %v1386 = vmul.f32 %v1320, 1.442695
      %v1387 = vpow.pop %v1386
      %v1388 = vmul.f32 %v1321, 1.442695
      %v1389 = vpow.pop %v1388
      %v1390 = vmul.f32 %v1322, 1.442695
      %v1391 = vpow.pop %v1390
      %v1392 = vmul.f32 %v1323, 1.442695
      %v1393 = vpow.pop %v1392
      %v1394 = vmul.f32 %v1324, 1.442695
      %v1395 = vpow.pop %v1394
      %v1396 = vmul.f32 %v1325, 1.442695
      %v1397 = vpow.pop %v1396
      %v1398 = vmul.f32 %v1326, 1.442695
      %v1399 = vpow.pop %v1398
      %v1400 = vmul.f32 %v1327, 1.442695
      %v1401 = vpow.pop %v1400
      %v1402 = vmul.f32 %v1328, 1.442695
      %v1403 = vpow.pop %v1402
      %v1404 = vmul.f32 %v1329, 1.442695
      %v1405 = vpow.pop %v1404
      %v1406 = vmul.f32 %v1330, 1.442695
      %v1407 = vpow.pop %v1406
      %v1408 = vmul.f32 %v1331, 1.442695
      %v1409 = vpow.pop %v1408
      %v1410 = vmul.f32 %v1332, 1.442695
      %v1411 = vpow.pop %v1410
      %v1412 = vmul.f32 %v1333, 1.442695
      %v1413 = vpow.pop %v1412
      %v1414 = vmul.f32 %v1334, 1.442695
      %v1415 = vpow.pop %v1414
      %v1416 = vmul.f32 %v1335, 1.442695
      %v1417 = vpow.pop %v1416
      %v1418 = vmul.f32 %v1336, 1.442695
      %v1419 = vpow.pop %v1418
      %v1420 = vmul.f32 %v1337, 1.442695
      %v1421 = vpow.pop %v1420
      %v1422 = vmul.f32 %v1338, 1.442695
      %v1423 = vpow.pop %v1422
      %v1424 = vmul.f32 %v1339, 1.442695
      %v1425 = vpow.pop %v1424
      %v1426 = vmul.f32 %v1340, 1.442695
      %v1427 = vpow.pop %v1426
      %v1428 = vmul.f32 %v1341, 1.442695
      %v1429 = vpow.pop %v1428
      %v1430 = vmul.f32 %v1342, 1.442695
      %v1431 = vpow.pop %v1430
      %v1432 = vmul.f32 %v1343, 1.442695
      %v1433 = vpow.pop %v1432
      %v1434 = vmul.f32 %v1344, 1.442695
      %v1435 = vpow.pop %v1434
      %v1436 = vmul.f32 %v1345, 1.442695
      %v1437 = vpow.pop %v1436
      %v1438 = vmul.f32 %v1346, 1.442695
      %v1439 = vpow.pop %v1438
      %v1440 = vmul.f32 %v1347, 1.442695
      %v1441 = vpow.pop %v1440
      %v1442 = vmul.f32 %v1348, 1.442695
      %v1443 = vpow.pop %v1442
      %v1444 = vmul.f32 %v1349, 1.442695
      %v1445 = vpow.pop %v1444
      %v1446 = vmul.f32 %v1350, 1.442695
      %v1447 = vpow.pop %v1446
      %v1448 = vmul.f32 %v1351, 1.442695
      %v1449 = vpow.pop %v1448
      %v1450 = vmul.f32 %v1352, 1.442695
      %v1451 = vpow.pop %v1450
      %v1452 = vmul.f32 %v1353, 1.442695
      %v1453 = vpow.pop %v1452
      %v1454 = vmul.f32 %v1354, 1.442695
      %v1455 = vpow.pop %v1454
      %v1456 = vmul.f32 %v1355, 1.442695
      %v1457 = vpow.pop %v1456
      %v1458 = vmul.f32 %v1356, 1.442695
      %v1459 = vpow.pop %v1458
      %v1460 = vmul.f32 %v1357, 1.442695
      %v1461 = vpow.pop %v1460
      %v1462 = vmul.f32 %v1358, 1.442695
      %v1463 = vpow.pop %v1462
      %v1464 = vmul.f32 %v1359, 1.442695
      %v1465 = vpow.pop %v1464
      %v1466 = vmul.f32 %v1360, 1.442695
      %v1467 = vpow.pop %v1466
      %v1468 = vmul.f32 %v1361, 1.442695
      %v1469 = vpow.pop %v1468
      %v1470 = vmul.f32 %v1362, 1.442695
      %v1471 = vpow.pop %v1470
      %v1472 = vmul.f32 %v1363, 1.442695
      %v1473 = vpow.pop %v1472
      %v1474 = vmul.f32 %v1364, 1.442695
      %v1475 = vpow.pop %v1474
      %v1476 = vmul.f32 %v1365, 1.442695
      %v1477 = vpow.pop %v1476
      %v1478 = vmul.f32 %v1366, 1.442695
      %v1479 = vpow.pop %v1478
      %v1480 = vmul.f32 %v1367, 1.442695
      %v1481 = vpow.pop %v1480
      %v1482 = vmul.f32 %v1368, 1.442695
      %v1483 = vpow.pop %v1482
      %v1484 = vmul.f32 %v1369, 1.442695
      %v1485 = vpow.pop %v1484
      %v1486 = vmul.f32 %v1370, 1.442695
      %v1487 = vpow.pop %v1486
      %v1488 = vmul.f32 %v1371, 1.442695
      %v1489 = vpow.pop %v1488
      %v1490 = vmul.f32 %v1372, 1.442695
      %v1491 = vpow.pop %v1490
      %v1492 = vmul.f32 %v1373, 1.442695
      %v1493 = vpow.pop %v1492
      %v1494 = vmul.f32 %v1374, 1.442695
      %v1495 = vpow.pop %v1494
      %v1496 = vmul.f32 %v1375, 1.442695
      %v1497 = vpow.pop %v1496
      %v1498 = vmul.f32 %v1376, 1.442695
      %v1499 = vpow.pop %v1498
      %v1500 = vmul.f32 %v1377, 1.442695
      %v1501 = vpow.pop %v1500
      %v1502 = vmul.f32 %v1378, 1.442695
      %v1503 = vpow.pop %v1502
      %v1504 = vmul.f32 %v1379, 1.442695
      %v1505 = vpow.pop %v1504
      %v1506 = vmul.f32 %v1380, 1.442695
      %v1507 = vpow.pop %v1506
      %v1508 = vmul.f32 %v1381, 1.442695
      %v1509 = vpow.pop %v1508
      %v1510 = vld [vmem:[#allocation4] sm:$0xff]
      %v1511 = vld [vmem:[#allocation4 + $0x8] sm:$0xff]
      %v1512 = vld [vmem:[#allocation4 + $0x10] sm:$0xff]
      %v1513 = vld [vmem:[#allocation4 + $0x18] sm:$0xff]
      %v1514 = vld [vmem:[#allocation4 + $0x20] sm:$0xff]
      %v1515 = vld [vmem:[#allocation4 + $0x28] sm:$0xff]
      %v1516 = vld [vmem:[#allocation4 + $0x30] sm:$0xff]
      %v1517 = vld [vmem:[#allocation4 + $0x38] sm:$0xff]
      %v1518 = vld [vmem:[#allocation4 + $0x40] sm:$0xff]
      %v1519 = vld [vmem:[#allocation4 + $0x48] sm:$0xff]
      %v1520 = vld [vmem:[#allocation4 + $0x50] sm:$0xff]
      %v1521 = vld [vmem:[#allocation4 + $0x58] sm:$0xff]
      %v1522 = vld [vmem:[#allocation4 + $0x60] sm:$0xff]
      %v1523 = vld [vmem:[#allocation4 + $0x68] sm:$0xff]
      %v1524 = vld [vmem:[#allocation4 + $0x70] sm:$0xff]
      %v1525 = vld [vmem:[#allocation4 + $0x78] sm:$0xff]
      %v1526 = vld [vmem:[#allocation4 + $0x80] sm:$0xff]
      %v1527 = vld [vmem:[#allocation4 + $0x88] sm:$0xff]
      %v1528 = vld [vmem:[#allocation4 + $0x90] sm:$0xff]
      %v1529 = vld [vmem:[#allocation4 + $0x98] sm:$0xff]
      %v1530 = vld [vmem:[#allocation4 + $0xa0] sm:$0xff]
      %v1531 = vld [vmem:[#allocation4 + $0xa8] sm:$0xff]
      %v1532 = vld [vmem:[#allocation4 + $0xb0] sm:$0xff]
      %v1533 = vld [vmem:[#allocation4 + $0xb8] sm:$0xff]
      %v1534 = vld [vmem:[#allocation4 + $0xc0] sm:$0xff]
      %v1535 = vld [vmem:[#allocation4 + $0xc8] sm:$0xff]
      %v1536 = vld [vmem:[#allocation4 + $0xd0] sm:$0xff]
      %v1537 = vld [vmem:[#allocation4 + $0xd8] sm:$0xff]
      %v1538 = vld [vmem:[#allocation4 + $0xe0] sm:$0xff]
      %v1539 = vld [vmem:[#allocation4 + $0xe8] sm:$0xff]
      %v1540 = vld [vmem:[#allocation4 + $0xf0] sm:$0xff]
      %v1541 = vld [vmem:[#allocation4 + $0xf8] sm:$0xff]
      %v1542 = vmul.f32 %v1095, %v1510
      %v1543 = vmul.f32 %v1097, %v1511
      %v1544 = vmul.f32 %v1099, %v1512
      %v1545 = vmul.f32 %v1101, %v1513
      %v1546 = vmul.f32 %v1103, %v1514
      %v1547 = vmul.f32 %v1105, %v1515
      %v1548 = vmul.f32 %v1107, %v1516
      %v1549 = vmul.f32 %v1109, %v1517
      %v1550 = vmul.f32 %v1111, %v1518
      %v1551 = vmul.f32 %v1113, %v1519
      %v1552 = vmul.f32 %v1115, %v1520
      %v1553 = vmul.f32 %v1117, %v1521
      %v1554 = vmul.f32 %v1119, %v1522
      %v1555 = vmul.f32 %v1121, %v1523
      %v1556 = vmul.f32 %v1123, %v1524
      %v1557 = vmul.f32 %v1125, %v1525
      %v1558 = vmul.f32 %v1127, %v1526
      %v1559 = vmul.f32 %v1129, %v1527
      %v1560 = vmul.f32 %v1131, %v1528
      %v1561 = vmul.f32 %v1133, %v1529
      %v1562 = vmul.f32 %v1135, %v1530
      %v1563 = vmul.f32 %v1137, %v1531
      %v1564 = vmul.f32 %v1139, %v1532
      %v1565 = vmul.f32 %v1141, %v1533
      %v1566 = vmul.f32 %v1143, %v1534
      %v1567 = vmul.f32 %v1145, %v1535
      %v1568 = vmul.f32 %v1147, %v1536
      %v1569 = vmul.f32 %v1149, %v1537
      %v1570 = vmul.f32 %v1151, %v1538
      %v1571 = vmul.f32 %v1153, %v1539
      %v1572 = vmul.f32 %v1155, %v1540
      %v1573 = vmul.f32 %v1157, %v1541
      %v1574 = vadd.f32 %v1383, %v1385
      %1575 = vadd.xlane.f32.xlu0 %v1574
      %v1576 = vpop.xlane.xlu0 %1575
      %v1577 = vadd.f32 %v1387, %v1389
      %1578 = vadd.xlane.f32.xlu0 %v1577
      %v1579 = vpop.xlane.xlu0 %1578
      %v1580 = vadd.f32 %v1391, %v1393
      %1581 = vadd.xlane.f32.xlu0 %v1580
      %v1582 = vpop.xlane.xlu0 %1581
      %v1583 = vadd.f32 %v1395, %v1397
      %1584 = vadd.xlane.f32.xlu0 %v1583
      %v1585 = vpop.xlane.xlu0 %1584
      %v1586 = vadd.f32 %v1399, %v1401
      %1587 = vadd.xlane.f32.xlu0 %v1586
      %v1588 = vpop.xlane.xlu0 %1587
      %v1589 = vadd.f32 %v1403, %v1405
      %1590 = vadd.xlane.f32.xlu0 %v1589
      %v1591 = vpop.xlane.xlu0 %1590
      %v1592 = vadd.f32 %v1407, %v1409
      %1593 = vadd.xlane.f32.xlu0 %v1592
      %v1594 = vpop.xlane.xlu0 %1593
      %v1595 = vadd.f32 %v1411, %v1413
      %1596 = vadd.xlane.f32.xlu0 %v1595
      %v1597 = vpop.xlane.xlu0 %1596
      %v1598 = vadd.f32 %v1415, %v1417
      %1599 = vadd.xlane.f32.xlu0 %v1598
      %v1600 = vpop.xlane.xlu0 %1599
      %v1601 = vadd.f32 %v1419, %v1421
      %1602 = vadd.xlane.f32.xlu0 %v1601
      %v1603 = vpop.xlane.xlu0 %1602
      %v1604 = vadd.f32 %v1423, %v1425
      %1605 = vadd.xlane.f32.xlu0 %v1604
      %v1606 = vpop.xlane.xlu0 %1605
      %v1607 = vadd.f32 %v1427, %v1429
      %1608 = vadd.xlane.f32.xlu0 %v1607
      %v1609 = vpop.xlane.xlu0 %1608
      %v1610 = vadd.f32 %v1431, %v1433
      %1611 = vadd.xlane.f32.xlu0 %v1610
      %v1612 = vpop.xlane.xlu0 %1611
      %v1613 = vadd.f32 %v1435, %v1437
      %1614 = vadd.xlane.f32.xlu0 %v1613
      %v1615 = vpop.xlane.xlu0 %1614
      %v1616 = vadd.f32 %v1439, %v1441
      %1617 = vadd.xlane.f32.xlu0 %v1616
      %v1618 = vpop.xlane.xlu0 %1617
      %v1619 = vadd.f32 %v1443, %v1445
      %1620 = vadd.xlane.f32.xlu0 %v1619
      %v1621 = vpop.xlane.xlu0 %1620
      %v1622 = vadd.f32 %v1447, %v1449
      %1623 = vadd.xlane.f32.xlu0 %v1622
      %v1624 = vpop.xlane.xlu0 %1623
      %v1625 = vadd.f32 %v1451, %v1453
      %1626 = vadd.xlane.f32.xlu0 %v1625
      %v1627 = vpop.xlane.xlu0 %1626
      %v1628 = vadd.f32 %v1455, %v1457
      %1629 = vadd.xlane.f32.xlu0 %v1628
      %v1630 = vpop.xlane.xlu0 %1629
      %v1631 = vadd.f32 %v1459, %v1461
      %1632 = vadd.xlane.f32.xlu0 %v1631
      %v1633 = vpop.xlane.xlu0 %1632
      %v1634 = vadd.f32 %v1463, %v1465
      %1635 = vadd.xlane.f32.xlu0 %v1634
      %v1636 = vpop.xlane.xlu0 %1635
      %v1637 = vadd.f32 %v1467, %v1469
      %1638 = vadd.xlane.f32.xlu0 %v1637
      %v1639 = vpop.xlane.xlu0 %1638
      %v1640 = vadd.f32 %v1471, %v1473
      %1641 = vadd.xlane.f32.xlu0 %v1640
      %v1642 = vpop.xlane.xlu0 %1641
      %v1643 = vadd.f32 %v1475, %v1477
      %1644 = vadd.xlane.f32.xlu0 %v1643
      %v1645 = vpop.xlane.xlu0 %1644
      %v1646 = vadd.f32 %v1479, %v1481
      %1647 = vadd.xlane.f32.xlu0 %v1646
      %v1648 = vpop.xlane.xlu0 %1647
      %v1649 = vadd.f32 %v1483, %v1485
      %1650 = vadd.xlane.f32.xlu0 %v1649
      %v1651 = vpop.xlane.xlu0 %1650
      %v1652 = vadd.f32 %v1487, %v1489
      %1653 = vadd.xlane.f32.xlu0 %v1652
      %v1654 = vpop.xlane.xlu0 %1653
      %v1655 = vadd.f32 %v1491, %v1493
      %1656 = vadd.xlane.f32.xlu0 %v1655
      %v1657 = vpop.xlane.xlu0 %1656
      %v1658 = vadd.f32 %v1495, %v1497
      %1659 = vadd.xlane.f32.xlu0 %v1658
      %v1660 = vpop.xlane.xlu0 %1659
      %v1661 = vadd.f32 %v1499, %v1501
      %1662 = vadd.xlane.f32.xlu0 %v1661
      %v1663 = vpop.xlane.xlu0 %1662
      %v1664 = vadd.f32 %v1503, %v1505
      %1665 = vadd.xlane.f32.xlu0 %v1664
      %v1666 = vpop.xlane.xlu0 %1665
      %v1667 = vadd.f32 %v1507, %v1509
      %1668 = vadd.xlane.f32.xlu0 %v1667
      %v1669 = vpop.xlane.xlu0 %1668
      %v1670 = vadd.f32 %v1542, %v1576
      %v1671 = vadd.f32 %v1543, %v1579
      %v1672 = vadd.f32 %v1544, %v1582
      %v1673 = vadd.f32 %v1545, %v1585
      %v1674 = vadd.f32 %v1546, %v1588
      %v1675 = vadd.f32 %v1547, %v1591
      %v1676 = vadd.f32 %v1548, %v1594
      %v1677 = vadd.f32 %v1549, %v1597
      %v1678 = vadd.f32 %v1550, %v1600
      %v1679 = vadd.f32 %v1551, %v1603
      %v1680 = vadd.f32 %v1552, %v1606
      %v1681 = vadd.f32 %v1553, %v1609
      %v1682 = vadd.f32 %v1554, %v1612
      %v1683 = vadd.f32 %v1555, %v1615
      %v1684 = vadd.f32 %v1556, %v1618
      %v1685 = vadd.f32 %v1557, %v1621
      %v1686 = vadd.f32 %v1558, %v1624
      %v1687 = vadd.f32 %v1559, %v1627
      %v1688 = vadd.f32 %v1560, %v1630
      %v1689 = vadd.f32 %v1561, %v1633
      %v1690 = vadd.f32 %v1562, %v1636
      %v1691 = vadd.f32 %v1563, %v1639
      %v1692 = vadd.f32 %v1564, %v1642
      %v1693 = vadd.f32 %v1565, %v1645
      %v1694 = vadd.f32 %v1566, %v1648
      %v1695 = vadd.f32 %v1567, %v1651
      %v1696 = vadd.f32 %v1568, %v1654
      %v1697 = vadd.f32 %v1569, %v1657
      %v1698 = vadd.f32 %v1570, %v1660
      %v1699 = vadd.f32 %v1571, %v1663
      %v1700 = vadd.f32 %v1572, %v1666
      %v1701 = vadd.f32 %v1573, %v1669
      %vm1702 = vcmask 7168
      %1703 = vst.msk [vmem:[#allocation4] sm:$0xff] %vm1702, %v1670
      %1704 = vst.msk [vmem:[#allocation4 + $0x8] sm:$0xff] %vm1702, %v1671
      %1705 = vst.msk [vmem:[#allocation4 + $0x10] sm:$0xff] %vm1702, %v1672
      %1706 = vst.msk [vmem:[#allocation4 + $0x18] sm:$0xff] %vm1702, %v1673
      %1707 = vst.msk [vmem:[#allocation4 + $0x20] sm:$0xff] %vm1702, %v1674
      %1708 = vst.msk [vmem:[#allocation4 + $0x28] sm:$0xff] %vm1702, %v1675
      %1709 = vst.msk [vmem:[#allocation4 + $0x30] sm:$0xff] %vm1702, %v1676
      %1710 = vst.msk [vmem:[#allocation4 + $0x38] sm:$0xff] %vm1702, %v1677
      %1711 = vst.msk [vmem:[#allocation4 + $0x40] sm:$0xff] %vm1702, %v1678
      %1712 = vst.msk [vmem:[#allocation4 + $0x48] sm:$0xff] %vm1702, %v1679
      %1713 = vst.msk [vmem:[#allocation4 + $0x50] sm:$0xff] %vm1702, %v1680
      %1714 = vst.msk [vmem:[#allocation4 + $0x58] sm:$0xff] %vm1702, %v1681
      %1715 = vst.msk [vmem:[#allocation4 + $0x60] sm:$0xff] %vm1702, %v1682
      %1716 = vst.msk [vmem:[#allocation4 + $0x68] sm:$0xff] %vm1702, %v1683
      %1717 = vst.msk [vmem:[#allocation4 + $0x70] sm:$0xff] %vm1702, %v1684
      %1718 = vst.msk [vmem:[#allocation4 + $0x78] sm:$0xff] %vm1702, %v1685
      %1719 = vst.msk [vmem:[#allocation4 + $0x80] sm:$0xff] %vm1702, %v1686
      %1720 = vst.msk [vmem:[#allocation4 + $0x88] sm:$0xff] %vm1702, %v1687
      %1721 = vst.msk [vmem:[#allocation4 + $0x90] sm:$0xff] %vm1702, %v1688
      %1722 = vst.msk [vmem:[#allocation4 + $0x98] sm:$0xff] %vm1702, %v1689
      %1723 = vst.msk [vmem:[#allocation4 + $0xa0] sm:$0xff] %vm1702, %v1690
      %1724 = vst.msk [vmem:[#allocation4 + $0xa8] sm:$0xff] %vm1702, %v1691
      %1725 = vst.msk [vmem:[#allocation4 + $0xb0] sm:$0xff] %vm1702, %v1692
      %1726 = vst.msk [vmem:[#allocation4 + $0xb8] sm:$0xff] %vm1702, %v1693
      %1727 = vst.msk [vmem:[#allocation4 + $0xc0] sm:$0xff] %vm1702, %v1694
      %1728 = vst.msk [vmem:[#allocation4 + $0xc8] sm:$0xff] %vm1702, %v1695
      %1729 = vst.msk [vmem:[#allocation4 + $0xd0] sm:$0xff] %vm1702, %v1696
      %1730 = vst.msk [vmem:[#allocation4 + $0xd8] sm:$0xff] %vm1702, %v1697
      %1731 = vst.msk [vmem:[#allocation4 + $0xe0] sm:$0xff] %vm1702, %v1698
      %1732 = vst.msk [vmem:[#allocation4 + $0xe8] sm:$0xff] %vm1702, %v1699
      %1733 = vst.msk [vmem:[#allocation4 + $0xf0] sm:$0xff] %vm1702, %v1700
      %1734 = vst.msk [vmem:[#allocation4 + $0xf8] sm:$0xff] %vm1702, %v1701
      %v1735 = vld [vmem:[#allocation5] sm:$0xff]
      %v1736 = vld [vmem:[#allocation5 + $0x8] sm:$0xff]
      %v1737 = vld [vmem:[#allocation5 + $0x10] sm:$0xff]
      %v1738 = vld [vmem:[#allocation5 + $0x18] sm:$0xff]
      %v1739 = vld [vmem:[#allocation5 + $0x20] sm:$0xff]
      %v1740 = vld [vmem:[#allocation5 + $0x28] sm:$0xff]
      %v1741 = vld [vmem:[#allocation5 + $0x30] sm:$0xff]
      %v1742 = vld [vmem:[#allocation5 + $0x38] sm:$0xff]
      %v1743 = vld [vmem:[#allocation5 + $0x40] sm:$0xff]
      %v1744 = vld [vmem:[#allocation5 + $0x48] sm:$0xff]
      %v1745 = vld [vmem:[#allocation5 + $0x50] sm:$0xff]
      %v1746 = vld [vmem:[#allocation5 + $0x58] sm:$0xff]
      %v1747 = vld [vmem:[#allocation5 + $0x60] sm:$0xff]
      %v1748 = vld [vmem:[#allocation5 + $0x68] sm:$0xff]
      %v1749 = vld [vmem:[#allocation5 + $0x70] sm:$0xff]
      %v1750 = vld [vmem:[#allocation5 + $0x78] sm:$0xff]
      %v1751 = vld [vmem:[#allocation5 + $0x80] sm:$0xff]
      %v1752 = vld [vmem:[#allocation5 + $0x88] sm:$0xff]
      %v1753 = vld [vmem:[#allocation5 + $0x90] sm:$0xff]
      %v1754 = vld [vmem:[#allocation5 + $0x98] sm:$0xff]
      %v1755 = vld [vmem:[#allocation5 + $0xa0] sm:$0xff]
      %v1756 = vld [vmem:[#allocation5 + $0xa8] sm:$0xff]
      %v1757 = vld [vmem:[#allocation5 + $0xb0] sm:$0xff]
      %v1758 = vld [vmem:[#allocation5 + $0xb8] sm:$0xff]
      %v1759 = vld [vmem:[#allocation5 + $0xc0] sm:$0xff]
      %v1760 = vld [vmem:[#allocation5 + $0xc8] sm:$0xff]
      %v1761 = vld [vmem:[#allocation5 + $0xd0] sm:$0xff]
      %v1762 = vld [vmem:[#allocation5 + $0xd8] sm:$0xff]
      %v1763 = vld [vmem:[#allocation5 + $0xe0] sm:$0xff]
      %v1764 = vld [vmem:[#allocation5 + $0xe8] sm:$0xff]
      %v1765 = vld [vmem:[#allocation5 + $0xf0] sm:$0xff]
      %v1766 = vld [vmem:[#allocation5 + $0xf8] sm:$0xff]
      %1768 = vset.pattern.permute.xlu0 0
      %1769 = vperm.xlu0 %1768, %v1095
      %v1770 = vpop.permute.xlu0 %1769
      %1773 = vset.pattern.permute.xlu0 0
      %1774 = vperm.xlu0 %1773, %v1097
      %v1775 = vpop.permute.xlu0 %1774
      %1778 = vset.pattern.permute.xlu0 0
      %1779 = vperm.xlu0 %1778, %v1099
      %v1780 = vpop.permute.xlu0 %1779
      %1783 = vset.pattern.permute.xlu0 0
      %1784 = vperm.xlu0 %1783, %v1101
      %v1785 = vpop.permute.xlu0 %1784
      %1788 = vset.pattern.permute.xlu0 0
      %1789 = vperm.xlu0 %1788, %v1103
      %v1790 = vpop.permute.xlu0 %1789
      %1793 = vset.pattern.permute.xlu0 0
      %1794 = vperm.xlu0 %1793, %v1105
      %v1795 = vpop.permute.xlu0 %1794
      %1798 = vset.pattern.permute.xlu0 0
      %1799 = vperm.xlu0 %1798, %v1107
      %v1800 = vpop.permute.xlu0 %1799
      %1803 = vset.pattern.permute.xlu0 0
      %1804 = vperm.xlu0 %1803, %v1109
      %v1805 = vpop.permute.xlu0 %1804
      %1808 = vset.pattern.permute.xlu0 0
      %1809 = vperm.xlu0 %1808, %v1111
      %v1810 = vpop.permute.xlu0 %1809
      %1813 = vset.pattern.permute.xlu0 0
      %1814 = vperm.xlu0 %1813, %v1113
      %v1815 = vpop.permute.xlu0 %1814
      %1818 = vset.pattern.permute.xlu0 0
      %1819 = vperm.xlu0 %1818, %v1115
      %v1820 = vpop.permute.xlu0 %1819
      %1823 = vset.pattern.permute.xlu0 0
      %1824 = vperm.xlu0 %1823, %v1117
      %v1825 = vpop.permute.xlu0 %1824
      %1828 = vset.pattern.permute.xlu0 0
      %1829 = vperm.xlu0 %1828, %v1119
      %v1830 = vpop.permute.xlu0 %1829
      %1833 = vset.pattern.permute.xlu0 0
      %1834 = vperm.xlu0 %1833, %v1121
      %v1835 = vpop.permute.xlu0 %1834
      %1838 = vset.pattern.permute.xlu0 0
      %1839 = vperm.xlu0 %1838, %v1123
      %v1840 = vpop.permute.xlu0 %1839
      %1843 = vset.pattern.permute.xlu0 0
      %1844 = vperm.xlu0 %1843, %v1125
      %v1845 = vpop.permute.xlu0 %1844
      %1848 = vset.pattern.permute.xlu0 0
      %1849 = vperm.xlu0 %1848, %v1127
      %v1850 = vpop.permute.xlu0 %1849
      %1853 = vset.pattern.permute.xlu0 0
      %1854 = vperm.xlu0 %1853, %v1129
      %v1855 = vpop.permute.xlu0 %1854
      %1858 = vset.pattern.permute.xlu0 0
      %1859 = vperm.xlu0 %1858, %v1131
      %v1860 = vpop.permute.xlu0 %1859
      %1863 = vset.pattern.permute.xlu0 0
      %1864 = vperm.xlu0 %1863, %v1133
      %v1865 = vpop.permute.xlu0 %1864
      %1868 = vset.pattern.permute.xlu0 0
      %1869 = vperm.xlu0 %1868, %v1135
      %v1870 = vpop.permute.xlu0 %1869
      %1873 = vset.pattern.permute.xlu0 0
      %1874 = vperm.xlu0 %1873, %v1137
      %v1875 = vpop.permute.xlu0 %1874
      %1878 = vset.pattern.permute.xlu0 0
      %1879 = vperm.xlu0 %1878, %v1139
      %v1880 = vpop.permute.xlu0 %1879
      %1883 = vset.pattern.permute.xlu0 0
      %1884 = vperm.xlu0 %1883, %v1141
      %v1885 = vpop.permute.xlu0 %1884
      %1888 = vset.pattern.permute.xlu0 0
      %1889 = vperm.xlu0 %1888, %v1143
      %v1890 = vpop.permute.xlu0 %1889
      %1893 = vset.pattern.permute.xlu0 0
      %1894 = vperm.xlu0 %1893, %v1145
      %v1895 = vpop.permute.xlu0 %1894
      %1898 = vset.pattern.permute.xlu0 0
      %1899 = vperm.xlu0 %1898, %v1147
      %v1900 = vpop.permute.xlu0 %1899
      %1903 = vset.pattern.permute.xlu0 0
      %1904 = vperm.xlu0 %1903, %v1149
      %v1905 = vpop.permute.xlu0 %1904
      %1908 = vset.pattern.permute.xlu0 0
      %1909 = vperm.xlu0 %1908, %v1151
      %v1910 = vpop.permute.xlu0 %1909
      %1913 = vset.pattern.permute.xlu0 0
      %1914 = vperm.xlu0 %1913, %v1153
      %v1915 = vpop.permute.xlu0 %1914
      %1918 = vset.pattern.permute.xlu0 0
      %1919 = vperm.xlu0 %1918, %v1155
      %v1920 = vpop.permute.xlu0 %1919
      %1923 = vset.pattern.permute.xlu0 0
      %1924 = vperm.xlu0 %1923, %v1157
      %v1925 = vpop.permute.xlu0 %1924
      %v1927 = vmul.f32 %v1770, %v1735
      %v1928 = vmul.f32 %v1775, %v1736
      %v1929 = vmul.f32 %v1780, %v1737
      %v1930 = vmul.f32 %v1785, %v1738
      %v1931 = vmul.f32 %v1790, %v1739
      %v1932 = vmul.f32 %v1795, %v1740
      %v1933 = vmul.f32 %v1800, %v1741
      %v1934 = vmul.f32 %v1805, %v1742
      %v1935 = vmul.f32 %v1810, %v1743
      %v1936 = vmul.f32 %v1815, %v1744
      %v1937 = vmul.f32 %v1820, %v1745
      %v1938 = vmul.f32 %v1825, %v1746
      %v1939 = vmul.f32 %v1830, %v1747
      %v1940 = vmul.f32 %v1835, %v1748
      %v1941 = vmul.f32 %v1840, %v1749
      %v1942 = vmul.f32 %v1845, %v1750
      %v1943 = vmul.f32 %v1850, %v1751
      %v1944 = vmul.f32 %v1855, %v1752
      %v1945 = vmul.f32 %v1860, %v1753
      %v1946 = vmul.f32 %v1865, %v1754
      %v1947 = vmul.f32 %v1870, %v1755
      %v1948 = vmul.f32 %v1875, %v1756
      %v1949 = vmul.f32 %v1880, %v1757
      %v1950 = vmul.f32 %v1885, %v1758
      %v1951 = vmul.f32 %v1890, %v1759
      %v1952 = vmul.f32 %v1895, %v1760
      %v1953 = vmul.f32 %v1900, %v1761
      %v1954 = vmul.f32 %v1905, %v1762
      %v1955 = vmul.f32 %v1910, %v1763
      %v1956 = vmul.f32 %v1915, %v1764
      %v1957 = vmul.f32 %v1920, %v1765
      %v1958 = vmul.f32 %v1925, %v1766
      %v1959 = vpack.c.bf16 %v1387, %v1383
      %v1960 = vpack.c.bf16 %v1389, %v1385
      %v1961 = vpack.c.bf16 %v1395, %v1391
      %v1962 = vpack.c.bf16 %v1397, %v1393
      %v1963 = vpack.c.bf16 %v1403, %v1399
      %v1964 = vpack.c.bf16 %v1405, %v1401
      %v1965 = vpack.c.bf16 %v1411, %v1407
      %v1966 = vpack.c.bf16 %v1413, %v1409
      %v1967 = vpack.c.bf16 %v1419, %v1415
      %v1968 = vpack.c.bf16 %v1421, %v1417
      %v1969 = vpack.c.bf16 %v1427, %v1423
      %v1970 = vpack.c.bf16 %v1429, %v1425
      %v1971 = vpack.c.bf16 %v1435, %v1431
      %v1972 = vpack.c.bf16 %v1437, %v1433
      %v1973 = vpack.c.bf16 %v1443, %v1439
      %v1974 = vpack.c.bf16 %v1445, %v1441
      %v1975 = vpack.c.bf16 %v1451, %v1447
      %v1976 = vpack.c.bf16 %v1453, %v1449
      %v1977 = vpack.c.bf16 %v1459, %v1455
      %v1978 = vpack.c.bf16 %v1461, %v1457
      %v1979 = vpack.c.bf16 %v1467, %v1463
      %v1980 = vpack.c.bf16 %v1469, %v1465
      %v1981 = vpack.c.bf16 %v1475, %v1471
      %v1982 = vpack.c.bf16 %v1477, %v1473
      %v1983 = vpack.c.bf16 %v1483, %v1479
      %v1984 = vpack.c.bf16 %v1485, %v1481
      %v1985 = vpack.c.bf16 %v1491, %v1487
      %v1986 = vpack.c.bf16 %v1493, %v1489
      %v1987 = vpack.c.bf16 %v1499, %v1495
      %v1988 = vpack.c.bf16 %v1501, %v1497
      %v1989 = vpack.c.bf16 %v1507, %v1503
      %v1990 = vpack.c.bf16 %v1509, %v1505
      %1991 = vmatprep.subr.bf16.mxu0 0
      %1992 = vmatpush1.bf16.msra.mxu0 %v503
      %1993 = vmatprep.subr.bf16.mxu0 0
      %1994 = vmatpush1.bf16.msra.mxu0 %v504
      %1995 = vmatprep.subr.bf16.mxu0 0
      %1996 = vmatpush1.bf16.msra.mxu0 %v505
      %1997 = vmatprep.subr.bf16.mxu0 0
      %1998 = vmatpush1.bf16.msra.mxu0 %v506
      %1999 = vmatprep.subr.bf16.mxu0 0
      %2000 = vmatpush1.bf16.msra.mxu0 %v507
      %2001 = vmatprep.subr.bf16.mxu0 0
      %2002 = vmatpush1.bf16.msra.mxu0 %v508
      %2003 = vmatprep.subr.bf16.mxu0 0
      %2004 = vmatpush1.bf16.msra.mxu0 %v509
      %2005 = vmatprep.subr.bf16.mxu0 0
      %2006 = vmatpush1.bf16.msra.mxu0 %v510
      %2007 = vmatprep.subr.bf16.mxu0 0
      %2008 = vmatpush1.bf16.msra.mxu0 %v511
      %2009 = vmatprep.subr.bf16.mxu0 0
      %2010 = vmatpush1.bf16.msra.mxu0 %v512
      %2011 = vmatprep.subr.bf16.mxu0 0
      %2012 = vmatpush1.bf16.msra.mxu0 %v513
      %2013 = vmatprep.subr.bf16.mxu0 0
      %2014 = vmatpush1.bf16.msra.mxu0 %v514
      %2015 = vmatprep.subr.bf16.mxu0 0
      %2016 = vmatpush1.bf16.msra.mxu0 %v515
      %2017 = vmatprep.subr.bf16.mxu0 0
      %2018 = vmatpush1.bf16.msra.mxu0 %v516
      %2019 = vmatprep.subr.bf16.mxu0 0
      %2020 = vmatpush1.bf16.msra.mxu0 %v517
      %2021 = vmatprep.subr.bf16.mxu0 0
      %2022 = vmatpush1.bf16.msra.mxu0 %v518
      %2023 = vmatprep.mubr.bf16.mxu0 %v1960
      %2024 = vmatmul.mubr.bf16.gmra.mrb[0].mxu0 %v1959
      %v2025 = vpop.f32.mrb[0].mxu0
      %v2026 = vadd.f32 0.0, %v2025
      %v2027 = vpop.f32.mrb[0].mxu0
      %v2028 = vpop.f32.mrb[0].mxu0
      %v2029 = vadd.f32 0.0, %v2028
      %v2030 = vpop.f32.mrb[0].mxu0
      %2031 = vmatprep.mubr.bf16.mxu0 %v1962
      %2032 = vmatmul.mubr.bf16.gmra.mrb[0].mxu0 %v1961
      %v2033 = vpop.f32.mrb[0].mxu0
      %v2034 = vadd.f32 0.0, %v2033
      %v2035 = vpop.f32.mrb[0].mxu0
      %v2036 = vpop.f32.mrb[0].mxu0
      %v2037 = vadd.f32 0.0, %v2036
      %v2038 = vpop.f32.mrb[0].mxu0
      %2039 = vmatprep.mubr.bf16.mxu0 %v1964
      %2040 = vmatmul.mubr.bf16.gmra.mrb[0].mxu0 %v1963
      %v2041 = vpop.f32.mrb[0].mxu0
      %v2042 = vadd.f32 0.0, %v2041
      %v2043 = vpop.f32.mrb[0].mxu0
      %v2044 = vpop.f32.mrb[0].mxu0
      %v2045 = vadd.f32 0.0, %v2044
      %v2046 = vpop.f32.mrb[0].mxu0
      %2047 = vmatprep.mubr.bf16.mxu0 %v1966
      %2048 = vmatmul.mubr.bf16.gmra.mrb[0].mxu0 %v1965
      %v2049 = vpop.f32.mrb[0].mxu0
      %v2050 = vadd.f32 0.0, %v2049
      %v2051 = vpop.f32.mrb[0].mxu0
      %v2052 = vpop.f32.mrb[0].mxu0
      %v2053 = vadd.f32 0.0, %v2052
      %v2054 = vpop.f32.mrb[0].mxu0
      %2055 = vmatprep.mubr.bf16.mxu0 %v1968
      %2056 = vmatmul.mubr.bf16.gmra.mrb[0].mxu0 %v1967
      %v2057 = vpop.f32.mrb[0].mxu0
      %v2058 = vadd.f32 0.0, %v2057
      %v2059 = vpop.f32.mrb[0].mxu0
      %v2060 = vpop.f32.mrb[0].mxu0
      %v2061 = vadd.f32 0.0, %v2060
      %v2062 = vpop.f32.mrb[0].mxu0
      %2063 = vmatprep.mubr.bf16.mxu0 %v1970
      %2064 = vmatmul.mubr.bf16.gmra.mrb[0].mxu0 %v1969
      %v2065 = vpop.f32.mrb[0].mxu0
      %v2066 = vadd.f32 0.0, %v2065
      %v2067 = vpop.f32.mrb[0].mxu0
      %v2068 = vpop.f32.mrb[0].mxu0
      %v2069 = vadd.f32 0.0, %v2068
      %v2070 = vpop.f32.mrb[0].mxu0
      %2071 = vmatprep.mubr.bf16.mxu0 %v1972
      %2072 = vmatmul.mubr.bf16.gmra.mrb[0].mxu0 %v1971
      %v2073 = vpop.f32.mrb[0].mxu0
      %v2074 = vadd.f32 0.0, %v2073
      %v2075 = vpop.f32.mrb[0].mxu0
      %v2076 = vpop.f32.mrb[0].mxu0
      %v2077 = vadd.f32 0.0, %v2076
      %v2078 = vpop.f32.mrb[0].mxu0
      %2079 = vmatprep.mubr.bf16.mxu0 %v1974
      %2080 = vmatmul.mubr.bf16.gmra.mrb[0].mxu0 %v1973
      %v2081 = vpop.f32.mrb[0].mxu0
      %v2082 = vadd.f32 0.0, %v2081
      %v2083 = vpop.f32.mrb[0].mxu0
      %v2084 = vpop.f32.mrb[0].mxu0
      %v2085 = vadd.f32 0.0, %v2084
      %v2086 = vpop.f32.mrb[0].mxu0
      %2087 = vmatprep.mubr.bf16.mxu0 %v1976
      %2088 = vmatmul.mubr.bf16.gmra.mrb[0].mxu0 %v1975
      %v2089 = vpop.f32.mrb[0].mxu0
      %v2090 = vadd.f32 0.0, %v2089
      %v2091 = vpop.f32.mrb[0].mxu0
      %v2092 = vpop.f32.mrb[0].mxu0
      %v2093 = vadd.f32 0.0, %v2092
      %v2094 = vpop.f32.mrb[0].mxu0
      %2095 = vmatprep.mubr.bf16.mxu0 %v1978
      %2096 = vmatmul.mubr.bf16.gmra.mrb[0].mxu0 %v1977
      %v2097 = vpop.f32.mrb[0].mxu0
      %v2098 = vadd.f32 0.0, %v2097
      %v2099 = vpop.f32.mrb[0].mxu0
      %v2100 = vpop.f32.mrb[0].mxu0
      %v2101 = vadd.f32 0.0, %v2100
      %v2102 = vpop.f32.mrb[0].mxu0
      %2103 = vmatprep.mubr.bf16.mxu0 %v1980
      %2104 = vmatmul.mubr.bf16.gmra.mrb[0].mxu0 %v1979
      %v2105 = vpop.f32.mrb[0].mxu0
      %v2106 = vadd.f32 0.0, %v2105
      %v2107 = vpop.f32.mrb[0].mxu0
      %v2108 = vpop.f32.mrb[0].mxu0
      %v2109 = vadd.f32 0.0, %v2108
      %v2110 = vpop.f32.mrb[0].mxu0
      %2111 = vmatprep.mubr.bf16.mxu0 %v1982
      %2112 = vmatmul.mubr.bf16.gmra.mrb[0].mxu0 %v1981
      %v2113 = vpop.f32.mrb[0].mxu0
      %v2114 = vadd.f32 0.0, %v2113
      %v2115 = vpop.f32.mrb[0].mxu0
      %v2116 = vpop.f32.mrb[0].mxu0
      %v2117 = vadd.f32 0.0, %v2116
      %v2118 = vpop.f32.mrb[0].mxu0
      %2119 = vmatprep.mubr.bf16.mxu0 %v1984
      %2120 = vmatmul.mubr.bf16.gmra.mrb[0].mxu0 %v1983
      %v2121 = vpop.f32.mrb[0].mxu0
      %v2122 = vadd.f32 0.0, %v2121
      %v2123 = vpop.f32.mrb[0].mxu0
      %v2124 = vpop.f32.mrb[0].mxu0
      %v2125 = vadd.f32 0.0, %v2124
      %v2126 = vpop.f32.mrb[0].mxu0
      %2127 = vmatprep.mubr.bf16.mxu0 %v1986
      %2128 = vmatmul.mubr.bf16.gmra.mrb[0].mxu0 %v1985
      %v2129 = vpop.f32.mrb[0].mxu0
      %v2130 = vadd.f32 0.0, %v2129
      %v2131 = vpop.f32.mrb[0].mxu0
      %v2132 = vpop.f32.mrb[0].mxu0
      %v2133 = vadd.f32 0.0, %v2132
      %v2134 = vpop.f32.mrb[0].mxu0
      %2135 = vmatprep.mubr.bf16.mxu0 %v1988
      %2136 = vmatmul.mubr.bf16.gmra.mrb[0].mxu0 %v1987
      %v2137 = vpop.f32.mrb[0].mxu0
      %v2138 = vadd.f32 0.0, %v2137
      %v2139 = vpop.f32.mrb[0].mxu0
      %v2140 = vpop.f32.mrb[0].mxu0
      %v2141 = vadd.f32 0.0, %v2140
      %v2142 = vpop.f32.mrb[0].mxu0
      %2143 = vmatprep.mubr.bf16.mxu0 %v1990
      %2144 = vmatmul.mubr.bf16.gmra.mrb[0].mxu0 %v1989
      %v2145 = vpop.f32.mrb[0].mxu0
      %v2146 = vadd.f32 0.0, %v2145
      %v2147 = vpop.f32.mrb[0].mxu0
      %v2148 = vpop.f32.mrb[0].mxu0
      %v2149 = vadd.f32 0.0, %v2148
      %v2150 = vpop.f32.mrb[0].mxu0
      %2151 = vdwg.mxu0
      %v2152 = vadd.f32 %v1927, %v2026
      %v2153 = vadd.f32 %v1928, %v2029
      %v2154 = vadd.f32 %v1929, %v2034
      %v2155 = vadd.f32 %v1930, %v2037
      %v2156 = vadd.f32 %v1931, %v2042
      %v2157 = vadd.f32 %v1932, %v2045
      %v2158 = vadd.f32 %v1933, %v2050
      %v2159 = vadd.f32 %v1934, %v2053
      %v2160 = vadd.f32 %v1935, %v2058
      %v2161 = vadd.f32 %v1936, %v2061
      %v2162 = vadd.f32 %v1937, %v2066
      %v2163 = vadd.f32 %v1938, %v2069
      %v2164 = vadd.f32 %v1939, %v2074
      %v2165 = vadd.f32 %v1940, %v2077
      %v2166 = vadd.f32 %v1941, %v2082
      %v2167 = vadd.f32 %v1942, %v2085
      %v2168 = vadd.f32 %v1943, %v2090
      %v2169 = vadd.f32 %v1944, %v2093
      %v2170 = vadd.f32 %v1945, %v2098
      %v2171 = vadd.f32 %v1946, %v2101
      %v2172 = vadd.f32 %v1947, %v2106
      %v2173 = vadd.f32 %v1948, %v2109
      %v2174 = vadd.f32 %v1949, %v2114
      %v2175 = vadd.f32 %v1950, %v2117
      %v2176 = vadd.f32 %v1951, %v2122
      %v2177 = vadd.f32 %v1952, %v2125
      %v2178 = vadd.f32 %v1953, %v2130
      %v2179 = vadd.f32 %v1954, %v2133
      %v2180 = vadd.f32 %v1955, %v2138
      %v2181 = vadd.f32 %v1956, %v2141
      %v2182 = vadd.f32 %v1957, %v2146
      %v2183 = vadd.f32 %v1958, %v2149
      %2184 = vst.msk [vmem:[#allocation5] sm:$0xff] %vm535, %v2152
      %2185 = vst.msk [vmem:[#allocation5 + $0x8] sm:$0xff] %vm535, %v2153
      %2186 = vst.msk [vmem:[#allocation5 + $0x10] sm:$0xff] %vm535, %v2154
      %2187 = vst.msk [vmem:[#allocation5 + $0x18] sm:$0xff] %vm535, %v2155
      %2188 = vst.msk [vmem:[#allocation5 + $0x20] sm:$0xff] %vm535, %v2156
      %2189 = vst.msk [vmem:[#allocation5 + $0x28] sm:$0xff] %vm535, %v2157
      %2190 = vst.msk [vmem:[#allocation5 + $0x30] sm:$0xff] %vm535, %v2158
      %2191 = vst.msk [vmem:[#allocation5 + $0x38] sm:$0xff] %vm535, %v2159
      %2192 = vst.msk [vmem:[#allocation5 + $0x40] sm:$0xff] %vm535, %v2160
      %2193 = vst.msk [vmem:[#allocation5 + $0x48] sm:$0xff] %vm535, %v2161
      %2194 = vst.msk [vmem:[#allocation5 + $0x50] sm:$0xff] %vm535, %v2162
      %2195 = vst.msk [vmem:[#allocation5 + $0x58] sm:$0xff] %vm535, %v2163
      %2196 = vst.msk [vmem:[#allocation5 + $0x60] sm:$0xff] %vm535, %v2164
      %2197 = vst.msk [vmem:[#allocation5 + $0x68] sm:$0xff] %vm535, %v2165
      %2198 = vst.msk [vmem:[#allocation5 + $0x70] sm:$0xff] %vm535, %v2166
      %2199 = vst.msk [vmem:[#allocation5 + $0x78] sm:$0xff] %vm535, %v2167
      %2200 = vst.msk [vmem:[#allocation5 + $0x80] sm:$0xff] %vm535, %v2168
      %2201 = vst.msk [vmem:[#allocation5 + $0x88] sm:$0xff] %vm535, %v2169
      %2202 = vst.msk [vmem:[#allocation5 + $0x90] sm:$0xff] %vm535, %v2170
      %2203 = vst.msk [vmem:[#allocation5 + $0x98] sm:$0xff] %vm535, %v2171
      %2204 = vst.msk [vmem:[#allocation5 + $0xa0] sm:$0xff] %vm535, %v2172
      %2205 = vst.msk [vmem:[#allocation5 + $0xa8] sm:$0xff] %vm535, %v2173
      %2206 = vst.msk [vmem:[#allocation5 + $0xb0] sm:$0xff] %vm535, %v2174
      %2207 = vst.msk [vmem:[#allocation5 + $0xb8] sm:$0xff] %vm535, %v2175
      %2208 = vst.msk [vmem:[#allocation5 + $0xc0] sm:$0xff] %vm535, %v2176
      %2209 = vst.msk [vmem:[#allocation5 + $0xc8] sm:$0xff] %vm535, %v2177
      %2210 = vst.msk [vmem:[#allocation5 + $0xd0] sm:$0xff] %vm535, %v2178
      %2211 = vst.msk [vmem:[#allocation5 + $0xd8] sm:$0xff] %vm535, %v2179
      %2212 = vst.msk [vmem:[#allocation5 + $0xe0] sm:$0xff] %vm535, %v2180
      %2213 = vst.msk [vmem:[#allocation5 + $0xe8] sm:$0xff] %vm535, %v2181
      %2214 = vst.msk [vmem:[#allocation5 + $0xf0] sm:$0xff] %vm535, %v2182
      %2215 = vst.msk [vmem:[#allocation5 + $0xf8] sm:$0xff] %vm535, %v2183
      %2216 = vst.msk [vmem:[#allocation3] sm:$0xff] %vm1702, %v1030
      %2217 = vst.msk [vmem:[#allocation3 + $0x8] sm:$0xff] %vm1702, %v1031
      %2218 = vst.msk [vmem:[#allocation3 + $0x10] sm:$0xff] %vm1702, %v1032
      %2219 = vst.msk [vmem:[#allocation3 + $0x18] sm:$0xff] %vm1702, %v1033
      %2220 = vst.msk [vmem:[#allocation3 + $0x20] sm:$0xff] %vm1702, %v1034
      %2221 = vst.msk [vmem:[#allocation3 + $0x28] sm:$0xff] %vm1702, %v1035
      %2222 = vst.msk [vmem:[#allocation3 + $0x30] sm:$0xff] %vm1702, %v1036
      %2223 = vst.msk [vmem:[#allocation3 + $0x38] sm:$0xff] %vm1702, %v1037
      %2224 = vst.msk [vmem:[#allocation3 + $0x40] sm:$0xff] %vm1702, %v1038
      %2225 = vst.msk [vmem:[#allocation3 + $0x48] sm:$0xff] %vm1702, %v1039
      %2226 = vst.msk [vmem:[#allocation3 + $0x50] sm:$0xff] %vm1702, %v1040
      %2227 = vst.msk [vmem:[#allocation3 + $0x58] sm:$0xff] %vm1702, %v1041
      %2228 = vst.msk [vmem:[#allocation3 + $0x60] sm:$0xff] %vm1702, %v1042
      %2229 = vst.msk [vmem:[#allocation3 + $0x68] sm:$0xff] %vm1702, %v1043
      %2230 = vst.msk [vmem:[#allocation3 + $0x70] sm:$0xff] %vm1702, %v1044
      %2231 = vst.msk [vmem:[#allocation3 + $0x78] sm:$0xff] %vm1702, %v1045
      %2232 = vst.msk [vmem:[#allocation3 + $0x80] sm:$0xff] %vm1702, %v1046
      %2233 = vst.msk [vmem:[#allocation3 + $0x88] sm:$0xff] %vm1702, %v1047
      %2234 = vst.msk [vmem:[#allocation3 + $0x90] sm:$0xff] %vm1702, %v1048
      %2235 = vst.msk [vmem:[#allocation3 + $0x98] sm:$0xff] %vm1702, %v1049
      %2236 = vst.msk [vmem:[#allocation3 + $0xa0] sm:$0xff] %vm1702, %v1050
      %2237 = vst.msk [vmem:[#allocation3 + $0xa8] sm:$0xff] %vm1702, %v1051
      %2238 = vst.msk [vmem:[#allocation3 + $0xb0] sm:$0xff] %vm1702, %v1052
      %2239 = vst.msk [vmem:[#allocation3 + $0xb8] sm:$0xff] %vm1702, %v1053
      %2240 = vst.msk [vmem:[#allocation3 + $0xc0] sm:$0xff] %vm1702, %v1054
      %2241 = vst.msk [vmem:[#allocation3 + $0xc8] sm:$0xff] %vm1702, %v1055
      %2242 = vst.msk [vmem:[#allocation3 + $0xd0] sm:$0xff] %vm1702, %v1056
      %2243 = vst.msk [vmem:[#allocation3 + $0xd8] sm:$0xff] %vm1702, %v1057
      %2244 = vst.msk [vmem:[#allocation3 + $0xe0] sm:$0xff] %vm1702, %v1058
      %2245 = vst.msk [vmem:[#allocation3 + $0xe8] sm:$0xff] %vm1702, %v1059
      %2246 = vst.msk [vmem:[#allocation3 + $0xf0] sm:$0xff] %vm1702, %v1060
      %2247 = vst.msk [vmem:[#allocation3 + $0xf8] sm:$0xff] %vm1702, %v1061
      // Predicated region
      $region45: #{model_forward.1} parent=35 // pred_check
        %p2248 = pneg %p267
      $region46: #{model_forward.1} parent=35 // pred_check_branch
        %2250 = sbr.rel (%p2248) target = $region48
      $region47: #{model_forward.1} parent=35 // pred_region
        %v2251 = vld [vmem:[#allocation5] sm:$0xff]
        %v2252 = vld [vmem:[#allocation5 + $0x8] sm:$0xff]
        %v2253 = vld [vmem:[#allocation5 + $0x10] sm:$0xff]
        %v2254 = vld [vmem:[#allocation5 + $0x18] sm:$0xff]
        %v2255 = vld [vmem:[#allocation5 + $0x20] sm:$0xff]
        %v2256 = vld [vmem:[#allocation5 + $0x28] sm:$0xff]
        %v2257 = vld [vmem:[#allocation5 + $0x30] sm:$0xff]
        %v2258 = vld [vmem:[#allocation5 + $0x38] sm:$0xff]
        %v2259 = vld [vmem:[#allocation5 + $0x40] sm:$0xff]
        %v2260 = vld [vmem:[#allocation5 + $0x48] sm:$0xff]
        %v2261 = vld [vmem:[#allocation5 + $0x50] sm:$0xff]
        %v2262 = vld [vmem:[#allocation5 + $0x58] sm:$0xff]
        %v2263 = vld [vmem:[#allocation5 + $0x60] sm:$0xff]
        %v2264 = vld [vmem:[#allocation5 + $0x68] sm:$0xff]
        %v2265 = vld [vmem:[#allocation5 + $0x70] sm:$0xff]
        %v2266 = vld [vmem:[#allocation5 + $0x78] sm:$0xff]
        %v2267 = vld [vmem:[#allocation5 + $0x80] sm:$0xff]
        %v2268 = vld [vmem:[#allocation5 + $0x88] sm:$0xff]
        %v2269 = vld [vmem:[#allocation5 + $0x90] sm:$0xff]
        %v2270 = vld [vmem:[#allocation5 + $0x98] sm:$0xff]
        %v2271 = vld [vmem:[#allocation5 + $0xa0] sm:$0xff]
        %v2272 = vld [vmem:[#allocation5 + $0xa8] sm:$0xff]
        %v2273 = vld [vmem:[#allocation5 + $0xb0] sm:$0xff]
        %v2274 = vld [vmem:[#allocation5 + $0xb8] sm:$0xff]
        %v2275 = vld [vmem:[#allocation5 + $0xc0] sm:$0xff]
        %v2276 = vld [vmem:[#allocation5 + $0xc8] sm:$0xff]
        %v2277 = vld [vmem:[#allocation5 + $0xd0] sm:$0xff]
        %v2278 = vld [vmem:[#allocation5 + $0xd8] sm:$0xff]
        %v2279 = vld [vmem:[#allocation5 + $0xe0] sm:$0xff]
        %v2280 = vld [vmem:[#allocation5 + $0xe8] sm:$0xff]
        %v2281 = vld [vmem:[#allocation5 + $0xf0] sm:$0xff]
        %v2282 = vld [vmem:[#allocation5 + $0xf8] sm:$0xff]
        %v2283 = vld [vmem:[#allocation4] sm:$0xff]
        %v2284 = vld [vmem:[#allocation4 + $0x8] sm:$0xff]
        %v2285 = vld [vmem:[#allocation4 + $0x10] sm:$0xff]
        %v2286 = vld [vmem:[#allocation4 + $0x18] sm:$0xff]
        %v2287 = vld [vmem:[#allocation4 + $0x20] sm:$0xff]
        %v2288 = vld [vmem:[#allocation4 + $0x28] sm:$0xff]
        %v2289 = vld [vmem:[#allocation4 + $0x30] sm:$0xff]
        %v2290 = vld [vmem:[#allocation4 + $0x38] sm:$0xff]
        %v2291 = vld [vmem:[#allocation4 + $0x40] sm:$0xff]
        %v2292 = vld [vmem:[#allocation4 + $0x48] sm:$0xff]
        %v2293 = vld [vmem:[#allocation4 + $0x50] sm:$0xff]
        %v2294 = vld [vmem:[#allocation4 + $0x58] sm:$0xff]
        %v2295 = vld [vmem:[#allocation4 + $0x60] sm:$0xff]
        %v2296 = vld [vmem:[#allocation4 + $0x68] sm:$0xff]
        %v2297 = vld [vmem:[#allocation4 + $0x70] sm:$0xff]
        %v2298 = vld [vmem:[#allocation4 + $0x78] sm:$0xff]
        %v2299 = vld [vmem:[#allocation4 + $0x80] sm:$0xff]
        %v2300 = vld [vmem:[#allocation4 + $0x88] sm:$0xff]
        %v2301 = vld [vmem:[#allocation4 + $0x90] sm:$0xff]
        %v2302 = vld [vmem:[#allocation4 + $0x98] sm:$0xff]
        %v2303 = vld [vmem:[#allocation4 + $0xa0] sm:$0xff]
        %v2304 = vld [vmem:[#allocation4 + $0xa8] sm:$0xff]
        %v2305 = vld [vmem:[#allocation4 + $0xb0] sm:$0xff]
        %v2306 = vld [vmem:[#allocation4 + $0xb8] sm:$0xff]
        %v2307 = vld [vmem:[#allocation4 + $0xc0] sm:$0xff]
        %v2308 = vld [vmem:[#allocation4 + $0xc8] sm:$0xff]
        %v2309 = vld [vmem:[#allocation4 + $0xd0] sm:$0xff]
        %v2310 = vld [vmem:[#allocation4 + $0xd8] sm:$0xff]
        %v2311 = vld [vmem:[#allocation4 + $0xe0] sm:$0xff]
        %v2312 = vld [vmem:[#allocation4 + $0xe8] sm:$0xff]
        %v2313 = vld [vmem:[#allocation4 + $0xf0] sm:$0xff]
        %v2314 = vld [vmem:[#allocation4 + $0xf8] sm:$0xff]
        %v2315 = vrcp.pop %v2283
        %v2316 = vrcp.pop %v2284
        %v2317 = vrcp.pop %v2285
        %v2318 = vrcp.pop %v2286
        %v2319 = vrcp.pop %v2287
        %v2320 = vrcp.pop %v2288
        %v2321 = vrcp.pop %v2289
        %v2322 = vrcp.pop %v2290
        %v2323 = vrcp.pop %v2291
        %v2324 = vrcp.pop %v2292
        %v2325 = vrcp.pop %v2293
        %v2326 = vrcp.pop %v2294
        %v2327 = vrcp.pop %v2295
        %v2328 = vrcp.pop %v2296
        %v2329 = vrcp.pop %v2297
        %v2330 = vrcp.pop %v2298
        %v2331 = vrcp.pop %v2299
        %v2332 = vrcp.pop %v2300
        %v2333 = vrcp.pop %v2301
        %v2334 = vrcp.pop %v2302
        %v2335 = vrcp.pop %v2303
        %v2336 = vrcp.pop %v2304
        %v2337 = vrcp.pop %v2305
        %v2338 = vrcp.pop %v2306
        %v2339 = vrcp.pop %v2307
        %v2340 = vrcp.pop %v2308
        %v2341 = vrcp.pop %v2309
        %v2342 = vrcp.pop %v2310
        %v2343 = vrcp.pop %v2311
        %v2344 = vrcp.pop %v2312
        %v2345 = vrcp.pop %v2313
        %v2346 = vrcp.pop %v2314
        %2348 = vset.pattern.permute.xlu0 0
        %2349 = vperm.xlu0 %2348, %v2315
        %v2350 = vpop.permute.xlu0 %2349
        %2353 = vset.pattern.permute.xlu0 0
        %2354 = vperm.xlu0 %2353, %v2316
        %v2355 = vpop.permute.xlu0 %2354
        %2358 = vset.pattern.permute.xlu0 0
        %2359 = vperm.xlu0 %2358, %v2317
        %v2360 = vpop.permute.xlu0 %2359
        %2363 = vset.pattern.permute.xlu0 0
        %2364 = vperm.xlu0 %2363, %v2318
        %v2365 = vpop.permute.xlu0 %2364
        %2368 = vset.pattern.permute.xlu0 0
        %2369 = vperm.xlu0 %2368, %v2319
        %v2370 = vpop.permute.xlu0 %2369
        %2373 = vset.pattern.permute.xlu0 0
        %2374 = vperm.xlu0 %2373, %v2320
        %v2375 = vpop.permute.xlu0 %2374
        %2378 = vset.pattern.permute.xlu0 0
        %2379 = vperm.xlu0 %2378, %v2321
        %v2380 = vpop.permute.xlu0 %2379
        %2383 = vset.pattern.permute.xlu0 0
        %2384 = vperm.xlu0 %2383, %v2322
        %v2385 = vpop.permute.xlu0 %2384
        %2388 = vset.pattern.permute.xlu0 0
        %2389 = vperm.xlu0 %2388, %v2323
        %v2390 = vpop.permute.xlu0 %2389
        %2393 = vset.pattern.permute.xlu0 0
        %2394 = vperm.xlu0 %2393, %v2324
        %v2395 = vpop.permute.xlu0 %2394
        %2398 = vset.pattern.permute.xlu0 0
        %2399 = vperm.xlu0 %2398, %v2325
        %v2400 = vpop.permute.xlu0 %2399
        %2403 = vset.pattern.permute.xlu0 0
        %2404 = vperm.xlu0 %2403, %v2326
        %v2405 = vpop.permute.xlu0 %2404
        %2408 = vset.pattern.permute.xlu0 0
        %2409 = vperm.xlu0 %2408, %v2327
        %v2410 = vpop.permute.xlu0 %2409
        %2413 = vset.pattern.permute.xlu0 0
        %2414 = vperm.xlu0 %2413, %v2328
        %v2415 = vpop.permute.xlu0 %2414
        %2418 = vset.pattern.permute.xlu0 0
        %2419 = vperm.xlu0 %2418, %v2329
        %v2420 = vpop.permute.xlu0 %2419
        %2423 = vset.pattern.permute.xlu0 0
        %2424 = vperm.xlu0 %2423, %v2330
        %v2425 = vpop.permute.xlu0 %2424
        %2428 = vset.pattern.permute.xlu0 0
        %2429 = vperm.xlu0 %2428, %v2331
        %v2430 = vpop.permute.xlu0 %2429
        %2433 = vset.pattern.permute.xlu0 0
        %2434 = vperm.xlu0 %2433, %v2332
        %v2435 = vpop.permute.xlu0 %2434
        %2438 = vset.pattern.permute.xlu0 0
        %2439 = vperm.xlu0 %2438, %v2333
        %v2440 = vpop.permute.xlu0 %2439
        %2443 = vset.pattern.permute.xlu0 0
        %2444 = vperm.xlu0 %2443, %v2334
        %v2445 = vpop.permute.xlu0 %2444
        %2448 = vset.pattern.permute.xlu0 0
        %2449 = vperm.xlu0 %2448, %v2335
        %v2450 = vpop.permute.xlu0 %2449
        %2453 = vset.pattern.permute.xlu0 0
        %2454 = vperm.xlu0 %2453, %v2336
        %v2455 = vpop.permute.xlu0 %2454
        %2458 = vset.pattern.permute.xlu0 0
        %2459 = vperm.xlu0 %2458, %v2337
        %v2460 = vpop.permute.xlu0 %2459
        %2463 = vset.pattern.permute.xlu0 0
        %2464 = vperm.xlu0 %2463, %v2338
        %v2465 = vpop.permute.xlu0 %2464
        %2468 = vset.pattern.permute.xlu0 0
        %2469 = vperm.xlu0 %2468, %v2339
        %v2470 = vpop.permute.xlu0 %2469
        %2473 = vset.pattern.permute.xlu0 0
        %2474 = vperm.xlu0 %2473, %v2340
        %v2475 = vpop.permute.xlu0 %2474
        %2478 = vset.pattern.permute.xlu0 0
        %2479 = vperm.xlu0 %2478, %v2341
        %v2480 = vpop.permute.xlu0 %2479
        %2483 = vset.pattern.permute.xlu0 0
        %2484 = vperm.xlu0 %2483, %v2342
        %v2485 = vpop.permute.xlu0 %2484
        %2488 = vset.pattern.permute.xlu0 0
        %2489 = vperm.xlu0 %2488, %v2343
        %v2490 = vpop.permute.xlu0 %2489
        %2493 = vset.pattern.permute.xlu0 0
        %2494 = vperm.xlu0 %2493, %v2344
        %v2495 = vpop.permute.xlu0 %2494
        %2498 = vset.pattern.permute.xlu0 0
        %2499 = vperm.xlu0 %2498, %v2345
        %v2500 = vpop.permute.xlu0 %2499
        %2503 = vset.pattern.permute.xlu0 0
        %2504 = vperm.xlu0 %2503, %v2346
        %v2505 = vpop.permute.xlu0 %2504
        %v2507 = vmul.f32 %v2251, %v2350
        %v2508 = vmul.f32 %v2252, %v2355
        %v2509 = vmul.f32 %v2253, %v2360
        %v2510 = vmul.f32 %v2254, %v2365
        %v2511 = vmul.f32 %v2255, %v2370
        %v2512 = vmul.f32 %v2256, %v2375
        %v2513 = vmul.f32 %v2257, %v2380
        %v2514 = vmul.f32 %v2258, %v2385
        %v2515 = vmul.f32 %v2259, %v2390
        %v2516 = vmul.f32 %v2260, %v2395
        %v2517 = vmul.f32 %v2261, %v2400
        %v2518 = vmul.f32 %v2262, %v2405
        %v2519 = vmul.f32 %v2263, %v2410
        %v2520 = vmul.f32 %v2264, %v2415
        %v2521 = vmul.f32 %v2265, %v2420
        %v2522 = vmul.f32 %v2266, %v2425
        %v2523 = vmul.f32 %v2267, %v2430
        %v2524 = vmul.f32 %v2268, %v2435
        %v2525 = vmul.f32 %v2269, %v2440
        %v2526 = vmul.f32 %v2270, %v2445
        %v2527 = vmul.f32 %v2271, %v2450
        %v2528 = vmul.f32 %v2272, %v2455
        %v2529 = vmul.f32 %v2273, %v2460
        %v2530 = vmul.f32 %v2274, %v2465
        %v2531 = vmul.f32 %v2275, %v2470
        %v2532 = vmul.f32 %v2276, %v2475
        %v2533 = vmul.f32 %v2277, %v2480
        %v2534 = vmul.f32 %v2278, %v2485
        %v2535 = vmul.f32 %v2279, %v2490
        %v2536 = vmul.f32 %v2280, %v2495
        %v2537 = vmul.f32 %v2281, %v2500
        %v2538 = vmul.f32 %v2282, %v2505
        %v2539 = vld [vmem:[%s250] sm:$0xff]
        %v2540 = vld [vmem:[%s250 + $0x8] sm:$0xff]
        %v2541 = vld [vmem:[%s250 + $0x10] sm:$0xff]
        %v2542 = vld [vmem:[%s250 + $0x18] sm:$0xff]
        %v2543 = vld [vmem:[%s250 + $0x20] sm:$0xff]
        %v2544 = vld [vmem:[%s250 + $0x28] sm:$0xff]
        %v2545 = vld [vmem:[%s250 + $0x30] sm:$0xff]
        %v2546 = vld [vmem:[%s250 + $0x38] sm:$0xff]
        %v2547 = vld [vmem:[%s250 + $0x40] sm:$0xff]
        %v2548 = vld [vmem:[%s250 + $0x48] sm:$0xff]
        %v2549 = vld [vmem:[%s250 + $0x50] sm:$0xff]
        %v2550 = vld [vmem:[%s250 + $0x58] sm:$0xff]
        %v2551 = vld [vmem:[%s250 + $0x60] sm:$0xff]
        %v2552 = vld [vmem:[%s250 + $0x68] sm:$0xff]
        %v2553 = vld [vmem:[%s250 + $0x70] sm:$0xff]
        %v2554 = vld [vmem:[%s250 + $0x78] sm:$0xff]
        %v2555 = vld [vmem:[%s250 + $0x80] sm:$0xff]
        %v2556 = vld [vmem:[%s250 + $0x88] sm:$0xff]
        %v2557 = vld [vmem:[%s250 + $0x90] sm:$0xff]
        %v2558 = vld [vmem:[%s250 + $0x98] sm:$0xff]
        %v2559 = vld [vmem:[%s250 + $0xa0] sm:$0xff]
        %v2560 = vld [vmem:[%s250 + $0xa8] sm:$0xff]
        %v2561 = vld [vmem:[%s250 + $0xb0] sm:$0xff]
        %v2562 = vld [vmem:[%s250 + $0xb8] sm:$0xff]
        %v2563 = vld [vmem:[%s250 + $0xc0] sm:$0xff]
        %v2564 = vld [vmem:[%s250 + $0xc8] sm:$0xff]
        %v2565 = vld [vmem:[%s250 + $0xd0] sm:$0xff]
        %v2566 = vld [vmem:[%s250 + $0xd8] sm:$0xff]
        %v2567 = vld [vmem:[%s250 + $0xe0] sm:$0xff]
        %v2568 = vld [vmem:[%s250 + $0xe8] sm:$0xff]
        %v2569 = vld [vmem:[%s250 + $0xf0] sm:$0xff]
        %v2570 = vld [vmem:[%s250 + $0xf8] sm:$0xff]
        %v2571 = vadd.f32 %v2539, %v2507
        %v2572 = vadd.f32 %v2540, %v2508
        %v2573 = vadd.f32 %v2541, %v2509
        %v2574 = vadd.f32 %v2542, %v2510
        %v2575 = vadd.f32 %v2543, %v2511
        %v2576 = vadd.f32 %v2544, %v2512
        %v2577 = vadd.f32 %v2545, %v2513
        %v2578 = vadd.f32 %v2546, %v2514
        %v2579 = vadd.f32 %v2547, %v2515
        %v2580 = vadd.f32 %v2548, %v2516
        %v2581 = vadd.f32 %v2549, %v2517
        %v2582 = vadd.f32 %v2550, %v2518
        %v2583 = vadd.f32 %v2551, %v2519
        %v2584 = vadd.f32 %v2552, %v2520
        %v2585 = vadd.f32 %v2553, %v2521
        %v2586 = vadd.f32 %v2554, %v2522
        %v2587 = vadd.f32 %v2555, %v2523
        %v2588 = vadd.f32 %v2556, %v2524
        %v2589 = vadd.f32 %v2557, %v2525
        %v2590 = vadd.f32 %v2558, %v2526
        %v2591 = vadd.f32 %v2559, %v2527
        %v2592 = vadd.f32 %v2560, %v2528
        %v2593 = vadd.f32 %v2561, %v2529
        %v2594 = vadd.f32 %v2562, %v2530
        %v2595 = vadd.f32 %v2563, %v2531
        %v2596 = vadd.f32 %v2564, %v2532
        %v2597 = vadd.f32 %v2565, %v2533
        %v2598 = vadd.f32 %v2566, %v2534
        %v2599 = vadd.f32 %v2567, %v2535
        %v2600 = vadd.f32 %v2568, %v2536
        %v2601 = vadd.f32 %v2569, %v2537
        %v2602 = vadd.f32 %v2570, %v2538
        %v2603 = vsel %vm535, %v2571, 0.0
        %2604 = vadd.xlane.f32.xlu0 %v2603
        %v2605 = vpop.xlane.xlu0 %2604
        %v2606 = vsel %vm535, %v2572, 0.0
        %2607 = vadd.xlane.f32.xlu0 %v2606
        %v2608 = vpop.xlane.xlu0 %2607
        %v2609 = vsel %vm535, %v2573, 0.0
        %2610 = vadd.xlane.f32.xlu0 %v2609
        %v2611 = vpop.xlane.xlu0 %2610
        %v2612 = vsel %vm535, %v2574, 0.0
        %2613 = vadd.xlane.f32.xlu0 %v2612
        %v2614 = vpop.xlane.xlu0 %2613
        %v2615 = vsel %vm535, %v2575, 0.0
        %2616 = vadd.xlane.f32.xlu0 %v2615
        %v2617 = vpop.xlane.xlu0 %2616
        %v2618 = vsel %vm535, %v2576, 0.0
        %2619 = vadd.xlane.f32.xlu0 %v2618
        %v2620 = vpop.xlane.xlu0 %2619
        %v2621 = vsel %vm535, %v2577, 0.0
        %2622 = vadd.xlane.f32.xlu0 %v2621
        %v2623 = vpop.xlane.xlu0 %2622
        %v2624 = vsel %vm535, %v2578, 0.0
        %2625 = vadd.xlane.f32.xlu0 %v2624
        %v2626 = vpop.xlane.xlu0 %2625
        %v2627 = vsel %vm535, %v2579, 0.0
        %2628 = vadd.xlane.f32.xlu0 %v2627
        %v2629 = vpop.xlane.xlu0 %2628
        %v2630 = vsel %vm535, %v2580, 0.0
        %2631 = vadd.xlane.f32.xlu0 %v2630
        %v2632 = vpop.xlane.xlu0 %2631
        %v2633 = vsel %vm535, %v2581, 0.0
        %2634 = vadd.xlane.f32.xlu0 %v2633
        %v2635 = vpop.xlane.xlu0 %2634
        %v2636 = vsel %vm535, %v2582, 0.0
        %2637 = vadd.xlane.f32.xlu0 %v2636
        %v2638 = vpop.xlane.xlu0 %2637
        %v2639 = vsel %vm535, %v2583, 0.0
        %2640 = vadd.xlane.f32.xlu0 %v2639
        %v2641 = vpop.xlane.xlu0 %2640
        %v2642 = vsel %vm535, %v2584, 0.0
        %2643 = vadd.xlane.f32.xlu0 %v2642
        %v2644 = vpop.xlane.xlu0 %2643
        %v2645 = vsel %vm535, %v2585, 0.0
        %2646 = vadd.xlane.f32.xlu0 %v2645
        %v2647 = vpop.xlane.xlu0 %2646
        %v2648 = vsel %vm535, %v2586, 0.0
        %2649 = vadd.xlane.f32.xlu0 %v2648
        %v2650 = vpop.xlane.xlu0 %2649
        %v2651 = vsel %vm535, %v2587, 0.0
        %2652 = vadd.xlane.f32.xlu0 %v2651
        %v2653 = vpop.xlane.xlu0 %2652
        %v2654 = vsel %vm535, %v2588, 0.0
        %2655 = vadd.xlane.f32.xlu0 %v2654
        %v2656 = vpop.xlane.xlu0 %2655
        %v2657 = vsel %vm535, %v2589, 0.0
        %2658 = vadd.xlane.f32.xlu0 %v2657
        %v2659 = vpop.xlane.xlu0 %2658
        %v2660 = vsel %vm535, %v2590, 0.0
        %2661 = vadd.xlane.f32.xlu0 %v2660
        %v2662 = vpop.xlane.xlu0 %2661
        %v2663 = vsel %vm535, %v2591, 0.0
        %2664 = vadd.xlane.f32.xlu0 %v2663
        %v2665 = vpop.xlane.xlu0 %2664
        %v2666 = vsel %vm535, %v2592, 0.0
        %2667 = vadd.xlane.f32.xlu0 %v2666
        %v2668 = vpop.xlane.xlu0 %2667
        %v2669 = vsel %vm535, %v2593, 0.0
        %2670 = vadd.xlane.f32.xlu0 %v2669
        %v2671 = vpop.xlane.xlu0 %2670
        %v2672 = vsel %vm535, %v2594, 0.0
        %2673 = vadd.xlane.f32.xlu0 %v2672
        %v2674 = vpop.xlane.xlu0 %2673
        %v2675 = vsel %vm535, %v2595, 0.0
        %2676 = vadd.xlane.f32.xlu0 %v2675
        %v2677 = vpop.xlane.xlu0 %2676
        %v2678 = vsel %vm535, %v2596, 0.0
        %2679 = vadd.xlane.f32.xlu0 %v2678
        %v2680 = vpop.xlane.xlu0 %2679
        %v2681 = vsel %vm535, %v2597, 0.0
        %2682 = vadd.xlane.f32.xlu0 %v2681
        %v2683 = vpop.xlane.xlu0 %2682
        %v2684 = vsel %vm535, %v2598, 0.0
        %2685 = vadd.xlane.f32.xlu0 %v2684
        %v2686 = vpop.xlane.xlu0 %2685
        %v2687 = vsel %vm535, %v2599, 0.0
        %2688 = vadd.xlane.f32.xlu0 %v2687
        %v2689 = vpop.xlane.xlu0 %2688
        %v2690 = vsel %vm535, %v2600, 0.0
        %2691 = vadd.xlane.f32.xlu0 %v2690
        %v2692 = vpop.xlane.xlu0 %2691
        %v2693 = vsel %vm535, %v2601, 0.0
        %2694 = vadd.xlane.f32.xlu0 %v2693
        %v2695 = vpop.xlane.xlu0 %2694
        %v2696 = vsel %vm535, %v2602, 0.0
        %2697 = vadd.xlane.f32.xlu0 %v2696
        %v2698 = vpop.xlane.xlu0 %2697
        %v2699 = vrcp.pop 32.0
        %v2700 = vmul.f32 %v2605, %v2699
        %v2701 = vmul.f32 %v2608, %v2699
        %v2702 = vmul.f32 %v2611, %v2699
        %v2703 = vmul.f32 %v2614, %v2699
        %v2704 = vmul.f32 %v2617, %v2699
        %v2705 = vmul.f32 %v2620, %v2699
        %v2706 = vmul.f32 %v2623, %v2699
        %v2707 = vmul.f32 %v2626, %v2699
        %v2708 = vmul.f32 %v2629, %v2699
        %v2709 = vmul.f32 %v2632, %v2699
        %v2710 = vmul.f32 %v2635, %v2699
        %v2711 = vmul.f32 %v2638, %v2699
        %v2712 = vmul.f32 %v2641, %v2699
        %v2713 = vmul.f32 %v2644, %v2699
        %v2714 = vmul.f32 %v2647, %v2699
        %v2715 = vmul.f32 %v2650, %v2699
        %v2716 = vmul.f32 %v2653, %v2699
        %v2717 = vmul.f32 %v2656, %v2699
        %v2718 = vmul.f32 %v2659, %v2699
        %v2719 = vmul.f32 %v2662, %v2699
        %v2720 = vmul.f32 %v2665, %v2699
        %v2721 = vmul.f32 %v2668, %v2699
        %v2722 = vmul.f32 %v2671, %v2699
        %v2723 = vmul.f32 %v2674, %v2699
        %v2724 = vmul.f32 %v2677, %v2699
        %v2725 = vmul.f32 %v2680, %v2699
        %v2726 = vmul.f32 %v2683, %v2699
        %v2727 = vmul.f32 %v2686, %v2699
        %v2728 = vmul.f32 %v2689, %v2699
        %v2729 = vmul.f32 %v2692, %v2699
        %v2730 = vmul.f32 %v2695, %v2699
        %v2731 = vmul.f32 %v2698, %v2699
        %v2732 = vsub.f32 %v2571, %v2700
        %v2733 = vsub.f32 %v2572, %v2701
        %v2734 = vsub.f32 %v2573, %v2702
        %v2735 = vsub.f32 %v2574, %v2703
        %v2736 = vsub.f32 %v2575, %v2704
        %v2737 = vsub.f32 %v2576, %v2705
        %v2738 = vsub.f32 %v2577, %v2706
        %v2739 = vsub.f32 %v2578, %v2707
        %v2740 = vsub.f32 %v2579, %v2708
        %v2741 = vsub.f32 %v2580, %v2709
        %v2742 = vsub.f32 %v2581, %v2710
        %v2743 = vsub.f32 %v2582, %v2711
        %v2744 = vsub.f32 %v2583, %v2712
        %v2745 = vsub.f32 %v2584, %v2713
        %v2746 = vsub.f32 %v2585, %v2714
        %v2747 = vsub.f32 %v2586, %v2715
        %v2748 = vsub.f32 %v2587, %v2716
        %v2749 = vsub.f32 %v2588, %v2717
        %v2750 = vsub.f32 %v2589, %v2718
        %v2751 = vsub.f32 %v2590, %v2719
        %v2752 = vsub.f32 %v2591, %v2720
        %v2753 = vsub.f32 %v2592, %v2721
        %v2754 = vsub.f32 %v2593, %v2722
        %v2755 = vsub.f32 %v2594, %v2723
        %v2756 = vsub.f32 %v2595, %v2724
        %v2757 = vsub.f32 %v2596, %v2725
        %v2758 = vsub.f32 %v2597, %v2726
        %v2759 = vsub.f32 %v2598, %v2727
        %v2760 = vsub.f32 %v2599, %v2728
        %v2761 = vsub.f32 %v2600, %v2729
        %v2762 = vsub.f32 %v2601, %v2730
        %v2763 = vsub.f32 %v2602, %v2731
        %v2764 = vmul.f32 %v2732, %v2732
        %v2765 = vmul.f32 %v2733, %v2733
        %v2766 = vmul.f32 %v2734, %v2734
        %v2767 = vmul.f32 %v2735, %v2735
        %v2768 = vmul.f32 %v2736, %v2736
        %v2769 = vmul.f32 %v2737, %v2737
        %v2770 = vmul.f32 %v2738, %v2738
        %v2771 = vmul.f32 %v2739, %v2739
        %v2772 = vmul.f32 %v2740, %v2740
        %v2773 = vmul.f32 %v2741, %v2741
        %v2774 = vmul.f32 %v2742, %v2742
        %v2775 = vmul.f32 %v2743, %v2743
        %v2776 = vmul.f32 %v2744, %v2744
        %v2777 = vmul.f32 %v2745, %v2745
        %v2778 = vmul.f32 %v2746, %v2746
        %v2779 = vmul.f32 %v2747, %v2747
        %v2780 = vmul.f32 %v2748, %v2748
        %v2781 = vmul.f32 %v2749, %v2749
        %v2782 = vmul.f32 %v2750, %v2750
        %v2783 = vmul.f32 %v2751, %v2751
        %v2784 = vmul.f32 %v2752, %v2752
        %v2785 = vmul.f32 %v2753, %v2753
        %v2786 = vmul.f32 %v2754, %v2754
        %v2787 = vmul.f32 %v2755, %v2755
        %v2788 = vmul.f32 %v2756, %v2756
        %v2789 = vmul.f32 %v2757, %v2757
        %v2790 = vmul.f32 %v2758, %v2758
        %v2791 = vmul.f32 %v2759, %v2759
        %v2792 = vmul.f32 %v2760, %v2760
        %v2793 = vmul.f32 %v2761, %v2761
        %v2794 = vmul.f32 %v2762, %v2762
        %v2795 = vmul.f32 %v2763, %v2763
        %v2796 = vsel %vm535, %v2764, 0.0
        %2797 = vadd.xlane.f32.xlu0 %v2796
        %v2798 = vpop.xlane.xlu0 %2797
        %v2799 = vsel %vm535, %v2765, 0.0
        %2800 = vadd.xlane.f32.xlu0 %v2799
        %v2801 = vpop.xlane.xlu0 %2800
        %v2802 = vsel %vm535, %v2766, 0.0
        %2803 = vadd.xlane.f32.xlu0 %v2802
        %v2804 = vpop.xlane.xlu0 %2803
        %v2805 = vsel %vm535, %v2767, 0.0
        %2806 = vadd.xlane.f32.xlu0 %v2805
        %v2807 = vpop.xlane.xlu0 %2806
        %v2808 = vsel %vm535, %v2768, 0.0
        %2809 = vadd.xlane.f32.xlu0 %v2808
        %v2810 = vpop.xlane.xlu0 %2809
        %v2811 = vsel %vm535, %v2769, 0.0
        %2812 = vadd.xlane.f32.xlu0 %v2811
        %v2813 = vpop.xlane.xlu0 %2812
        %v2814 = vsel %vm535, %v2770, 0.0
        %2815 = vadd.xlane.f32.xlu0 %v2814
        %v2816 = vpop.xlane.xlu0 %2815
        %v2817 = vsel %vm535, %v2771, 0.0
        %2818 = vadd.xlane.f32.xlu0 %v2817
        %v2819 = vpop.xlane.xlu0 %2818
        %v2820 = vsel %vm535, %v2772, 0.0
        %2821 = vadd.xlane.f32.xlu0 %v2820
        %v2822 = vpop.xlane.xlu0 %2821
        %v2823 = vsel %vm535, %v2773, 0.0
        %2824 = vadd.xlane.f32.xlu0 %v2823
        %v2825 = vpop.xlane.xlu0 %2824
        %v2826 = vsel %vm535, %v2774, 0.0
        %2827 = vadd.xlane.f32.xlu0 %v2826
        %v2828 = vpop.xlane.xlu0 %2827
        %v2829 = vsel %vm535, %v2775, 0.0
        %2830 = vadd.xlane.f32.xlu0 %v2829
        %v2831 = vpop.xlane.xlu0 %2830
        %v2832 = vsel %vm535, %v2776, 0.0
        %2833 = vadd.xlane.f32.xlu0 %v2832
        %v2834 = vpop.xlane.xlu0 %2833
        %v2835 = vsel %vm535, %v2777, 0.0
        %2836 = vadd.xlane.f32.xlu0 %v2835
        %v2837 = vpop.xlane.xlu0 %2836
        %v2838 = vsel %vm535, %v2778, 0.0
        %2839 = vadd.xlane.f32.xlu0 %v2838
        %v2840 = vpop.xlane.xlu0 %2839
        %v2841 = vsel %vm535, %v2779, 0.0
        %2842 = vadd.xlane.f32.xlu0 %v2841
        %v2843 = vpop.xlane.xlu0 %2842
        %v2844 = vsel %vm535, %v2780, 0.0
        %2845 = vadd.xlane.f32.xlu0 %v2844
        %v2846 = vpop.xlane.xlu0 %2845
        %v2847 = vsel %vm535, %v2781, 0.0
        %2848 = vadd.xlane.f32.xlu0 %v2847
        %v2849 = vpop.xlane.xlu0 %2848
        %v2850 = vsel %vm535, %v2782, 0.0
        %2851 = vadd.xlane.f32.xlu0 %v2850
        %v2852 = vpop.xlane.xlu0 %2851
        %v2853 = vsel %vm535, %v2783, 0.0
        %2854 = vadd.xlane.f32.xlu0 %v2853
        %v2855 = vpop.xlane.xlu0 %2854
        %v2856 = vsel %vm535, %v2784, 0.0
        %2857 = vadd.xlane.f32.xlu0 %v2856
        %v2858 = vpop.xlane.xlu0 %2857
        %v2859 = vsel %vm535, %v2785, 0.0
        %2860 = vadd.xlane.f32.xlu0 %v2859
        %v2861 = vpop.xlane.xlu0 %2860
        %v2862 = vsel %vm535, %v2786, 0.0
        %2863 = vadd.xlane.f32.xlu0 %v2862
        %v2864 = vpop.xlane.xlu0 %2863
        %v2865 = vsel %vm535, %v2787, 0.0
        %2866 = vadd.xlane.f32.xlu0 %v2865
        %v2867 = vpop.xlane.xlu0 %2866
        %v2868 = vsel %vm535, %v2788, 0.0
        %2869 = vadd.xlane.f32.xlu0 %v2868
        %v2870 = vpop.xlane.xlu0 %2869
        %v2871 = vsel %vm535, %v2789, 0.0
        %2872 = vadd.xlane.f32.xlu0 %v2871
        %v2873 = vpop.xlane.xlu0 %2872
        %v2874 = vsel %vm535, %v2790, 0.0
        %2875 = vadd.xlane.f32.xlu0 %v2874
        %v2876 = vpop.xlane.xlu0 %2875
        %v2877 = vsel %vm535, %v2791, 0.0
        %2878 = vadd.xlane.f32.xlu0 %v2877
        %v2879 = vpop.xlane.xlu0 %2878
        %v2880 = vsel %vm535, %v2792, 0.0
        %2881 = vadd.xlane.f32.xlu0 %v2880
        %v2882 = vpop.xlane.xlu0 %2881
        %v2883 = vsel %vm535, %v2793, 0.0
        %2884 = vadd.xlane.f32.xlu0 %v2883
        %v2885 = vpop.xlane.xlu0 %2884
        %v2886 = vsel %vm535, %v2794, 0.0
        %2887 = vadd.xlane.f32.xlu0 %v2886
        %v2888 = vpop.xlane.xlu0 %2887
        %v2889 = vsel %vm535, %v2795, 0.0
        %2890 = vadd.xlane.f32.xlu0 %v2889
        %v2891 = vpop.xlane.xlu0 %2890
        %v2892 = vmul.f32 %v2798, %v2699
        %v2893 = vmul.f32 %v2801, %v2699
        %v2894 = vmul.f32 %v2804, %v2699
        %v2895 = vmul.f32 %v2807, %v2699
        %v2896 = vmul.f32 %v2810, %v2699
        %v2897 = vmul.f32 %v2813, %v2699
        %v2898 = vmul.f32 %v2816, %v2699
        %v2899 = vmul.f32 %v2819, %v2699
        %v2900 = vmul.f32 %v2822, %v2699
        %v2901 = vmul.f32 %v2825, %v2699
        %v2902 = vmul.f32 %v2828, %v2699
        %v2903 = vmul.f32 %v2831, %v2699
        %v2904 = vmul.f32 %v2834, %v2699
        %v2905 = vmul.f32 %v2837, %v2699
        %v2906 = vmul.f32 %v2840, %v2699
        %v2907 = vmul.f32 %v2843, %v2699
        %v2908 = vmul.f32 %v2846, %v2699
        %v2909 = vmul.f32 %v2849, %v2699
        %v2910 = vmul.f32 %v2852, %v2699
        %v2911 = vmul.f32 %v2855, %v2699
        %v2912 = vmul.f32 %v2858, %v2699
        %v2913 = vmul.f32 %v2861, %v2699
        %v2914 = vmul.f32 %v2864, %v2699
        %v2915 = vmul.f32 %v2867, %v2699
        %v2916 = vmul.f32 %v2870, %v2699
        %v2917 = vmul.f32 %v2873, %v2699
        %v2918 = vmul.f32 %v2876, %v2699
        %v2919 = vmul.f32 %v2879, %v2699
        %v2920 = vmul.f32 %v2882, %v2699
        %v2921 = vmul.f32 %v2885, %v2699
        %v2922 = vmul.f32 %v2888, %v2699
        %v2923 = vmul.f32 %v2891, %v2699
        %v2924 = vadd.f32 %v2892, 1e-05
        %v2925 = vadd.f32 %v2893, 1e-05
        %v2926 = vadd.f32 %v2894, 1e-05
        %v2927 = vadd.f32 %v2895, 1e-05
        %v2928 = vadd.f32 %v2896, 1e-05
        %v2929 = vadd.f32 %v2897, 1e-05
        %v2930 = vadd.f32 %v2898, 1e-05
        %v2931 = vadd.f32 %v2899, 1e-05
        %v2932 = vadd.f32 %v2900, 1e-05
        %v2933 = vadd.f32 %v2901, 1e-05
        %v2934 = vadd.f32 %v2902, 1e-05
        %v2935 = vadd.f32 %v2903, 1e-05
        %v2936 = vadd.f32 %v2904, 1e-05
        %v2937 = vadd.f32 %v2905, 1e-05
        %v2938 = vadd.f32 %v2906, 1e-05
        %v2939 = vadd.f32 %v2907, 1e-05
        %v2940 = vadd.f32 %v2908, 1e-05
        %v2941 = vadd.f32 %v2909, 1e-05
        %v2942 = vadd.f32 %v2910, 1e-05
        %v2943 = vadd.f32 %v2911, 1e-05
        %v2944 = vadd.f32 %v2912, 1e-05
        %v2945 = vadd.f32 %v2913, 1e-05
        %v2946 = vadd.f32 %v2914, 1e-05
        %v2947 = vadd.f32 %v2915, 1e-05
        %v2948 = vadd.f32 %v2916, 1e-05
        %v2949 = vadd.f32 %v2917, 1e-05
        %v2950 = vadd.f32 %v2918, 1e-05
        %v2951 = vadd.f32 %v2919, 1e-05
        %v2952 = vadd.f32 %v2920, 1e-05
        %v2953 = vadd.f32 %v2921, 1e-05
        %v2954 = vadd.f32 %v2922, 1e-05
        %v2955 = vadd.f32 %v2923, 1e-05
        %v2956 = vrsqrt.pop %v2924
        %v2957 = vrsqrt.pop %v2925
        %v2958 = vrsqrt.pop %v2926
        %v2959 = vrsqrt.pop %v2927
        %v2960 = vrsqrt.pop %v2928
        %v2961 = vrsqrt.pop %v2929
        %v2962 = vrsqrt.pop %v2930
        %v2963 = vrsqrt.pop %v2931
        %v2964 = vrsqrt.pop %v2932
        %v2965 = vrsqrt.pop %v2933
        %v2966 = vrsqrt.pop %v2934
        %v2967 = vrsqrt.pop %v2935
        %v2968 = vrsqrt.pop %v2936
        %v2969 = vrsqrt.pop %v2937
        %v2970 = vrsqrt.pop %v2938
        %v2971 = vrsqrt.pop %v2939
        %v2972 = vrsqrt.pop %v2940
        %v2973 = vrsqrt.pop %v2941
        %v2974 = vrsqrt.pop %v2942
        %v2975 = vrsqrt.pop %v2943
        %v2976 = vrsqrt.pop %v2944
        %v2977 = vrsqrt.pop %v2945
        %v2978 = vrsqrt.pop %v2946
        %v2979 = vrsqrt.pop %v2947
        %v2980 = vrsqrt.pop %v2948
        %v2981 = vrsqrt.pop %v2949
        %v2982 = vrsqrt.pop %v2950
        %v2983 = vrsqrt.pop %v2951
        %v2984 = vrsqrt.pop %v2952
        %v2985 = vrsqrt.pop %v2953
        %v2986 = vrsqrt.pop %v2954
        %v2987 = vrsqrt.pop %v2955
        %v2988 = vmul.f32 %v2732, %v2956
        %v2989 = vmul.f32 %v2733, %v2957
        %v2990 = vmul.f32 %v2734, %v2958
        %v2991 = vmul.f32 %v2735, %v2959
        %v2992 = vmul.f32 %v2736, %v2960
        %v2993 = vmul.f32 %v2737, %v2961
        %v2994 = vmul.f32 %v2738, %v2962
        %v2995 = vmul.f32 %v2739, %v2963
        %v2996 = vmul.f32 %v2740, %v2964
        %v2997 = vmul.f32 %v2741, %v2965
        %v2998 = vmul.f32 %v2742, %v2966
        %v2999 = vmul.f32 %v2743, %v2967
        %v3000 = vmul.f32 %v2744, %v2968
        %v3001 = vmul.f32 %v2745, %v2969
        %v3002 = vmul.f32 %v2746, %v2970
        %v3003 = vmul.f32 %v2747, %v2971
        %v3004 = vmul.f32 %v2748, %v2972
        %v3005 = vmul.f32 %v2749, %v2973
        %v3006 = vmul.f32 %v2750, %v2974
        %v3007 = vmul.f32 %v2751, %v2975
        %v3008 = vmul.f32 %v2752, %v2976
        %v3009 = vmul.f32 %v2753, %v2977
        %v3010 = vmul.f32 %v2754, %v2978
        %v3011 = vmul.f32 %v2755, %v2979
        %v3012 = vmul.f32 %v2756, %v2980
        %v3013 = vmul.f32 %v2757, %v2981
        %v3014 = vmul.f32 %v2758, %v2982
        %v3015 = vmul.f32 %v2759, %v2983
        %v3016 = vmul.f32 %v2760, %v2984
        %v3017 = vmul.f32 %v2761, %v2985
        %v3018 = vmul.f32 %v2762, %v2986
        %v3019 = vmul.f32 %v2763, %v2987
        %v3020 = vld [vmem:[%s2] sm:$0x1]
        %v3022 = vlaneseq
        %v3023 = vshrl.u32 %v3022, 7
        %v3024 = vsub.s32 0, %v3023
        %v3025 = vrot.slane %v3020, %v3024
        %v3027 = vmul.f32 %v2988, %v3025
        %v3028 = vmul.f32 %v2989, %v3025
        %v3029 = vmul.f32 %v2990, %v3025
        %v3030 = vmul.f32 %v2991, %v3025
        %v3031 = vmul.f32 %v2992, %v3025
        %v3032 = vmul.f32 %v2993, %v3025
        %v3033 = vmul.f32 %v2994, %v3025
        %v3034 = vmul.f32 %v2995, %v3025
        %v3035 = vmul.f32 %v2996, %v3025
        %v3036 = vmul.f32 %v2997, %v3025
        %v3037 = vmul.f32 %v2998, %v3025
        %v3038 = vmul.f32 %v2999, %v3025
        %v3039 = vmul.f32 %v3000, %v3025
        %v3040 = vmul.f32 %v3001, %v3025
        %v3041 = vmul.f32 %v3002, %v3025
        %v3042 = vmul.f32 %v3003, %v3025
        %v3043 = vmul.f32 %v3004, %v3025
        %v3044 = vmul.f32 %v3005, %v3025
        %v3045 = vmul.f32 %v3006, %v3025
        %v3046 = vmul.f32 %v3007, %v3025
        %v3047 = vmul.f32 %v3008, %v3025
        %v3048 = vmul.f32 %v3009, %v3025
        %v3049 = vmul.f32 %v3010, %v3025
        %v3050 = vmul.f32 %v3011, %v3025
        %v3051 = vmul.f32 %v3012, %v3025
        %v3052 = vmul.f32 %v3013, %v3025
        %v3053 = vmul.f32 %v3014, %v3025
        %v3054 = vmul.f32 %v3015, %v3025
        %v3055 = vmul.f32 %v3016, %v3025
        %v3056 = vmul.f32 %v3017, %v3025
        %v3057 = vmul.f32 %v3018, %v3025
        %v3058 = vmul.f32 %v3019, %v3025
        %v3059 = vld [vmem:[%s3] sm:$0x1]
        %v3061 = vlaneseq
        %v3062 = vshrl.u32 %v3061, 7
        %v3063 = vsub.s32 0, %v3062
        %v3064 = vrot.slane %v3059, %v3063
        %v3066 = vadd.f32 %v3027, %v3064
        %v3067 = vadd.f32 %v3028, %v3064
        %v3068 = vadd.f32 %v3029, %v3064
        %v3069 = vadd.f32 %v3030, %v3064
        %v3070 = vadd.f32 %v3031, %v3064
        %v3071 = vadd.f32 %v3032, %v3064
        %v3072 = vadd.f32 %v3033, %v3064
        %v3073 = vadd.f32 %v3034, %v3064
        %v3074 = vadd.f32 %v3035, %v3064
        %v3075 = vadd.f32 %v3036, %v3064
        %v3076 = vadd.f32 %v3037, %v3064
        %v3077 = vadd.f32 %v3038, %v3064
        %v3078 = vadd.f32 %v3039, %v3064
        %v3079 = vadd.f32 %v3040, %v3064
        %v3080 = vadd.f32 %v3041, %v3064
        %v3081 = vadd.f32 %v3042, %v3064
        %v3082 = vadd.f32 %v3043, %v3064
        %v3083 = vadd.f32 %v3044, %v3064
        %v3084 = vadd.f32 %v3045, %v3064
        %v3085 = vadd.f32 %v3046, %v3064
        %v3086 = vadd.f32 %v3047, %v3064
        %v3087 = vadd.f32 %v3048, %v3064
        %v3088 = vadd.f32 %v3049, %v3064
        %v3089 = vadd.f32 %v3050, %v3064
        %v3090 = vadd.f32 %v3051, %v3064
        %v3091 = vadd.f32 %v3052, %v3064
        %v3092 = vadd.f32 %v3053, %v3064
        %v3093 = vadd.f32 %v3054, %v3064
        %v3094 = vadd.f32 %v3055, %v3064
        %v3095 = vadd.f32 %v3056, %v3064
        %v3096 = vadd.f32 %v3057, %v3064
        %v3097 = vadd.f32 %v3058, %v3064
        %s3098 = smul.u32 %s21, 256
        %v3099 = vlaneseq
        %v3100 = vshrl.u32 %v3099, 7
        %v3101 = vadd.s32 %v3100, 8
        %v3102 = vadd.s32 %v3100, 16
        %v3103 = vadd.s32 %v3100, 24
        %v3104 = vadd.s32 %v3100, 32
        %v3105 = vadd.s32 %v3100, 40
        %v3106 = vadd.s32 %v3100, 48
        %v3107 = vadd.s32 %v3100, 56
        %v3108 = vadd.s32 %v3100, 64
        %v3109 = vadd.s32 %v3100, 72
        %v3110 = vadd.s32 %v3100, 80
        %v3111 = vadd.s32 %v3100, 88
        %v3112 = vadd.s32 %v3100, 96
        %v3113 = vadd.s32 %v3100, 104
        %v3114 = vadd.s32 %v3100, 112
        %v3115 = vadd.s32 %v3100, 120
        %v3116 = vadd.s32 %v3100, 128
        %v3117 = vadd.s32 %v3100, 136
        %v3118 = vadd.s32 %v3100, 144
        %v3119 = vadd.s32 %v3100, 152
        %v3120 = vadd.s32 %v3100, 160
        %v3121 = vadd.s32 %v3100, 168
        %v3122 = vadd.s32 %v3100, 176
        %v3123 = vadd.s32 %v3100, 184
        %v3124 = vadd.s32 %v3100, 192
        %v3125 = vadd.s32 %v3100, 200
        %v3126 = vadd.s32 %v3100, 208
        %v3127 = vadd.s32 %v3100, 216
        %v3128 = vadd.s32 %v3100, 224
        %v3129 = vadd.s32 %v3100, 232
        %v3130 = vadd.s32 %v3100, 240
        %v3131 = vadd.s32 %v3100, 248
        %v3132 = vstv %s3098
        %v3133 = vadd.s32 %v3132, %v3100
        %v3134 = vadd.s32 %v3132, %v3101
        %v3135 = vadd.s32 %v3132, %v3102
        %v3136 = vadd.s32 %v3132, %v3103
        %v3137 = vadd.s32 %v3132, %v3104
        %v3138 = vadd.s32 %v3132, %v3105
        %v3139 = vadd.s32 %v3132, %v3106
        %v3140 = vadd.s32 %v3132, %v3107
        %v3141 = vadd.s32 %v3132, %v3108
        %v3142 = vadd.s32 %v3132, %v3109
        %v3143 = vadd.s32 %v3132, %v3110
        %v3144 = vadd.s32 %v3132, %v3111
        %v3145 = vadd.s32 %v3132, %v3112
        %v3146 = vadd.s32 %v3132, %v3113
        %v3147 = vadd.s32 %v3132, %v3114
        %v3148 = vadd.s32 %v3132, %v3115
        %v3149 = vadd.s32 %v3132, %v3116
        %v3150 = vadd.s32 %v3132, %v3117
        %v3151 = vadd.s32 %v3132, %v3118
        %v3152 = vadd.s32 %v3132, %v3119
        %v3153 = vadd.s32 %v3132, %v3120
        %v3154 = vadd.s32 %v3132, %v3121
        %v3155 = vadd.s32 %v3132, %v3122
        %v3156 = vadd.s32 %v3132, %v3123
        %v3157 = vadd.s32 %v3132, %v3124
        %v3158 = vadd.s32 %v3132, %v3125
        %v3159 = vadd.s32 %v3132, %v3126
        %v3160 = vadd.s32 %v3132, %v3127
        %v3161 = vadd.s32 %v3132, %v3128
        %v3162 = vadd.s32 %v3132, %v3129
        %v3163 = vadd.s32 %v3132, %v3130
        %v3164 = vadd.s32 %v3132, %v3131
        %vm3165 = vcmp.lt.s32.totalorder %v3133, 200
        %vm3166 = vcmp.lt.s32.totalorder %v3134, 200
        %vm3167 = vcmp.lt.s32.totalorder %v3135, 200
        %vm3168 = vcmp.lt.s32.totalorder %v3136, 200
        %vm3169 = vcmp.lt.s32.totalorder %v3137, 200
        %vm3170 = vcmp.lt.s32.totalorder %v3138, 200
        %vm3171 = vcmp.lt.s32.totalorder %v3139, 200
        %vm3172 = vcmp.lt.s32.totalorder %v3140, 200
        %vm3173 = vcmp.lt.s32.totalorder %v3141, 200
        %vm3174 = vcmp.lt.s32.totalorder %v3142, 200
        %vm3175 = vcmp.lt.s32.totalorder %v3143, 200
        %vm3176 = vcmp.lt.s32.totalorder %v3144, 200
        %vm3177 = vcmp.lt.s32.totalorder %v3145, 200
        %vm3178 = vcmp.lt.s32.totalorder %v3146, 200
        %vm3179 = vcmp.lt.s32.totalorder %v3147, 200
        %vm3180 = vcmp.lt.s32.totalorder %v3148, 200
        %vm3181 = vcmp.lt.s32.totalorder %v3149, 200
        %vm3182 = vcmp.lt.s32.totalorder %v3150, 200
        %vm3183 = vcmp.lt.s32.totalorder %v3151, 200
        %vm3184 = vcmp.lt.s32.totalorder %v3152, 200
        %vm3185 = vcmp.lt.s32.totalorder %v3153, 200
        %vm3186 = vcmp.lt.s32.totalorder %v3154, 200
        %vm3187 = vcmp.lt.s32.totalorder %v3155, 200
        %vm3188 = vcmp.lt.s32.totalorder %v3156, 200
        %vm3189 = vcmp.lt.s32.totalorder %v3157, 200
        %vm3190 = vcmp.lt.s32.totalorder %v3158, 200
        %vm3191 = vcmp.lt.s32.totalorder %v3159, 200
        %vm3192 = vcmp.lt.s32.totalorder %v3160, 200
        %vm3193 = vcmp.lt.s32.totalorder %v3161, 200
        %vm3194 = vcmp.lt.s32.totalorder %v3162, 200
        %vm3195 = vcmp.lt.s32.totalorder %v3163, 200
        %vm3196 = vcmp.lt.s32.totalorder %v3164, 200
        %v3197 = vsel %vm3165, 1, 0
        %v3198 = vsel %vm3166, 1, 0
        %v3199 = vsel %vm3167, 1, 0
        %v3200 = vsel %vm3168, 1, 0
        %v3201 = vsel %vm3169, 1, 0
        %v3202 = vsel %vm3170, 1, 0
        %v3203 = vsel %vm3171, 1, 0
        %v3204 = vsel %vm3172, 1, 0
        %v3205 = vsel %vm3173, 1, 0
        %v3206 = vsel %vm3174, 1, 0
        %v3207 = vsel %vm3175, 1, 0
        %v3208 = vsel %vm3176, 1, 0
        %v3209 = vsel %vm3177, 1, 0
        %v3210 = vsel %vm3178, 1, 0
        %v3211 = vsel %vm3179, 1, 0
        %v3212 = vsel %vm3180, 1, 0
        %v3213 = vsel %vm3181, 1, 0
        %v3214 = vsel %vm3182, 1, 0
        %v3215 = vsel %vm3183, 1, 0
        %v3216 = vsel %vm3184, 1, 0
        %v3217 = vsel %vm3185, 1, 0
        %v3218 = vsel %vm3186, 1, 0
        %v3219 = vsel %vm3187, 1, 0
        %v3220 = vsel %vm3188, 1, 0
        %v3221 = vsel %vm3189, 1, 0
        %v3222 = vsel %vm3190, 1, 0
        %v3223 = vsel %vm3191, 1, 0
        %v3224 = vsel %vm3192, 1, 0
        %v3225 = vsel %vm3193, 1, 0
        %v3226 = vsel %vm3194, 1, 0
        %v3227 = vsel %vm3195, 1, 0
        %v3228 = vsel %vm3196, 1, 0
        %vm3229 = vcmp.eq.s32.totalorder %v3197, 1
        %vm3230 = vcmp.eq.s32.totalorder %v3198, 1
        %vm3231 = vcmp.eq.s32.totalorder %v3199, 1
        %vm3232 = vcmp.eq.s32.totalorder %v3200, 1
        %vm3233 = vcmp.eq.s32.totalorder %v3201, 1
        %vm3234 = vcmp.eq.s32.totalorder %v3202, 1
        %vm3235 = vcmp.eq.s32.totalorder %v3203, 1
        %vm3236 = vcmp.eq.s32.totalorder %v3204, 1
        %vm3237 = vcmp.eq.s32.totalorder %v3205, 1
        %vm3238 = vcmp.eq.s32.totalorder %v3206, 1
        %vm3239 = vcmp.eq.s32.totalorder %v3207, 1
        %vm3240 = vcmp.eq.s32.totalorder %v3208, 1
        %vm3241 = vcmp.eq.s32.totalorder %v3209, 1
        %vm3242 = vcmp.eq.s32.totalorder %v3210, 1
        %vm3243 = vcmp.eq.s32.totalorder %v3211, 1
        %vm3244 = vcmp.eq.s32.totalorder %v3212, 1
        %vm3245 = vcmp.eq.s32.totalorder %v3213, 1
        %vm3246 = vcmp.eq.s32.totalorder %v3214, 1
        %vm3247 = vcmp.eq.s32.totalorder %v3215, 1
        %vm3248 = vcmp.eq.s32.totalorder %v3216, 1
        %vm3249 = vcmp.eq.s32.totalorder %v3217, 1
        %vm3250 = vcmp.eq.s32.totalorder %v3218, 1
        %vm3251 = vcmp.eq.s32.totalorder %v3219, 1
        %vm3252 = vcmp.eq.s32.totalorder %v3220, 1
        %vm3253 = vcmp.eq.s32.totalorder %v3221, 1
        %vm3254 = vcmp.eq.s32.totalorder %v3222, 1
        %vm3255 = vcmp.eq.s32.totalorder %v3223, 1
        %vm3256 = vcmp.eq.s32.totalorder %v3224, 1
        %vm3257 = vcmp.eq.s32.totalorder %v3225, 1
        %vm3258 = vcmp.eq.s32.totalorder %v3226, 1
        %vm3259 = vcmp.eq.s32.totalorder %v3227, 1
        %vm3260 = vcmp.eq.s32.totalorder %v3228, 1
        %v3261 = vsel %vm3229, %v3066, 0.0
        %v3262 = vsel %vm3230, %v3067, 0.0
        %v3263 = vsel %vm3231, %v3068, 0.0
        %v3264 = vsel %vm3232, %v3069, 0.0
        %v3265 = vsel %vm3233, %v3070, 0.0
        %v3266 = vsel %vm3234, %v3071, 0.0
        %v3267 = vsel %vm3235, %v3072, 0.0
        %v3268 = vsel %vm3236, %v3073, 0.0
        %v3269 = vsel %vm3237, %v3074, 0.0
        %v3270 = vsel %vm3238, %v3075, 0.0
        %v3271 = vsel %vm3239, %v3076, 0.0
        %v3272 = vsel %vm3240, %v3077, 0.0
        %v3273 = vsel %vm3241, %v3078, 0.0
        %v3274 = vsel %vm3242, %v3079, 0.0
        %v3275 = vsel %vm3243, %v3080, 0.0
        %v3276 = vsel %vm3244, %v3081, 0.0
        %v3277 = vsel %vm3245, %v3082, 0.0
        %v3278 = vsel %vm3246, %v3083, 0.0
        %v3279 = vsel %vm3247, %v3084, 0.0
        %v3280 = vsel %vm3248, %v3085, 0.0
        %v3281 = vsel %vm3249, %v3086, 0.0
        %v3282 = vsel %vm3250, %v3087, 0.0
        %v3283 = vsel %vm3251, %v3088, 0.0
        %v3284 = vsel %vm3252, %v3089, 0.0
        %v3285 = vsel %vm3253, %v3090, 0.0
        %v3286 = vsel %vm3254, %v3091, 0.0
        %v3287 = vsel %vm3255, %v3092, 0.0
        %v3288 = vsel %vm3256, %v3093, 0.0
        %v3289 = vsel %vm3257, %v3094, 0.0
        %v3290 = vsel %vm3258, %v3095, 0.0
        %v3291 = vsel %vm3259, %v3096, 0.0
        %v3292 = vsel %vm3260, %v3097, 0.0
        %v3293 = vld [vmem:[%s264] sm:$0x1]
        %v3294 = vsel %vm535, %v3261, 0.0
        %v3295 = vsel %vm535, %v3262, 0.0
        %v3296 = vadd.f32 %v3294, %v3295
        %v3297 = vsel %vm535, %v3263, 0.0
        %v3298 = vadd.f32 %v3296, %v3297
        %v3299 = vsel %vm535, %v3264, 0.0
        %v3300 = vadd.f32 %v3298, %v3299
        %v3301 = vsel %vm535, %v3265, 0.0
        %v3302 = vadd.f32 %v3300, %v3301
        %v3303 = vsel %vm535, %v3266, 0.0
        %v3304 = vadd.f32 %v3302, %v3303
        %v3305 = vsel %vm535, %v3267, 0.0
        %v3306 = vadd.f32 %v3304, %v3305
        %v3307 = vsel %vm535, %v3268, 0.0
        %v3308 = vadd.f32 %v3306, %v3307
        %v3309 = vsel %vm535, %v3269, 0.0
        %v3310 = vadd.f32 %v3308, %v3309
        %v3311 = vsel %vm535, %v3270, 0.0
        %v3312 = vadd.f32 %v3310, %v3311
        %v3313 = vsel %vm535, %v3271, 0.0
        %v3314 = vadd.f32 %v3312, %v3313
        %v3315 = vsel %vm535, %v3272, 0.0
        %v3316 = vadd.f32 %v3314, %v3315
        %v3317 = vsel %vm535, %v3273, 0.0
        %v3318 = vadd.f32 %v3316, %v3317
        %v3319 = vsel %vm535, %v3274, 0.0
        %v3320 = vadd.f32 %v3318, %v3319
        %v3321 = vsel %vm535, %v3275, 0.0
        %v3322 = vadd.f32 %v3320, %v3321
        %v3323 = vsel %vm535, %v3276, 0.0
        %v3324 = vadd.f32 %v3322, %v3323
        %v3325 = vsel %vm535, %v3277, 0.0
        %v3326 = vadd.f32 %v3324, %v3325
        %v3327 = vsel %vm535, %v3278, 0.0
        %v3328 = vadd.f32 %v3326, %v3327
        %v3329 = vsel %vm535, %v3279, 0.0
        %v3330 = vadd.f32 %v3328, %v3329
        %v3331 = vsel %vm535, %v3280, 0.0
        %v3332 = vadd.f32 %v3330, %v3331
        %v3333 = vsel %vm535, %v3281, 0.0
        %v3334 = vadd.f32 %v3332, %v3333
        %v3335 = vsel %vm535, %v3282, 0.0
        %v3336 = vadd.f32 %v3334, %v3335
        %v3337 = vsel %vm535, %v3283, 0.0
        %v3338 = vadd.f32 %v3336, %v3337
        %v3339 = vsel %vm535, %v3284, 0.0
        %v3340 = vadd.f32 %v3338, %v3339
        %v3341 = vsel %vm535, %v3285, 0.0
        %v3342 = vadd.f32 %v3340, %v3341
        %v3343 = vsel %vm535, %v3286, 0.0
        %v3344 = vadd.f32 %v3342, %v3343
        %v3345 = vsel %vm535, %v3287, 0.0
        %v3346 = vadd.f32 %v3344, %v3345
        %v3347 = vsel %vm535, %v3288, 0.0
        %v3348 = vadd.f32 %v3346, %v3347
        %v3349 = vsel %vm535, %v3289, 0.0
        %v3350 = vadd.f32 %v3348, %v3349
        %v3351 = vsel %vm535, %v3290, 0.0
        %v3352 = vadd.f32 %v3350, %v3351
        %v3353 = vsel %vm535, %v3291, 0.0
        %v3354 = vadd.f32 %v3352, %v3353
        %v3355 = vsel %vm535, %v3292, 0.0
        %v3356 = vadd.f32 %v3354, %v3355
        %v3357 = vrot.slane %v3356, 4
        %v3358 = vadd.f32 %v3356, %v3357
        %v3359 = vrot.slane %v3358, 2
        %v3360 = vadd.f32 %v3358, %v3359
        %v3361 = vrot.slane %v3360, 1
        %v3362 = vadd.f32 %v3360, %v3361
        %v3363 = vadd.f32 %v3293, %v3362
        %vm3364 = vcmask 253952
        %3365 = vst.msk [vmem:[%s264] sm:$0x1] %vm3364, %v3363
      $region48: #{model_forward.1} parent=35 // pred_fallthru
        _
      %p3366 = scmp.lt.s32.totalorder %s20, 1
      %s3367 = scalar_select %p3366, %s20, 1
      %s3368 = scalar_lea.vmem %s4, %s3367
      // Predicated region
      $region49: #{model_forward.1} parent=35 // pred_check
        %p3369 = pneg %p150
      $region50: #{model_forward.1} parent=35 // pred_check_branch
        %3371 = sbr.rel (%p3369) target = $region52
      $region51: #{model_forward.1} parent=35 // pred_region
        _
      $region52: #{model_forward.1} parent=35 // pred_fallthru
        _
    $region36: #{model_forward.1} parent=5 // pred_fallthru
      _
    %p3372 = scmp.le.s32.totalorder 2, %s10
    // Predicated region
    $region53: #{model_forward.1} parent=5 // pred_check
      %p3373 = pneg %p3372
    $region54: #{model_forward.1} parent=5 // pred_check_branch
      %3375 = sbr.rel (%p3373) target = $region56
    $region55: #{model_forward.1} parent=5 // pred_region
      %s3376 = ssub.s32 %s10, 2
      // Predicated region
      $region57: #{model_forward.1} parent=55 // pred_check
        %p3377 = pneg %p156
      $region58: #{model_forward.1} parent=55 // pred_check_branch
        %3379 = sbr.rel (%p3377) target = $region60
      $region59: #{model_forward.1} parent=55 // pred_region
        %p3380 = scmp.lt.s32.totalorder %s23, 1
        %s3381 = scalar_select %p3380, %s23, 1
        %s3382 = scalar_lea.vmem %s4, %s3381
      $region60: #{model_forward.1} parent=55 // pred_fallthru
        _
    $region56: #{model_forward.1} parent=5 // pred_fallthru
      _
  $region6: #{model_forward.1} parent=0 // loop_footer
    %s14 = sadd.s32 1, %s10
  $region7: #{model_forward.1} parent=0 // loop_footer_branch
    %9 = sbr.rel target = $region3
  $region8: #{model_forward.1} parent=0 // loop_exit
    _

</llo_original>
